<compile_context>
chip_gen: v7x
topology: tpu7x:2x2x1
jax: 0.10.0
libtpu: 0.0.40
codegen_flags: <defaults>
</compile_context>

<pallas_src>
import functools

import jax
import jax.numpy as jnp
from jax.experimental import pallas as pl
from jax.experimental.pallas import tpu as pltpu

# ---------------------------------------------------------------------------
# knobs
# ---------------------------------------------------------------------------
# Operand dtype fed to the Pallas kernels.  The cast happens at the HBM
# boundary (wrapper side / weight pre-pack), NOT inside the kernels, so
# flipping this to jnp.bfloat16 halves DMA traffic of both (memory-bound)
# kernels and gives native MXU rate on v6e/v7x (accumulation stays f32 via
# preferred_element_type).  f32 default keeps the small-shape self-test tight;
# re-validate with ~1e-2 relative tolerance when switching to bf16.
COMPUTE_DTYPE = jnp.float32


def _pad_up(n, m):
    return ((n + m - 1) // m) * m


@functools.lru_cache(maxsize=1)
def _vmem_budgets():
    """(per-step tile budget, vmem_limit_bytes) derived from the actual part,
    leaving >=16 MiB headroom for Mosaic internal scratch.
      v7x   (64 MiB/TC): limit 48 MiB, tile budget 36 MiB
      v5e/v6e (128 MiB): limit 112 MiB, tile budget 84 MiB"""
    cap = 64 * 1024 * 1024
    try:
        cap = int(pltpu.get_tpu_info().vmem_capacity_bytes)
    except Exception:
        pass
    limit = max(cap - 16 * 1024 * 1024, 32 * 1024 * 1024)
    budget = max(int(limit * 0.75), 16 * 1024 * 1024)
    return budget, limit


# ---------------------------------------------------------------------------
# Spectral-conv kernel: per-mode [ar|ai] @ [[wr,wi],[-wi,wr]] contraction
# ---------------------------------------------------------------------------
def _spectral_block_kernel(x_ref, w_ref, out_ref):
    """Grid step (m_tile, j):
         x   : (TM, B, 2*Cin)       [ar | ai] of one frequency-row block
                                    (j=0: low rows, j=1: high rows)
         w   : (TM, 2*Cin, 4*Cout)  block matrix [[wr, wi], [-wi, wr]] with the
                                    two weight blocks sharing this x block
                                    concatenated along Cout
                                    (j=0: [w1|w3], j=1: [w2|w4])
         out : (TM, B, 4*Cout)      [ real(2*Cout) | imag(2*Cout) ]
       One MXU matmul per mode (K=2*Cin, N=4*Cout): better MXU fill on
       v6e/v7x's 256x256 arrays than the former 3-mult Karatsuba, no VPU
       pre-adds, and a single full-width lane-dense store.  The kernel is
       weight-bandwidth-bound, so the extra flops are free."""
    out_ref[...] = jnp.einsum(
        'mbi,mio->mbo', x_ref[...], w_ref[...],
        preferred_element_type=jnp.float32).astype(out_ref.dtype)


def _choose_m_tile(M, B, Cin2, Cout4, in_dtype):
    """Largest divisor of M whose DOUBLE-BUFFERED, PADDED per-step VMEM
    footprint fits the per-generation budget.  Padding: second-to-last dim up
    to the sublane multiple (8 f32 / 16 bf16), last dim up to 128 lanes."""
    budget, _ = _vmem_budgets()
    isz = jnp.dtype(in_dtype).itemsize
    sub = max(32 // isz, 8)

    def resident(tm):
        x_b = tm * _pad_up(B, sub) * _pad_up(Cin2, 128) * isz
        w_b = tm * _pad_up(Cin2, sub) * _pad_up(Cout4, 128) * isz
        o_b = tm * _pad_up(B, 8) * _pad_up(Cout4, 128) * 4      # f32 output
        return 2 * (x_b + w_b + o_b)                            # double buffered

    best = 1
    for tm in range(1, M + 1):
        if M % tm == 0 and resident(tm) <= budget:
            best = tm
    return best


def _complex_mode_contraction(x_ri, w_blk):
    """x_ri : (2, M, B, 2*Cin)       block 0 = low freq rows, block 1 = high
       w_blk: (2, M, 2*Cin, 4*Cout)  pre-packed block matrices (see prepack)
       returns (2, M, B, 4*Cout) f32 with [real | imag] on the last axis."""
    _, M, B, Cin2 = x_ri.shape
    Cout4 = w_blk.shape[-1]
    _, limit = _vmem_budgets()

    TM = _choose_m_tile(M, B, Cin2, Cout4, x_ri.dtype)
    # Second ('parallel') axis always has extent 2, so even TM == M keeps both
    # v7x TensorCores busy.
    grid = (M // TM, 2)

    x_spec = pl.BlockSpec((None, TM, B, Cin2), lambda t, j: (j, t, 0, 0))
    w_spec = pl.BlockSpec((None, TM, Cin2, Cout4), lambda t, j: (j, t, 0, 0))
    o_spec = pl.BlockSpec((None, TM, B, Cout4), lambda t, j: (j, t, 0, 0))

    flops = 2 * 2 * M * B * Cin2 * Cout4
    bytes_accessed = (x_ri.size * x_ri.dtype.itemsize
                      + w_blk.size * w_blk.dtype.itemsize
                      + 2 * M * B * Cout4 * 4)

    return pl.pallas_call(
        _spectral_block_kernel,
        out_shape=jax.ShapeDtypeStruct((2, M, B, Cout4), jnp.float32),
        grid_spec=pltpu.PrefetchScalarGridSpec(
            num_scalar_prefetch=0,
            grid=grid,
            in_specs=[x_spec, w_spec],
            out_specs=o_spec),
        compiler_params=pltpu.CompilerParams(
            dimension_semantics=("parallel", "parallel"),
            vmem_limit_bytes=limit),
        cost_estimate=pl.CostEstimate(flops=int(flops), transcendentals=0,
                                      bytes_accessed=int(bytes_accessed)),
    )(x_ri, w_blk)


def prepack_spectral_weights(w, dtype=COMPUTE_DTYPE):
    """One-time relayout (hoisted out of the forward): (4,Cin,Cout,m1,m2,2) ->
    (2, M, 2*Cin, 4*Cout) block matrices [[wr, wi], [-wi, wr]] where the two
    weight blocks that share an x block (pair 0 = [w1|w3], pair 1 = [w2|w4])
    are concatenated along Cout."""
    _, Cin, Cout, m1, m2, _ = w.shape
    M = m1 * m2
    w = jnp.transpose(w, (0, 3, 4, 1, 2, 5)).reshape(4, M, Cin, Cout, 2)

    def pair(a, b):
        wr = jnp.concatenate([a[..., 0], b[..., 0]], axis=-1)   # (M, Cin, 2*Cout)
        wi = jnp.concatenate([a[..., 1], b[..., 1]], axis=-1)
        top = jnp.concatenate([wr, wi], axis=-1)                # [ wr | wi ]
        bot = jnp.concatenate([-wi, wr], axis=-1)               # [-wi | wr ]
        return jnp.concatenate([top, bot], axis=-2)             # (M, 2*Cin, 4*Cout)

    return jnp.stack([pair(w[0], w[2]), pair(w[1], w[3])], axis=0).astype(dtype)


def spectral_conv_forward(x, w_packed, modes1, modes2):
    """SpectralConv3d_fast.forward.
       x: (B, Cin, H, W) f32;  w_packed: (2, M, 2*Cin, 4*Cout) pre-packed.
       Returns (B, Cout, H, W) f32."""
    B, Cin, H, W = x.shape
    m1, m2 = modes1, modes2
    M = m1 * m2
    Cout = w_packed.shape[-1] // 4
    Wh = W // 2 + 1

    # TODO(synk): rfft2 / irfft2 have no Pallas primitive; they stay on XLA FFT.
    x_ft = jnp.fft.rfft2(x, norm='ortho')                        # (B,Cin,H,Wh) c64

    # Both weight pairs consume the [:m2] columns (weights3/4 re-use them --
    # exactly what the PyTorch module does); only low/high row blocks differ,
    # so each x block is DMA'd once and shared by its two weight blocks.
    x_low = x_ft[:, :, :m1, :m2]
    x_high = x_ft[:, :, H - m1:, :m2]
    xb = jnp.stack([x_low, x_high], axis=0)                      # (2,B,Cin,m1,m2)
    xb = jnp.transpose(xb, (0, 3, 4, 1, 2)).reshape(2, M, B, Cin)
    # [ar | ai] concatenated on the lane axis: one DMA per step, 2x lane density.
    x_ri = jnp.concatenate([jnp.real(xb), jnp.imag(xb)], axis=-1)
    x_ri = x_ri.astype(COMPUTE_DTYPE)                            # HBM-boundary cast

    out = _complex_mode_contraction(x_ri, w_packed)              # (2,M,B,4*Cout)

    # Decode [real|imag] x [pair member] and scatter into the frequency grid.
    o = out.reshape(2, m1, m2, B, 2, 2, Cout)          # (j,m1,m2,B,re/im,pm,Cout)
    oc = jax.lax.complex(o[..., 0, :, :], o[..., 1, :, :])       # (j,m1,m2,B,pm,C)
    oc = jnp.transpose(oc, (0, 4, 3, 5, 1, 2))                   # (j,pm,B,C,m1,m2)

    out_ft = jnp.zeros((B, Cout, H, Wh), dtype=jnp.complex64)
    out_ft = out_ft.at[:, :, :m1, :m2].set(oc[0, 0])             # weights1
    out_ft = out_ft.at[:, :, H - m1:, :m2].set(oc[1, 0])         # weights2
    out_ft = out_ft.at[:, :, :m1, Wh - m2:].set(oc[0, 1])        # weights3
    out_ft = out_ft.at[:, :, H - m1:, Wh - m2:].set(oc[1, 1])    # weights4
    return jnp.fft.irfft2(out_ft, s=(H, W), norm='ortho').astype(jnp.float32)


# ---------------------------------------------------------------------------
# Pointwise channel-mix kernels (fc0, 1x1 convs w1..w3) fused with bias +
# optional residual + activation, channels-first layout, and a fused fc1+fc2.
# ---------------------------------------------------------------------------
def _act(y, activation):
    if activation == 'tanh':
        return jnp.tanh(y)
    if activation == 'relu':
        return jnp.maximum(y, 0.0)
    return y


def _pointwise_kernel(x_ref, w_ref, b_ref, out_ref, *, activation):
    # x: (Cin, TS), w: (Cout, Cin), b: (Cout, 1) -> out: (Cout, TS)
    y = jnp.dot(w_ref[...], x_ref[...],
                preferred_element_type=jnp.float32) + b_ref[...]
    out_ref[...] = _act(y, activation).astype(out_ref.dtype)


def _pointwise_res_kernel(x_ref, w_ref, b_ref, r_ref, out_ref, *, activation):
    y = (jnp.dot(w_ref[...], x_ref[...],
                 preferred_element_type=jnp.float32)
         + b_ref[...] + r_ref[...])
    out_ref[...] = _act(y, activation).astype(out_ref.dtype)


def _fused_fc_kernel(x_ref, w1_ref, b1_ref, w2_ref, b2_ref, out_ref, h_ref):
    # fc1 -> relu -> fc2 -> relu; the (128, TS) intermediate lives in a VMEM
    # scratch and never round-trips to HBM.
    h = jnp.dot(w1_ref[...], x_ref[...],
                preferred_element_type=jnp.float32) + b1_ref[...]
    h_ref[...] = jnp.maximum(h, 0.0).astype(h_ref.dtype)
    y = jnp.dot(w2_ref[...], h_ref[...],
                preferred_element_type=jnp.float32) + b2_ref[...]
    out_ref[...] = jnp.maximum(y, 0.0).astype(out_ref.dtype)


def _choose_spatial_tile(HW, Cin, Cout, Cmid=0):
    """Largest spatial tile whose padded per-step footprint fits the
    per-generation VMEM budget.  All tiles other than HW itself are multiples
    of 128, so output stores stay lane-dense."""
    budget, _ = _vmem_budgets()
    isz = jnp.dtype(COMPUTE_DTYPE).itemsize
    sub = max(32 // isz, 8)

    def resident(ts):
        tsp = _pad_up(ts, 128)
        x_b = _pad_up(Cin, sub) * tsp * isz
        o_b = _pad_up(Cout, 8) * tsp * 4
        r_b = o_b                                      # possible residual input
        h_b = _pad_up(Cmid, 8) * tsp * isz if Cmid else 0
        return 2 * (x_b + o_b + r_b) + h_b

    cands = sorted({t for t in (HW, 32768, 16384, 8192, 4096, 2048, 1024, 512,
                                256, 128) if t <= HW and HW % t == 0},
                   reverse=True)
    for ts in cands:
        if resident(ts) <= budget:
            return ts
    return cands[-1] if cands else HW


def pointwise_channel_mix(x, w, b, residual=None, activation='none'):
    """out[b,o,h,w] = act( sum_i w[o,i]*x[b,i,h,w] + b[o] (+ residual) )."""
    B, Cin, H, W = x.shape
    Cout = w.shape[0]
    HW = H * W
    TS = _choose_spatial_tile(HW, Cin, Cout)
    _, limit = _vmem_budgets()

    xf = x.reshape(B, Cin, HW).astype(COMPUTE_DTYPE)       # HBM-boundary cast
    wv = w.astype(COMPUTE_DTYPE)
    bias = b.reshape(Cout, 1).astype(jnp.float32)

    x_spec = pl.BlockSpec((None, Cin, TS), lambda bi, si: (bi, 0, si))
    w_spec = pl.BlockSpec((Cout, Cin), lambda bi, si: (0, 0))
    b_spec = pl.BlockSpec((Cout, 1), lambda bi, si: (0, 0))
    o_spec = pl.BlockSpec((None, Cout, TS), lambda bi, si: (bi, 0, si))

    flops = 2 * B * HW * Cin * Cout
    bytes_accessed = (xf.size * xf.dtype.itemsize + wv.size * wv.dtype.itemsize
                      + 4 * Cout + 4 * B * Cout * HW
                      + (4 * B * Cout * HW if residual is not None else 0))

    if residual is None:
        kernel = functools.partial(_pointwise_kernel, activation=activation)
        in_specs = [x_spec, w_spec, b_spec]
        args = (xf, wv, bias)
    else:
        kernel = functools.partial(_pointwise_res_kernel, activation=activation)
        in_specs = [x_spec, w_spec, b_spec, o_spec]
        args = (xf, wv, bias, residual.reshape(B, Cout, HW).astype(jnp.float32))

    out = pl.pallas_call(
        kernel,
        out_shape=jax.ShapeDtypeStruct((B, Cout, HW), jnp.float32),
        grid_spec=pltpu.PrefetchScalarGridSpec(
            num_scalar_prefetch=0,
            grid=(B, HW // TS),
            in_specs=in_specs,
            out_specs=o_spec),
        compiler_params=pltpu.CompilerParams(
            dimension_semantics=("parallel", "parallel"),
            vmem_limit_bytes=limit),
        cost_estimate=pl.CostEstimate(
            flops=int(flops),
            transcendentals=int(B * Cout * HW if activation == 'tanh' else 0),
            bytes_accessed=int(bytes_accessed)),
    )(*args)
    return out.reshape(B, Cout, H, W)


def fused_fc1_fc2(x, w1, b1, w2, b2):
    """relu(fc2(relu(fc1(x)))) with the wide (128-ch) intermediate kept on-chip."""
    B, Cin, H, W = x.shape
    C1 = w1.shape[0]
    Cout = w2.shape[0]
    HW = H * W
    TS = _choose_spatial_tile(HW, Cin, Cout, Cmid=C1)
    _, limit = _vmem_budgets()

    xf = x.reshape(B, Cin, HW).astype(COMPUTE_DTYPE)
    w1v = w1.astype(COMPUTE_DTYPE)
    w2v = w2.astype(COMPUTE_DTYPE)
    b1v = b1.reshape(C1, 1).astype(jnp.float32)
    b2v = b2.reshape(Cout, 1).astype(jnp.float32)

    x_spec = pl.BlockSpec((None, Cin, TS), lambda bi, si: (bi, 0, si))
    w1_spec = pl.BlockSpec((C1, Cin), lambda bi, si: (0, 0))
    b1_spec = pl.BlockSpec((C1, 1), lambda bi, si: (0, 0))
    w2_spec = pl.BlockSpec((Cout, C1), lambda bi, si: (0, 0))
    b2_spec = pl.BlockSpec((Cout, 1), lambda bi, si: (0, 0))
    o_spec = pl.BlockSpec((None, Cout, TS), lambda bi, si: (bi, 0, si))

    flops = 2 * B * HW * (Cin * C1 + C1 * Cout)
    bytes_accessed = (xf.size * xf.dtype.itemsize
                      + (w1v.size + w2v.size) * jnp.dtype(COMPUTE_DTYPE).itemsize
                      + 4 * (C1 + Cout) + 4 * B * Cout * HW)

    out = pl.pallas_call(
        _fused_fc_kernel,
        out_shape=jax.ShapeDtypeStruct((B, Cout, HW), jnp.float32),
        grid_spec=pltpu.PrefetchScalarGridSpec(
            num_scalar_prefetch=0,
            grid=(B, HW // TS),
            in_specs=[x_spec, w1_spec, b1_spec, w2_spec, b2_spec],
            out_specs=o_spec,
            scratch_shapes=[pltpu.VMEM((C1, TS), COMPUTE_DTYPE)]),
        compiler_params=pltpu.CompilerParams(
            dimension_semantics=("parallel", "parallel"),
            vmem_limit_bytes=limit),
        cost_estimate=pl.CostEstimate(flops=int(flops), transcendentals=0,
                                      bytes_accessed=int(bytes_accessed)),
    )(xf, w1v, b1v, w2v, b2v)
    return out.reshape(B, Cout, H, W)


# ---------------------------------------------------------------------------
# BatchNorm2d (PyTorch module used in default training mode: batch statistics).
# ---------------------------------------------------------------------------
def batchnorm2d(x, gamma, beta, eps=1e-5):
    # TODO(synk): the global per-channel (B,H,W) reduction is left to XLA; the
    # scale/shift (+ following tanh) are elementwise and fuse in XLA.
    mean = jnp.mean(x, axis=(0, 2, 3), keepdims=True)
    var = jnp.mean(jnp.square(x - mean), axis=(0, 2, 3), keepdims=True)
    xn = (x - mean) * jax.lax.rsqrt(var + eps)
    return xn * gamma.reshape(1, -1, 1, 1) + beta.reshape(1, -1, 1, 1)


# ---------------------------------------------------------------------------
# SimpleBlock3d forward (expects pre-packed params; see prepack_params)
# ---------------------------------------------------------------------------
def simple_block3d_forward(params, x, modes1, modes2):
    """x: (B, in_ch, H, W) -> (B, out_ch, H, W).  Mirrors SimpleBlock3d.forward
    (the PyTorch NCHW<->NHWC permutes are layout-only; w0/bn1..bn4 are unused)."""
    h = pointwise_channel_mix(x, params['fc0_w'], params['fc0_b'],
                              activation='tanh')

    h1 = spectral_conv_forward(h, params['conv0_wp'], modes1, modes2)
    h = jnp.tanh(batchnorm2d(h1, params['bn0_g'], params['bn0_b']))

    h1 = spectral_conv_forward(h, params['conv1_wp'], modes1, modes2)
    h = pointwise_channel_mix(h, params['w1_w'], params['w1_b'],
                              residual=h1, activation='tanh')

    h1 = spectral_conv_forward(h, params['conv2_wp'], modes1, modes2)
    h = pointwise_channel_mix(h, params['w2_w'], params['w2_b'],
                              residual=h1, activation='tanh')

    h1 = spectral_conv_forward(h, params['conv3_wp'], modes1, modes2)
    h = pointwise_channel_mix(h, params['w3_w'], params['w3_b'],
                              residual=h1, activation='none')

    h = fused_fc1_fc2(h, params['fc1_w'], params['fc1_b'],
                      params['fc2_w'], params['fc2_b'])
    return h


def prepack_params(params):
    """One-time parameter prep (run outside the jitted forward): pre-pack the
    spectral weights and move the compute-dtype cast to the HBM boundary."""
    p = dict(params)
    for i in range(4):
        p[f'conv{i}_wp'] = prepack_spectral_weights(p.pop(f'conv{i}_w'))
    for name in ('fc0', 'w1', 'w2', 'w3', 'fc1', 'fc2'):
        p[f'{name}_w'] = p[f'{name}_w'].astype(COMPUTE_DTYPE)
    return p


# ---------------------------------------------------------------------------
# Pure-JAX reference (mirrors the PyTorch forward semantics)
# ---------------------------------------------------------------------------
def _ref_spectral(x, weights, m1, m2):
    B, Cin, H, W = x.shape
    Cout = weights.shape[2]
    Wh = W // 2 + 1
    x_ft = jnp.fft.rfft2(x, norm='ortho')
    hp = jax.lax.Precision.HIGHEST

    def cmul(a, w):
        ar, ai = jnp.real(a), jnp.imag(a)
        wre, wim = w[..., 0], w[..., 1]
        real = (jnp.einsum('bixy,ioxy->boxy', ar, wre, precision=hp)
                - jnp.einsum('bixy,ioxy->boxy', ai, wim, precision=hp))
        imag = (jnp.einsum('bixy,ioxy->boxy', ai, wre, precision=hp)
                + jnp.einsum('bixy,ioxy->boxy', ar, wim, precision=hp))
        return (real + 1j * imag).astype(jnp.complex64)

    out_ft = jnp.zeros((B, Cout, H, Wh), dtype=jnp.complex64)
    out_ft = out_ft.at[:, :, :m1, :m2].set(cmul(x_ft[:, :, :m1, :m2], weights[0]))
    out_ft = out_ft.at[:, :, H - m1:, :m2].set(cmul(x_ft[:, :, H - m1:, :m2], weights[1]))
    out_ft = out_ft.at[:, :, :m1, Wh - m2:].set(cmul(x_ft[:, :, :m1, :m2], weights[2]))
    out_ft = out_ft.at[:, :, H - m1:, Wh - m2:].set(cmul(x_ft[:, :, H - m1:, :m2], weights[3]))
    return jnp.fft.irfft2(out_ft, s=(H, W), norm='ortho')


def _ref_chmix(x, w, b):
    hp = jax.lax.Precision.HIGHEST
    return jnp.einsum('oi,bihw->bohw', w, x, precision=hp) + b.reshape(1, -1, 1, 1)


def _ref_block(params, x, m1, m2):
    h = jnp.tanh(_ref_chmix(x, params['fc0_w'], params['fc0_b']))
    h1 = _ref_spectral(h, params['conv0_w'], m1, m2)
    h = jnp.tanh(batchnorm2d(h1, params['bn0_g'], params['bn0_b']))
    h1 = _ref_spectral(h, params['conv1_w'], m1, m2)
    h = jnp.tanh(h1 + _ref_chmix(h, params['w1_w'], params['w1_b']))
    h1 = _ref_spectral(h, params['conv2_w'], m1, m2)
    h = jnp.tanh(h1 + _ref_chmix(h, params['w2_w'], params['w2_b']))
    h1 = _ref_spectral(h, params['conv3_w'], m1, m2)
    h = h1 + _ref_chmix(h, params['w3_w'], params['w3_b'])
    h = jnp.maximum(_ref_chmix(h, params['fc1_w'], params['fc1_b']), 0.0)
    h = jnp.maximum(_ref_chmix(h, params['fc2_w'], params['fc2_b']), 0.0)
    return h


# ---------------------------------------------------------------------------
# Parameter init + self-test
# ---------------------------------------------------------------------------
def init_params(key, in_ch, out_ch, width, m1, m2):
    ks = jax.random.split(key, 12)
    spec_scale = 1.0 / (width * width)

    def dense(k, co, ci):
        kw, kb = jax.random.split(k)
        return ((ci ** -0.5) * jax.random.normal(kw, (co, ci), jnp.float32),
                0.1 * jax.random.normal(kb, (co,), jnp.float32))

    p = {}
    p['fc0_w'], p['fc0_b'] = dense(ks[0], width, in_ch)
    for i in range(4):
        p[f'conv{i}_w'] = spec_scale * jax.random.uniform(
            ks[1 + i], (4, width, width, m1, m2, 2), dtype=jnp.float32)
    p['w1_w'], p['w1_b'] = dense(ks[5], width, width)
    p['w2_w'], p['w2_b'] = dense(ks[6], width, width)
    p['w3_w'], p['w3_b'] = dense(ks[7], width, width)
    p['fc1_w'], p['fc1_b'] = dense(ks[8], 128, width)
    p['fc2_w'], p['fc2_b'] = dense(ks[9], out_ch, 128)
    p['bn0_g'] = jnp.ones((width,), jnp.float32)
    p['bn0_b'] = jnp.zeros((width,), jnp.float32)
    return p


if __name__ == "__main__":
    B, in_ch, out_ch = 2, 4, 4
    H, W = 16, 16
    m1 = m2 = 4
    width = 20          # matches the module's global `width`

    key = jax.random.PRNGKey(0)
    kx, kp = jax.random.split(key)
    x = jax.random.normal(kx, (B, in_ch, H, W), dtype=jnp.float32)
    params = init_params(kp, in_ch, out_ch, width, m1, m2)
    packed = prepack_params(params)   # one-time weight relayout, outside jit

    fwd = jax.jit(functools.partial(simple_block3d_forward, modes1=m1, modes2=m2))
    y = jax.block_until_ready(fwd(packed, x))

    y_ref = jax.block_until_ready(_ref_block(params, x, m1, m2))

    assert y.shape == (B, out_ch, H, W), y.shape
    assert bool(jnp.allclose(y, y_ref, atol=5e-3, rtol=2e-2)), \
        float(jnp.max(jnp.abs(y - y_ref)))
    print("KERNEL_OK")
</pallas_src>

<mosaic_0001>
module attributes {stable_mosaic.version = 11 : i64} {
  func.func @_pointwise_kernel(%arg0: i32, %arg1: i32, %arg2: memref<1x4x256xf32, #tpu.memory_space<vmem>>, %arg3: memref<20x4xf32, #tpu.memory_space<vmem>>, %arg4: memref<20x1xf32, #tpu.memory_space<vmem>>, %arg5: memref<1x20x256xf32, #tpu.memory_space<vmem>>) attributes {dimension_semantics = [#tpu.dimension_semantics<parallel>, #tpu.dimension_semantics<parallel>], iteration_bounds = array<i64: 2, 1>, scalar_prefetch = 0 : i64, scratch_operands = 0 : i64, tpu.core_type = #tpu.core_type<tc>, window_params = [{transform_indices = @transform_0, window_bounds = array<i64: 1, 4, 256>}, {pipeline_mode = #tpu.pipeline_mode<synchronous>, transform_indices = @transform_1, window_bounds = array<i64: 20, 4>}, {pipeline_mode = #tpu.pipeline_mode<synchronous>, transform_indices = @transform_2, window_bounds = array<i64: 20, 1>}, {transform_indices = @transform_3, window_bounds = array<i64: 1, 20, 256>}]} {
    %c0 = arith.constant 0 : index
    %c0_0 = arith.constant 0 : index
    %0 = vector.load %arg3[%c0, %c0_0] : memref<20x4xf32, #tpu.memory_space<vmem>>, vector<20x4xf32>
    %c0_1 = arith.constant 0 : index
    %c0_2 = arith.constant 0 : index
    %c0_3 = arith.constant 0 : index
    %1 = vector.load %arg2[%c0_1, %c0_2, %c0_3] : memref<1x4x256xf32, #tpu.memory_space<vmem>>, vector<1x4x256xf32>
    %2 = vector.shape_cast %1 : vector<1x4x256xf32> to vector<4x256xf32>
    %cst = arith.constant dense<0.000000e+00> : vector<20x256xf32>
    %3 = tpu.matmul %0, %2, %cst {dimension_numbers = #tpu.dot_dimension_numbers<[1], [0], [0], [1], [0, 0, 1, 1], [], []>} : vector<20x4xf32>, vector<4x256xf32>, vector<20x256xf32> -> vector<20x256xf32>
    %c0_4 = arith.constant 0 : index
    %c0_5 = arith.constant 0 : index
    %4 = vector.load %arg4[%c0_4, %c0_5] : memref<20x1xf32, #tpu.memory_space<vmem>>, vector<20x1xf32>
    %5 = vector.broadcast %4 : vector<20x1xf32> to vector<20x256xf32>
    %6 = arith.addf %3, %5 : vector<20x256xf32>
    %7 = math.tanh %6 : vector<20x256xf32>
    %c0_6 = arith.constant 0 : index
    %c0_7 = arith.constant 0 : index
    %c0_8 = arith.constant 0 : index
    %8 = vector.load %arg5[%c0_6, %c0_7, %c0_8] : memref<1x20x256xf32, #tpu.memory_space<vmem>>, vector<1x20x256xf32>
    %9 = vector.shape_cast %8 : vector<1x20x256xf32> to vector<20x256xf32>
    %10 = vector.shape_cast %7 : vector<20x256xf32> to vector<1x20x256xf32>
    tpu.vector_store %arg5[%c0_6, %c0_7, %c0_8], %10 {strides = array<i32>} : memref<1x20x256xf32, #tpu.memory_space<vmem>>, vector<1x20x256xf32>,
    return
  }
  func.func @transform_0(%arg0: i32, %arg1: i32) -> (i32, i32, i32) {
    %c0_i32 = arith.constant 0 : i32
    %c0_i32_0 = arith.constant 0 : i32
    return %arg0, %c0_i32, %arg1 : i32, i32, i32
  }
  func.func @transform_1(%arg0: i32, %arg1: i32) -> (i32, i32) {
    %c0_i32 = arith.constant 0 : i32
    %c0_i32_0 = arith.constant 0 : i32
    %c0_i32_1 = arith.constant 0 : i32
    return %c0_i32, %c0_i32_0 : i32, i32
  }
  func.func @transform_2(%arg0: i32, %arg1: i32) -> (i32, i32) {
    %c0_i32 = arith.constant 0 : i32
    %c0_i32_0 = arith.constant 0 : i32
    %c0_i32_1 = arith.constant 0 : i32
    return %c0_i32, %c0_i32_0 : i32, i32
  }
  func.func @transform_3(%arg0: i32, %arg1: i32) -> (i32, i32, i32) {
    %c0_i32 = arith.constant 0 : i32
    %c0_i32_0 = arith.constant 0 : i32
    return %arg0, %c0_i32, %arg1 : i32, i32, i32
  }
}

module attributes {stable_mosaic.version = 11 : i64} {
  func.func @_spectral_block_kernel(%arg0: i32, %arg1: i32, %arg2: memref<1x16x2x40xf32, #tpu.memory_space<vmem>>, %arg3: memref<1x16x40x80xf32, #tpu.memory_space<vmem>>, %arg4: memref<1x16x2x80xf32, #tpu.memory_space<vmem>>) attributes {dimension_semantics = [#tpu.dimension_semantics<parallel>, #tpu.dimension_semantics<parallel>], iteration_bounds = array<i64: 1, 2>, scalar_prefetch = 0 : i64, scratch_operands = 0 : i64, tpu.core_type = #tpu.core_type<tc>, window_params = [{transform_indices = @transform_0, window_bounds = array<i64: 1, 16, 2, 40>}, {transform_indices = @transform_1, window_bounds = array<i64: 1, 16, 40, 80>}, {transform_indices = @transform_2, window_bounds = array<i64: 1, 16, 2, 80>}]} {
    %c0 = arith.constant 0 : index
    %c0_0 = arith.constant 0 : index
    %c0_1 = arith.constant 0 : index
    %c0_2 = arith.constant 0 : index
    %0 = vector.load %arg2[%c0, %c0_0, %c0_1, %c0_2] : memref<1x16x2x40xf32, #tpu.memory_space<vmem>>, vector<1x16x2x40xf32>
    %1 = vector.shape_cast %0 : vector<1x16x2x40xf32> to vector<16x2x40xf32>
    %c0_3 = arith.constant 0 : index
    %c0_4 = arith.constant 0 : index
    %c0_5 = arith.constant 0 : index
    %c0_6 = arith.constant 0 : index
    %2 = vector.load %arg3[%c0_3, %c0_4, %c0_5, %c0_6] : memref<1x16x40x80xf32, #tpu.memory_space<vmem>>, vector<1x16x40x80xf32>
    %3 = vector.shape_cast %2 : vector<1x16x40x80xf32> to vector<16x40x80xf32>
    "tpu.trace_start"() <{level = 10 : i32, message = "mbi,mio->mbo"}> : () -> ()
    %cst = arith.constant dense<0.000000e+00> : vector<16x2x80xf32>
    %4 = tpu.matmul %1, %3, %cst {dimension_numbers = #tpu.dot_dimension_numbers<[2], [1], [1], [2], [0, 0, 0, 1, 1, 2], [0], [0]>} : vector<16x2x40xf32>, vector<16x40x80xf32>, vector<16x2x80xf32> -> vector<16x2x80xf32>
    "tpu.trace_stop"() : () -> ()
    %c0_7 = arith.constant 0 : index
    %c0_8 = arith.constant 0 : index
    %c0_9 = arith.constant 0 : index
    %c0_10 = arith.constant 0 : index
    %5 = vector.load %arg4[%c0_7, %c0_8, %c0_9, %c0_10] : memref<1x16x2x80xf32, #tpu.memory_space<vmem>>, vector<1x16x2x80xf32>
    %6 = vector.shape_cast %5 : vector<1x16x2x80xf32> to vector<16x2x80xf32>
    %7 = vector.shape_cast %4 : vector<16x2x80xf32> to vector<1x16x2x80xf32>
    tpu.vector_store %arg4[%c0_7, %c0_8, %c0_9, %c0_10], %7 {strides = array<i32>} : memref<1x16x2x80xf32, #tpu.memory_space<vmem>>, vector<1x16x2x80xf32>,
    return
  }
  func.func @transform_0(%arg0: i32, %arg1: i32) -> (i32, i32, i32, i32) {
    %c0_i32 = arith.constant 0 : i32
    %c0_i32_0 = arith.constant 0 : i32
    %c0_i32_1 = arith.constant 0 : i32
    return %arg1, %arg0, %c0_i32, %c0_i32_0 : i32, i32, i32, i32
  }
  func.func @transform_1(%arg0: i32, %arg1: i32) -> (i32, i32, i32, i32) {
    %c0_i32 = arith.constant 0 : i32
    %c0_i32_0 = arith.constant 0 : i32
    %c0_i32_1 = arith.constant 0 : i32
    return %arg1, %arg0, %c0_i32, %c0_i32_0 : i32, i32, i32, i32
  }
  func.func @transform_2(%arg0: i32, %arg1: i32) -> (i32, i32, i32, i32) {
    %c0_i32 = arith.constant 0 : i32
    %c0_i32_0 = arith.constant 0 : i32
    %c0_i32_1 = arith.constant 0 : i32
    return %arg1, %arg0, %c0_i32, %c0_i32_0 : i32, i32, i32, i32
  }
}

module attributes {stable_mosaic.version = 11 : i64} {
  func.func @_pointwise_res_kernel(%arg0: i32, %arg1: i32, %arg2: memref<1x20x256xf32, #tpu.memory_space<vmem>>, %arg3: memref<20x20xf32, #tpu.memory_space<vmem>>, %arg4: memref<20x1xf32, #tpu.memory_space<vmem>>, %arg5: memref<1x20x256xf32, #tpu.memory_space<vmem>>, %arg6: memref<1x20x256xf32, #tpu.memory_space<vmem>>) attributes {dimension_semantics = [#tpu.dimension_semantics<parallel>, #tpu.dimension_semantics<parallel>], iteration_bounds = array<i64: 2, 1>, scalar_prefetch = 0 : i64, scratch_operands = 0 : i64, tpu.core_type = #tpu.core_type<tc>, window_params = [{transform_indices = @transform_0, window_bounds = array<i64: 1, 20, 256>}, {pipeline_mode = #tpu.pipeline_mode<synchronous>, transform_indices = @transform_1, window_bounds = array<i64: 20, 20>}, {pipeline_mode = #tpu.pipeline_mode<synchronous>, transform_indices = @transform_2, window_bounds = array<i64: 20, 1>}, {transform_indices = @transform_3, window_bounds = array<i64: 1, 20, 256>}, {transform_indices = @transform_4, window_bounds = array<i64: 1, 20, 256>}]} {
    %c0 = arith.constant 0 : index
    %c0_0 = arith.constant 0 : index
    %0 = vector.load %arg3[%c0, %c0_0] : memref<20x20xf32, #tpu.memory_space<vmem>>, vector<20x20xf32>
    %c0_1 = arith.constant 0 : index
    %c0_2 = arith.constant 0 : index
    %c0_3 = arith.constant 0 : index
    %1 = vector.load %arg2[%c0_1, %c0_2, %c0_3] : memref<1x20x256xf32, #tpu.memory_space<vmem>>, vector<1x20x256xf32>
    %2 = vector.shape_cast %1 : vector<1x20x256xf32> to vector<20x256xf32>
    %cst = arith.constant dense<0.000000e+00> : vector<20x256xf32>
    %3 = tpu.matmul %0, %2, %cst {dimension_numbers = #tpu.dot_dimension_numbers<[1], [0], [0], [1], [0, 0, 1, 1], [], []>} : vector<20x20xf32>, vector<20x256xf32>, vector<20x256xf32> -> vector<20x256xf32>
    %c0_4 = arith.constant 0 : index
    %c0_5 = arith.constant 0 : index
    %4 = vector.load %arg4[%c0_4, %c0_5] : memref<20x1xf32, #tpu.memory_space<vmem>>, vector<20x1xf32>
    %5 = vector.broadcast %4 : vector<20x1xf32> to vector<20x256xf32>
    %6 = arith.addf %3, %5 : vector<20x256xf32>
    %c0_6 = arith.constant 0 : index
    %c0_7 = arith.constant 0 : index
    %c0_8 = arith.constant 0 : index
    %7 = vector.load %arg5[%c0_6, %c0_7, %c0_8] : memref<1x20x256xf32, #tpu.memory_space<vmem>>, vector<1x20x256xf32>
    %8 = vector.shape_cast %7 : vector<1x20x256xf32> to vector<20x256xf32>
    %9 = arith.addf %6, %8 : vector<20x256xf32>
    %10 = math.tanh %9 : vector<20x256xf32>
    %c0_9 = arith.constant 0 : index
    %c0_10 = arith.constant 0 : index
    %c0_11 = arith.constant 0 : index
    %11 = vector.load %arg6[%c0_9, %c0_10, %c0_11] : memref<1x20x256xf32, #tpu.memory_space<vmem>>, vector<1x20x256xf32>
    %12 = vector.shape_cast %11 : vector<1x20x256xf32> to vector<20x256xf32>
    %13 = vector.shape_cast %10 : vector<20x256xf32> to vector<1x20x256xf32>
    tpu.vector_store %arg6[%c0_9, %c0_10, %c0_11], %13 {strides = array<i32>} : memref<1x20x256xf32, #tpu.memory_space<vmem>>, vector<1x20x256xf32>,
    return
  }
  func.func @transform_0(%arg0: i32, %arg1: i32) -> (i32, i32, i32) {
    %c0_i32 = arith.constant 0 : i32
    %c0_i32_0 = arith.constant 0 : i32
    return %arg0, %c0_i32, %arg1 : i32, i32, i32
  }
  func.func @transform_1(%arg0: i32, %arg1: i32) -> (i32, i32) {
    %c0_i32 = arith.constant 0 : i32
    %c0_i32_0 = arith.constant 0 : i32
    %c0_i32_1 = arith.constant 0 : i32
    return %c0_i32, %c0_i32_0 : i32, i32
  }
  func.func @transform_2(%arg0: i32, %arg1: i32) -> (i32, i32) {
    %c0_i32 = arith.constant 0 : i32
    %c0_i32_0 = arith.constant 0 : i32
    %c0_i32_1 = arith.constant 0 : i32
    return %c0_i32, %c0_i32_0 : i32, i32
  }
  func.func @transform_3(%arg0: i32, %arg1: i32) -> (i32, i32, i32) {
    %c0_i32 = arith.constant 0 : i32
    %c0_i32_0 = arith.constant 0 : i32
    return %arg0, %c0_i32, %arg1 : i32, i32, i32
  }
  func.func @transform_4(%arg0: i32, %arg1: i32) -> (i32, i32, i32) {
    %c0_i32 = arith.constant 0 : i32
    %c0_i32_0 = arith.constant 0 : i32
    return %arg0, %c0_i32, %arg1 : i32, i32, i32
  }
}

module attributes {stable_mosaic.version = 11 : i64} {
  func.func @_pointwise_res_kernel(%arg0: i32, %arg1: i32, %arg2: memref<1x20x256xf32, #tpu.memory_space<vmem>>, %arg3: memref<20x20xf32, #tpu.memory_space<vmem>>, %arg4: memref<20x1xf32, #tpu.memory_space<vmem>>, %arg5: memref<1x20x256xf32, #tpu.memory_space<vmem>>, %arg6: memref<1x20x256xf32, #tpu.memory_space<vmem>>) attributes {dimension_semantics = [#tpu.dimension_semantics<parallel>, #tpu.dimension_semantics<parallel>], iteration_bounds = array<i64: 2, 1>, scalar_prefetch = 0 : i64, scratch_operands = 0 : i64, tpu.core_type = #tpu.core_type<tc>, window_params = [{transform_indices = @transform_0, window_bounds = array<i64: 1, 20, 256>}, {pipeline_mode = #tpu.pipeline_mode<synchronous>, transform_indices = @transform_1, window_bounds = array<i64: 20, 20>}, {pipeline_mode = #tpu.pipeline_mode<synchronous>, transform_indices = @transform_2, window_bounds = array<i64: 20, 1>}, {transform_indices = @transform_3, window_bounds = array<i64: 1, 20, 256>}, {transform_indices = @transform_4, window_bounds = array<i64: 1, 20, 256>}]} {
    %c0 = arith.constant 0 : index
    %c0_0 = arith.constant 0 : index
    %0 = vector.load %arg3[%c0, %c0_0] : memref<20x20xf32, #tpu.memory_space<vmem>>, vector<20x20xf32>
    %c0_1 = arith.constant 0 : index
    %c0_2 = arith.constant 0 : index
    %c0_3 = arith.constant 0 : index
    %1 = vector.load %arg2[%c0_1, %c0_2, %c0_3] : memref<1x20x256xf32, #tpu.memory_space<vmem>>, vector<1x20x256xf32>
    %2 = vector.shape_cast %1 : vector<1x20x256xf32> to vector<20x256xf32>
    %cst = arith.constant dense<0.000000e+00> : vector<20x256xf32>
    %3 = tpu.matmul %0, %2, %cst {dimension_numbers = #tpu.dot_dimension_numbers<[1], [0], [0], [1], [0, 0, 1, 1], [], []>} : vector<20x20xf32>, vector<20x256xf32>, vector<20x256xf32> -> vector<20x256xf32>
    %c0_4 = arith.constant 0 : index
    %c0_5 = arith.constant 0 : index
    %4 = vector.load %arg4[%c0_4, %c0_5] : memref<20x1xf32, #tpu.memory_space<vmem>>, vector<20x1xf32>
    %5 = vector.broadcast %4 : vector<20x1xf32> to vector<20x256xf32>
    %6 = arith.addf %3, %5 : vector<20x256xf32>
    %c0_6 = arith.constant 0 : index
    %c0_7 = arith.constant 0 : index
    %c0_8 = arith.constant 0 : index
    %7 = vector.load %arg5[%c0_6, %c0_7, %c0_8] : memref<1x20x256xf32, #tpu.memory_space<vmem>>, vector<1x20x256xf32>
    %8 = vector.shape_cast %7 : vector<1x20x256xf32> to vector<20x256xf32>
    %9 = arith.addf %6, %8 : vector<20x256xf32>
    %c0_9 = arith.constant 0 : index
    %c0_10 = arith.constant 0 : index
    %c0_11 = arith.constant 0 : index
    %10 = vector.load %arg6[%c0_9, %c0_10, %c0_11] : memref<1x20x256xf32, #tpu.memory_space<vmem>>, vector<1x20x256xf32>
    %11 = vector.shape_cast %10 : vector<1x20x256xf32> to vector<20x256xf32>
    %12 = vector.shape_cast %9 : vector<20x256xf32> to vector<1x20x256xf32>
    tpu.vector_store %arg6[%c0_9, %c0_10, %c0_11], %12 {strides = array<i32>} : memref<1x20x256xf32, #tpu.memory_space<vmem>>, vector<1x20x256xf32>,
    return
  }
  func.func @transform_0(%arg0: i32, %arg1: i32) -> (i32, i32, i32) {
    %c0_i32 = arith.constant 0 : i32
    %c0_i32_0 = arith.constant 0 : i32
    return %arg0, %c0_i32, %arg1 : i32, i32, i32
  }
  func.func @transform_1(%arg0: i32, %arg1: i32) -> (i32, i32) {
    %c0_i32 = arith.constant 0 : i32
    %c0_i32_0 = arith.constant 0 : i32
    %c0_i32_1 = arith.constant 0 : i32
    return %c0_i32, %c0_i32_0 : i32, i32
  }
  func.func @transform_2(%arg0: i32, %arg1: i32) -> (i32, i32) {
    %c0_i32 = arith.constant 0 : i32
    %c0_i32_0 = arith.constant 0 : i32
    %c0_i32_1 = arith.constant 0 : i32
    return %c0_i32, %c0_i32_0 : i32, i32
  }
  func.func @transform_3(%arg0: i32, %arg1: i32) -> (i32, i32, i32) {
    %c0_i32 = arith.constant 0 : i32
    %c0_i32_0 = arith.constant 0 : i32
    return %arg0, %c0_i32, %arg1 : i32, i32, i32
  }
  func.func @transform_4(%arg0: i32, %arg1: i32) -> (i32, i32, i32) {
    %c0_i32 = arith.constant 0 : i32
    %c0_i32_0 = arith.constant 0 : i32
    return %arg0, %c0_i32, %arg1 : i32, i32, i32
  }
}

module attributes {stable_mosaic.version = 11 : i64} {
  func.func @_fused_fc_kernel(%arg0: i32, %arg1: i32, %arg2: memref<1x20x256xf32, #tpu.memory_space<vmem>>, %arg3: memref<128x20xf32, #tpu.memory_space<vmem>>, %arg4: memref<128x1xf32, #tpu.memory_space<vmem>>, %arg5: memref<4x128xf32, #tpu.memory_space<vmem>>, %arg6: memref<4x1xf32, #tpu.memory_space<vmem>>, %arg7: memref<1x4x256xf32, #tpu.memory_space<vmem>>, %arg8: memref<128x256xf32, #tpu.memory_space<vmem>>) attributes {dimension_semantics = [#tpu.dimension_semantics<parallel>, #tpu.dimension_semantics<parallel>], iteration_bounds = array<i64: 2, 1>, scalar_prefetch = 0 : i64, scratch_operands = 1 : i64, tpu.core_type = #tpu.core_type<tc>, window_params = [{transform_indices = @transform_0, window_bounds = array<i64: 1, 20, 256>}, {pipeline_mode = #tpu.pipeline_mode<synchronous>, transform_indices = @transform_1, window_bounds = array<i64: 128, 20>}, {pipeline_mode = #tpu.pipeline_mode<synchronous>, transform_indices = @transform_2, window_bounds = array<i64: 128, 1>}, {pipeline_mode = #tpu.pipeline_mode<synchronous>, transform_indices = @transform_3, window_bounds = array<i64: 4, 128>}, {pipeline_mode = #tpu.pipeline_mode<synchronous>, transform_indices = @transform_4, window_bounds = array<i64: 4, 1>}, {transform_indices = @transform_5, window_bounds = array<i64: 1, 4, 256>}]} {
    %c0 = arith.constant 0 : index
    %c0_0 = arith.constant 0 : index
    %0 = vector.load %arg3[%c0, %c0_0] : memref<128x20xf32, #tpu.memory_space<vmem>>, vector<128x20xf32>
    %c0_1 = arith.constant 0 : index
    %c0_2 = arith.constant 0 : index
    %c0_3 = arith.constant 0 : index
    %1 = vector.load %arg2[%c0_1, %c0_2, %c0_3] : memref<1x20x256xf32, #tpu.memory_space<vmem>>, vector<1x20x256xf32>
    %2 = vector.shape_cast %1 : vector<1x20x256xf32> to vector<20x256xf32>
    %cst = arith.constant dense<0.000000e+00> : vector<128x256xf32>
    %3 = tpu.matmul %0, %2, %cst {dimension_numbers = #tpu.dot_dimension_numbers<[1], [0], [0], [1], [0, 0, 1, 1], [], []>} : vector<128x20xf32>, vector<20x256xf32>, vector<128x256xf32> -> vector<128x256xf32>
    %c0_4 = arith.constant 0 : index
    %c0_5 = arith.constant 0 : index
    %4 = vector.load %arg4[%c0_4, %c0_5] : memref<128x1xf32, #tpu.memory_space<vmem>>, vector<128x1xf32>
    %5 = vector.broadcast %4 : vector<128x1xf32> to vector<128x256xf32>
    %6 = arith.addf %3, %5 : vector<128x256xf32>
    %cst_6 = arith.constant 0.000000e+00 : f32
    %7 = vector.broadcast %cst_6 : f32 to vector<128x256xf32>
    %8 = arith.maximumf %6, %7 : vector<128x256xf32>
    %c0_7 = arith.constant 0 : index
    %c0_8 = arith.constant 0 : index
    %9 = vector.load %arg8[%c0_7, %c0_8] : memref<128x256xf32, #tpu.memory_space<vmem>>, vector<128x256xf32>
    tpu.vector_store %arg8[%c0_7, %c0_8], %8 {strides = array<i32>} : memref<128x256xf32, #tpu.memory_space<vmem>>, vector<128x256xf32>,
    %c0_9 = arith.constant 0 : index
    %c0_10 = arith.constant 0 : index
    %10 = vector.load %arg5[%c0_9, %c0_10] : memref<4x128xf32, #tpu.memory_space<vmem>>, vector<4x128xf32>
    %c0_11 = arith.constant 0 : index
    %c0_12 = arith.constant 0 : index
    %11 = vector.load %arg8[%c0_11, %c0_12] : memref<128x256xf32, #tpu.memory_space<vmem>>, vector<128x256xf32>
    %cst_13 = arith.constant dense<0.000000e+00> : vector<4x256xf32>
    %12 = tpu.matmul %10, %11, %cst_13 {dimension_numbers = #tpu.dot_dimension_numbers<[1], [0], [0], [1], [0, 0, 1, 1], [], []>} : vector<4x128xf32>, vector<128x256xf32>, vector<4x256xf32> -> vector<4x256xf32>
    %c0_14 = arith.constant 0 : index
    %c0_15 = arith.constant 0 : index
    %13 = vector.load %arg6[%c0_14, %c0_15] : memref<4x1xf32, #tpu.memory_space<vmem>>, vector<4x1xf32>
    %14 = vector.broadcast %13 : vector<4x1xf32> to vector<4x256xf32>
    %15 = arith.addf %12, %14 : vector<4x256xf32>
    %cst_16 = arith.constant 0.000000e+00 : f32
    %16 = vector.broadcast %cst_16 : f32 to vector<4x256xf32>
    %17 = arith.maximumf %15, %16 : vector<4x256xf32>
    %c0_17 = arith.constant 0 : index
    %c0_18 = arith.constant 0 : index
    %c0_19 = arith.constant 0 : index
    %18 = vector.load %arg7[%c0_17, %c0_18, %c0_19] : memref<1x4x256xf32, #tpu.memory_space<vmem>>, vector<1x4x256xf32>
    %19 = vector.shape_cast %18 : vector<1x4x256xf32> to vector<4x256xf32>
    %20 = vector.shape_cast %17 : vector<4x256xf32> to vector<1x4x256xf32>
    tpu.vector_store %arg7[%c0_17, %c0_18, %c0_19], %20 {strides = array<i32>} : memref<1x4x256xf32, #tpu.memory_space<vmem>>, vector<1x4x256xf32>,
    return
  }
  func.func @transform_0(%arg0: i32, %arg1: i32) -> (i32, i32, i32) {
    %c0_i32 = arith.constant 0 : i32
    %c0_i32_0 = arith.constant 0 : i32
    return %arg0, %c0_i32, %arg1 : i32, i32, i32
  }
  func.func @transform_1(%arg0: i32, %arg1: i32) -> (i32, i32) {
    %c0_i32 = arith.constant 0 : i32
    %c0_i32_0 = arith.constant 0 : i32
    %c0_i32_1 = arith.constant 0 : i32
    return %c0_i32, %c0_i32_0 : i32, i32
  }
  func.func @transform_2(%arg0: i32, %arg1: i32) -> (i32, i32) {
    %c0_i32 = arith.constant 0 : i32
    %c0_i32_0 = arith.constant 0 : i32
    %c0_i32_1 = arith.constant 0 : i32
    return %c0_i32, %c0_i32_0 : i32, i32
  }
  func.func @transform_3(%arg0: i32, %arg1: i32) -> (i32, i32) {
    %c0_i32 = arith.constant 0 : i32
    %c0_i32_0 = arith.constant 0 : i32
    %c0_i32_1 = arith.constant 0 : i32
    return %c0_i32, %c0_i32_0 : i32, i32
  }
  func.func @transform_4(%arg0: i32, %arg1: i32) -> (i32, i32) {
    %c0_i32 = arith.constant 0 : i32
    %c0_i32_0 = arith.constant 0 : i32
    %c0_i32_1 = arith.constant 0 : i32
    return %c0_i32, %c0_i32_0 : i32, i32
  }
  func.func @transform_5(%arg0: i32, %arg1: i32) -> (i32, i32, i32) {
    %c0_i32 = arith.constant 0 : i32
    %c0_i32_0 = arith.constant 0 : i32
    return %arg0, %c0_i32, %arg1 : i32, i32, i32
  }
}

</mosaic_0001>

<llo_original>
// kernel: simple_block3d_forward.9
$region0: #{simple_block3d_forward.9}
  #allocation0 [shape = 'u32[]', space=smem, size = 0x4, offset = 0x4, fixed_abs, tag = 'smem constant byte address 0x4 - core index']
  #allocation1 [shape = 'u32[144,128]{1,0:T(1,128)}', space=vmem, size = 0x12000, scoped, tag = 'internal scratch']
  %s0 = inlined_call_operand.vmem [shape: f32[2,4,256], index: 0, kind: input, shape index: {}]
  %s1 = inlined_call_operand.vmem [shape: f32[20,4], index: 1, kind: input, shape index: {}]
  %s2 = inlined_call_operand.vmem [shape: f32[20,1], index: 2, kind: input, shape index: {}]
  %s3 = inlined_call_operand.vmem [shape: f32[2,20,256], index: 3, kind: output, shape index: {}]
  %s4 = sld [smem:[#allocation0]]
  $region45: #{simple_block3d_forward.9} parent=0
    _
  %s6 = ssub.s32 1, %s4
  %s7 = scalar_select 0, %s6, %s4
  loop: start=0, step=1, limit=4
  $region2: #{simple_block3d_forward.9} parent=0 // loop_pre_header
    _
  $region3: #{simple_block3d_forward.9} parent=0 // loop_header
    %s9 = sphi 0, %s13
    %p10 = scmp.ge.s32.totalorder %s9, 4
    %s16 = sphi 0, %s28
    %s17 = sphi 0, %s24
    %s18 = sphi 0, %s16
    %s19 = sphi 0, %s17
    %s20 = sphi 0, %s18
    %s21 = sphi 0, %s19
    %s33 = sphi 0, %s35
    %s36 = sphi 0, %s33
    %s37 = sphi 0, %s36
    %s53 = sphi 0, %s37
    %s57 = sphi 0, %s57
    %s59 = sphi 0, %s57
    %s60 = sphi 0, %s59
    %s74 = sphi 0, %s60
    %s78 = sphi 0, %s78
    %s80 = sphi 0, %s78
    %s81 = sphi 0, %s80
    %s95 = sphi 0, %s81
    %s103 = sphi 0, %s105
    %s106 = sphi 0, %s103
    %s107 = sphi 0, %s106
    %s123 = sphi 0, %s107
  $region4: #{simple_block3d_forward.9} parent=0 // loop_header_branch
    %12 = sbr.rel (%p10) target = $region8
  $region5: #{simple_block3d_forward.9} parent=0 // loop_body
    %s14 = ssub.s32 %s9, 1
    %s15 = ssub.s32 %s9, 2
    %s22 = sadd.s32 1, %s17
    %p23 = scmp.ge.s32.totalorder %s22, 1
    %s24 = scalar_select %p23, 0, %s22
    %s25 = sadd.s32 1, %s16
    %s26 = scalar_select %p23, %s25, %s16
    %p27 = scmp.ge.s32.totalorder %s26, 2
    %s28 = scalar_select %p27, 0, %s26
    %s29 = ssub.s32 %s16, %s28
    %s30 = ssub.s32 %s17, %s24
    %s31 = sor.u32 %s29, %s30
    %p32 = scmp.eq.s32.totalorder %s31, 0
    %s34 = sadd.s32 %s33, 1
    %s35 = scalar_select %p32, %s33, %s34
    %p38 = pneg %p32
    %p39 = scmp.eq.s32.totalorder %s9, 1
    %p40 = por %p38, %p39
    %p41 = scmp.ne.s32.totalorder %s33, %s36
    %p42 = scmp.eq.s32.totalorder %s9, 0
    %p43 = por %p41, %p42
    %p44 = scmp.ne.s32.totalorder %s33, %s36
    %p45 = scmp.eq.s32.totalorder %s14, 1
    %p46 = por %p44, %p45
    %p47 = scmp.ne.s32.totalorder %s36, %s37
    %p48 = scmp.eq.s32.totalorder %s14, 0
    %p49 = por %p47, %p48
    %p50 = scmp.ne.s32.totalorder %s36, %s37
    %p51 = scmp.eq.s32.totalorder %s15, 1
    %p52 = por %p50, %p51
    %p54 = scmp.ne.s32.totalorder %s37, %s53
    %p55 = scmp.eq.s32.totalorder %s15, 0
    %p56 = por %p54, %p55
    %s58 = sadd.s32 %s57, 1
    %p61 = scmp.eq.s32.totalorder %s9, 1
    %p62 = scmp.ne.s32.totalorder %s57, %s59
    %p63 = scmp.eq.s32.totalorder %s9, 0
    %p64 = por %p62, %p63
    %p65 = scmp.ne.s32.totalorder %s57, %s59
    %p66 = scmp.eq.s32.totalorder %s14, 1
    %p67 = por %p65, %p66
    %p68 = scmp.ne.s32.totalorder %s59, %s60
    %p69 = scmp.eq.s32.totalorder %s14, 0
    %p70 = por %p68, %p69
    %p71 = scmp.ne.s32.totalorder %s59, %s60
    %p72 = scmp.eq.s32.totalorder %s15, 1
    %p73 = por %p71, %p72
    %p75 = scmp.ne.s32.totalorder %s60, %s74
    %p76 = scmp.eq.s32.totalorder %s15, 0
    %p77 = por %p75, %p76
    %s79 = sadd.s32 %s78, 1
    %p82 = scmp.eq.s32.totalorder %s9, 1
    %p83 = scmp.ne.s32.totalorder %s78, %s80
    %p84 = scmp.eq.s32.totalorder %s9, 0
    %p85 = por %p83, %p84
    %p86 = scmp.ne.s32.totalorder %s78, %s80
    %p87 = scmp.eq.s32.totalorder %s14, 1
    %p88 = por %p86, %p87
    %p89 = scmp.ne.s32.totalorder %s80, %s81
    %p90 = scmp.eq.s32.totalorder %s14, 0
    %p91 = por %p89, %p90
    %p92 = scmp.ne.s32.totalorder %s80, %s81
    %p93 = scmp.eq.s32.totalorder %s15, 1
    %p94 = por %p92, %p93
    %p96 = scmp.ne.s32.totalorder %s81, %s95
    %p97 = scmp.eq.s32.totalorder %s15, 0
    %p98 = por %p96, %p97
    %s99 = ssub.s32 %s16, %s28
    %s100 = ssub.s32 %s17, %s24
    %s101 = sor.u32 %s99, %s100
    %p102 = scmp.eq.s32.totalorder %s101, 0
    %s104 = sadd.s32 %s103, 1
    %s105 = scalar_select %p102, %s103, %s104
    %p108 = pneg %p102
    %p109 = scmp.eq.s32.totalorder %s9, 1
    %p110 = por %p108, %p109
    %p111 = scmp.ne.s32.totalorder %s103, %s106
    %p112 = scmp.eq.s32.totalorder %s9, 0
    %p113 = por %p111, %p112
    %p114 = scmp.ne.s32.totalorder %s103, %s106
    %p115 = scmp.eq.s32.totalorder %s14, 1
    %p116 = por %p114, %p115
    %p117 = scmp.ne.s32.totalorder %s106, %s107
    %p118 = scmp.eq.s32.totalorder %s14, 0
    %p119 = por %p117, %p118
    %p120 = scmp.ne.s32.totalorder %s106, %s107
    %p121 = scmp.eq.s32.totalorder %s15, 1
    %p122 = por %p120, %p121
    %p124 = scmp.ne.s32.totalorder %s107, %s123
    %p125 = scmp.eq.s32.totalorder %s15, 0
    %p126 = por %p124, %p125
    %p127 = scmp.le.s32.totalorder 1, %s9
    %p128 = scmp.lt.s32.totalorder %s9, 3
    %p129 = pnand %p127, %p128
    %p130 = pneg %p129
    // Predicated region
    $region9: #{simple_block3d_forward.9} parent=5 // pred_check
      _
    $region10: #{simple_block3d_forward.9} parent=5 // pred_check_branch
      %132 = sbr.rel (%p129) target = $region12
    $region11: #{simple_block3d_forward.9} parent=5 // pred_region
      %s133 = ssub.s32 %s9, 1
      // Predicated region
      $region13: #{simple_block3d_forward.9} parent=11 // pred_check
        %p134 = pneg %p70
      $region14: #{simple_block3d_forward.9} parent=11 // pred_check_branch
        %136 = sbr.rel (%p134) target = $region16
      $region15: #{simple_block3d_forward.9} parent=11 // pred_region
        _
      $region16: #{simple_block3d_forward.9} parent=11 // pred_fallthru
        _
      // Predicated region
      $region17: #{simple_block3d_forward.9} parent=11 // pred_check
        %p137 = pneg %p91
      $region18: #{simple_block3d_forward.9} parent=11 // pred_check_branch
        %139 = sbr.rel (%p137) target = $region20
      $region19: #{simple_block3d_forward.9} parent=11 // pred_region
        _
      $region20: #{simple_block3d_forward.9} parent=11 // pred_fallthru
        _
    $region12: #{simple_block3d_forward.9} parent=5 // pred_fallthru
      _
    %p140 = scmp.lt.s32.totalorder %s9, 2
    // Predicated region
    $region21: #{simple_block3d_forward.9} parent=5 // pred_check
      %p141 = pneg %p140
    $region22: #{simple_block3d_forward.9} parent=5 // pred_check_branch
      %143 = sbr.rel (%p141) target = $region24
    $region23: #{simple_block3d_forward.9} parent=5 // pred_region
      // Predicated region
      $region25: #{simple_block3d_forward.9} parent=23 // pred_check
        %p144 = pneg %p43
      $region26: #{simple_block3d_forward.9} parent=23 // pred_check_branch
        %146 = sbr.rel (%p144) target = $region28
      $region27: #{simple_block3d_forward.9} parent=23 // pred_region
        %s147 = smul.u32 2, %s17
        %p148 = scmp.lt.s32.totalorder %s16, 1
        %s149 = scalar_select %p148, %s16, 1
        %p150 = scmp.lt.s32.totalorder %s147, 1
        %s151 = scalar_select %p150, %s147, 1
        %s152 = smul.addr %s149, 2
        %s153 = sadd.s32 %s151, %s152
        %s154 = smul.addr %s153, 4
        %s155 = scalar_lea.vmem %s0, %s154
        %s156 = smul.u32 2, %s17
      $region28: #{simple_block3d_forward.9} parent=23 // pred_fallthru
        _
    $region24: #{simple_block3d_forward.9} parent=5 // pred_fallthru
      _
    %p157 = scmp.le.s32.totalorder 1, %s9
    %p158 = scmp.lt.s32.totalorder %s9, 3
    %p159 = pnand %p157, %p158
    %p160 = pneg %p159
    // Predicated region
    $region29: #{simple_block3d_forward.9} parent=5 // pred_check
      _
    $region30: #{simple_block3d_forward.9} parent=5 // pred_check_branch
      %162 = sbr.rel (%p159) target = $region32
    $region31: #{simple_block3d_forward.9} parent=5 // pred_region
      %s163 = ssub.s32 %s9, 1
      %s164 = smul.u32 2, %s19
      %p165 = scmp.lt.s32.totalorder %s18, 1
      %s166 = scalar_select %p165, %s18, 1
      %p167 = scmp.lt.s32.totalorder %s164, 1
      %s168 = scalar_select %p167, %s164, 1
      %s169 = smul.addr %s166, 2
      %s170 = sadd.s32 %s168, %s169
      %s171 = smul.addr %s170, 4
      %s172 = scalar_lea.vmem %s0, %s171
      %p173 = pneg %p49
      %p174 = pneg %p46
      %p175 = pneg %p70
      %p176 = pneg %p67
      %p177 = pneg %p91
      %p178 = pneg %p88
      %p179 = pneg %p119
      %p180 = pneg %p116
      %s181 = smul.u32 2, %s19
      %p182 = scmp.lt.s32.totalorder %s18, 1
      %s183 = scalar_select %p182, %s18, 1
      %p184 = scmp.lt.s32.totalorder %s181, 1
      %s185 = scalar_select %p184, %s181, 1
      %s186 = smul.addr %s183, 6
      %s187 = sadd.s32 %s185, %s186
      %s188 = smul.addr %s187, 8
      %s189 = scalar_lea.vmem %s3, %s188
      %s190 = smul.u32 2, %s19
      %p191 = scmp.lt.s32.totalorder %s18, 1
      %s192 = scalar_select %p191, %s18, 1
      %p193 = scmp.lt.s32.totalorder %s190, 1
      %s194 = scalar_select %p193, %s190, 1
      %s195 = smul.addr %s192, 2
      %s196 = sadd.s32 %s194, %s195
      %s197 = smul.addr %s196, 4
      %s198 = scalar_lea.vmem %s0, %s197
      %s199 = smul.u32 2, %s19
      %s200 = smul.u32 2, %s19
      %p201 = scmp.lt.s32.totalorder %s18, 1
      %s202 = scalar_select %p201, %s18, 1
      %p203 = scmp.lt.s32.totalorder %s200, 1
      %s204 = scalar_select %p203, %s200, 1
      %s205 = smul.addr %s202, 6
      %s206 = sadd.s32 %s204, %s205
      %s207 = smul.addr %s206, 8
      %s208 = scalar_lea.vmem %s3, %s207
      %s209 = smul.u32 2, %s19
      %v210 = vld [vmem:[%s1] sm:$0xff]
      %v211 = vld [vmem:[%s1 + $0x8] sm:$0xff]
      %v212 = vld [vmem:[%s1 + $0x10] sm:$0xf]
      %v213 = vld [vmem:[%s198] sm:$0xff]
      %v214 = vld [vmem:[%s2] sm:$0xff]
      %v215 = vld [vmem:[%s2 + $0x8] sm:$0xff]
      %v216 = vld [vmem:[%s2 + $0x10] sm:$0xf]
      %218 = vset.pattern.permute.xlu0 0
      %219 = vperm.xlu0 %218, %v214
      %v220 = vpop.permute.xlu0 %219
      %223 = vset.pattern.permute.xlu0 0
      %224 = vperm.xlu0 %223, %v215
      %v225 = vpop.permute.xlu0 %224
      %228 = vset.pattern.permute.xlu0 0
      %229 = vperm.xlu0 %228, %v216
      %v230 = vpop.permute.xlu0 %229
      %v233 = vcombine.high %v213, %v213
      %vm234 = vcmask 31744
      %v236 = vsel %vm234, %v210, 0
      %v239 = vsel %vm234, %v211, 0
      %v242 = vsel %vm234, %v212, 0
      %vm244 = vcmask 1043456
      %v245 = vsel %vm244, %v213, 0
      %v247 = vsel %vm244, %v233, 0
      %249 = vmatprep.subr.mxu0 %v247
      %250 = vmatpush1.msra.mxu0 %v245
      %251 = vmatprep.subr.mxu0 0.0
      %252 = vmatpush1.msra.mxu0 0.0
      %253 = vmatprep.subr.mxu0 0.0
      %254 = vmatpush1.msra.mxu0 0.0
      %255 = vmatprep.subr.mxu0 0.0
      %256 = vmatpush1.msra.mxu0 0.0
      %257 = vmatprep.subr.mxu0 0.0
      %258 = vmatpush1.msra.mxu0 0.0
      %259 = vmatprep.subr.mxu0 0.0
      %260 = vmatpush1.msra.mxu0 0.0
      %261 = vmatprep.subr.mxu0 0.0
      %262 = vmatpush1.msra.mxu0 0.0
      %263 = vmatprep.subr.mxu0 0.0
      %264 = vmatpush1.msra.mxu0 0.0
      %265 = vmatprep.subr.mxu0 0.0
      %266 = vmatpush1.msra.mxu0 0.0
      %267 = vmatprep.subr.mxu0 0.0
      %268 = vmatpush1.msra.mxu0 0.0
      %269 = vmatprep.subr.mxu0 0.0
      %270 = vmatpush1.msra.mxu0 0.0
      %271 = vmatprep.subr.mxu0 0.0
      %272 = vmatpush1.msra.mxu0 0.0
      %273 = vmatprep.subr.mxu0 0.0
      %274 = vmatpush1.msra.mxu0 0.0
      %275 = vmatprep.subr.mxu0 0.0
      %276 = vmatpush1.msra.mxu0 0.0
      %277 = vmatprep.subr.mxu0 0.0
      %278 = vmatpush1.msra.mxu0 0.0
      %279 = vmatprep.subr.mxu0 0.0
      %280 = vmatpush1.msra.mxu0 0.0
      %281 = vmatprep.subr.mxu0 0.0
      %282 = vmatpush1.msra.mxu0 0.0
      %283 = vmatprep.subr.mxu0 0.0
      %284 = vmatpush1.msra.mxu0 0.0
      %285 = vmatprep.subr.mxu0 0.0
      %286 = vmatpush1.msra.mxu0 0.0
      %287 = vmatprep.subr.mxu0 0.0
      %288 = vmatpush1.msra.mxu0 0.0
      %289 = vmatprep.subr.mxu0 0.0
      %290 = vmatpush1.msra.mxu0 0.0
      %291 = vmatprep.subr.mxu0 0.0
      %292 = vmatpush1.msra.mxu0 0.0
      %293 = vmatprep.subr.mxu0 0.0
      %294 = vmatpush1.msra.mxu0 0.0
      %295 = vmatprep.subr.mxu0 0.0
      %296 = vmatpush1.msra.mxu0 0.0
      %297 = vmatprep.subr.mxu0 0.0
      %298 = vmatpush1.msra.mxu0 0.0
      %299 = vmatprep.subr.mxu0 0.0
      %300 = vmatpush1.msra.mxu0 0.0
      %301 = vmatprep.subr.mxu0 0.0
      %302 = vmatpush1.msra.mxu0 0.0
      %303 = vmatprep.subr.mxu0 0.0
      %304 = vmatpush1.msra.mxu0 0.0
      %305 = vmatprep.subr.mxu0 0.0
      %306 = vmatpush1.msra.mxu0 0.0
      %307 = vmatprep.subr.mxu0 0.0
      %308 = vmatpush1.msra.mxu0 0.0
      %309 = vmatprep.subr.mxu0 0.0
      %310 = vmatpush1.msra.mxu0 0.0
      %311 = vmatprep.subr.mxu0 0.0
      %312 = vmatpush1.msra.mxu0 0.0
      %313 = vmatprep.mubr.f32.mxu0 0.0
      %314 = vmatmul.mubr.f32.gmra.mrb[0].mxu0 %v236
      %v315 = vpop.f32.mrb[0].mxu0
      %v316 = vadd.f32 %v220, %v315
      %v317 = vpop.f32.mrb[0].mxu0
      %v318 = vadd.f32 %v220, %v317
      %319 = vmatprep.mubr.f32.mxu0 0.0
      %320 = vmatmul.mubr.f32.gmra.mrb[0].mxu0 %v239
      %v321 = vpop.f32.mrb[0].mxu0
      %v322 = vadd.f32 %v225, %v321
      %v323 = vpop.f32.mrb[0].mxu0
      %v324 = vadd.f32 %v225, %v323
      %325 = vmatprep.mubr.f32.mxu0 0.0
      %326 = vmatmul.mubr.f32.gmra.mrb[0].mxu0 %v242
      %v327 = vpop.f32.mrb[0].mxu0
      %v328 = vadd.f32 %v230, %v327
      %v329 = vpop.f32.mrb[0].mxu0
      %v330 = vadd.f32 %v230, %v329
      %331 = vdwg.mxu0
      %v332 = vtanh.pop %v316
      %v333 = vtanh.pop %v318
      %v334 = vtanh.pop %v322
      %v335 = vtanh.pop %v324
      %v336 = vtanh.pop %v328
      %v337 = vtanh.pop %v330
      %338 = vst [vmem:[%s208] sm:$0xff] %v332
      %339 = vst [vmem:[%s208 + $0x8] sm:$0xff] %v333
      %340 = vst [vmem:[%s208 + $0x10] sm:$0xff] %v334
      %341 = vst [vmem:[%s208 + $0x18] sm:$0xff] %v335
      %342 = vst [vmem:[%s208 + $0x20] sm:$0xf] %v336
      %343 = vst [vmem:[%s208 + $0x28] sm:$0xf] %v337
      %s344 = smul.u32 2, %s19
      %p345 = scmp.lt.s32.totalorder %s18, 1
      %s346 = scalar_select %p345, %s18, 1
      %p347 = scmp.lt.s32.totalorder %s344, 1
      %s348 = scalar_select %p347, %s344, 1
      %s349 = smul.addr %s346, 6
      %s350 = sadd.s32 %s348, %s349
      %s351 = smul.addr %s350, 8
      %s352 = scalar_lea.vmem %s3, %s351
      // Predicated region
      $region33: #{simple_block3d_forward.9} parent=31 // pred_check
        %p353 = pneg %p116
      $region34: #{simple_block3d_forward.9} parent=31 // pred_check_branch
        %355 = sbr.rel (%p353) target = $region36
      $region35: #{simple_block3d_forward.9} parent=31 // pred_region
        %s356 = smul.u32 2, %s19
      $region36: #{simple_block3d_forward.9} parent=31 // pred_fallthru
        _
    $region32: #{simple_block3d_forward.9} parent=5 // pred_fallthru
      _
    %p357 = scmp.le.s32.totalorder 2, %s9
    // Predicated region
    $region37: #{simple_block3d_forward.9} parent=5 // pred_check
      %p358 = pneg %p357
    $region38: #{simple_block3d_forward.9} parent=5 // pred_check_branch
      %360 = sbr.rel (%p358) target = $region40
    $region39: #{simple_block3d_forward.9} parent=5 // pred_region
      %s361 = ssub.s32 %s9, 2
      // Predicated region
      $region41: #{simple_block3d_forward.9} parent=39 // pred_check
        %p362 = pneg %p122
      $region42: #{simple_block3d_forward.9} parent=39 // pred_check_branch
        %364 = sbr.rel (%p362) target = $region44
      $region43: #{simple_block3d_forward.9} parent=39 // pred_region
        %s365 = smul.u32 2, %s21
        %p366 = scmp.lt.s32.totalorder %s20, 1
        %s367 = scalar_select %p366, %s20, 1
        %p368 = scmp.lt.s32.totalorder %s365, 1
        %s369 = scalar_select %p368, %s365, 1
        %s370 = smul.addr %s367, 6
        %s371 = sadd.s32 %s369, %s370
        %s372 = smul.addr %s371, 8
        %s373 = scalar_lea.vmem %s3, %s372
      $region44: #{simple_block3d_forward.9} parent=39 // pred_fallthru
        _
    $region40: #{simple_block3d_forward.9} parent=5 // pred_fallthru
      _
  $region6: #{simple_block3d_forward.9} parent=0 // loop_footer
    %s13 = sadd.s32 1, %s9
  $region7: #{simple_block3d_forward.9} parent=0 // loop_footer_branch
    %8 = sbr.rel target = $region3
  $region8: #{simple_block3d_forward.9} parent=0 // loop_exit
    _

// kernel: simple_block3d_forward.10
$region0: #{simple_block3d_forward.10}
  #allocation0 [shape = 'u32[]', space=smem, size = 0x4, offset = 0x4, fixed_abs, tag = 'smem constant byte address 0x4 - core index']
  #allocation1 [shape = 'u32[144,128]{1,0:T(1,128)}', space=vmem, size = 0x12000, scoped, tag = 'internal scratch']
  %s0 = inlined_call_operand.vmem [shape: f32[2,16,2,40], index: 0, kind: input, shape index: {}]
  %s1 = inlined_call_operand.vmem [shape: f32[2,16,40,80], index: 1, kind: input, shape index: {}]
  %s2 = inlined_call_operand.vmem [shape: f32[2,16,2,80], index: 2, kind: output, shape index: {}]
  %s3 = sld [smem:[#allocation0]]
  $region41: #{simple_block3d_forward.10} parent=0
    _
  %s5 = ssub.s32 1, %s3
  %s6 = scalar_select 0, %s5, %s3
  loop: start=0, step=1, limit=4
  $region2: #{simple_block3d_forward.10} parent=0 // loop_pre_header
    _
  $region3: #{simple_block3d_forward.10} parent=0 // loop_header
    %s8 = sphi 0, %s12
    %p9 = scmp.ge.s32.totalorder %s8, 4
    %s15 = sphi 0, %s27
    %s16 = sphi 0, %s23
    %s17 = sphi 0, %s15
    %s18 = sphi 0, %s16
    %s19 = sphi 0, %s17
    %s20 = sphi 0, %s18
    %s32 = sphi 0, %s34
    %s35 = sphi 0, %s32
    %s36 = sphi 0, %s35
    %s52 = sphi 0, %s36
    %s60 = sphi 0, %s62
    %s63 = sphi 0, %s60
    %s64 = sphi 0, %s63
    %s80 = sphi 0, %s64
    %s88 = sphi 0, %s90
    %s91 = sphi 0, %s88
    %s92 = sphi 0, %s91
    %s108 = sphi 0, %s92
  $region4: #{simple_block3d_forward.10} parent=0 // loop_header_branch
    %11 = sbr.rel (%p9) target = $region8
  $region5: #{simple_block3d_forward.10} parent=0 // loop_body
    %s13 = ssub.s32 %s8, 1
    %s14 = ssub.s32 %s8, 2
    %s21 = sadd.s32 1, %s16
    %p22 = scmp.ge.s32.totalorder %s21, 2
    %s23 = scalar_select %p22, 0, %s21
    %s24 = sadd.s32 1, %s15
    %s25 = scalar_select %p22, %s24, %s15
    %p26 = scmp.ge.s32.totalorder %s25, 1
    %s27 = scalar_select %p26, 0, %s25
    %s28 = ssub.s32 %s16, %s23
    %s29 = ssub.s32 %s15, %s27
    %s30 = sor.u32 %s28, %s29
    %p31 = scmp.eq.s32.totalorder %s30, 0
    %s33 = sadd.s32 %s32, 1
    %s34 = scalar_select %p31, %s32, %s33
    %p37 = pneg %p31
    %p38 = scmp.eq.s32.totalorder %s8, 1
    %p39 = por %p37, %p38
    %p40 = scmp.ne.s32.totalorder %s32, %s35
    %p41 = scmp.eq.s32.totalorder %s8, 0
    %p42 = por %p40, %p41
    %p43 = scmp.ne.s32.totalorder %s32, %s35
    %p44 = scmp.eq.s32.totalorder %s13, 1
    %p45 = por %p43, %p44
    %p46 = scmp.ne.s32.totalorder %s35, %s36
    %p47 = scmp.eq.s32.totalorder %s13, 0
    %p48 = por %p46, %p47
    %p49 = scmp.ne.s32.totalorder %s35, %s36
    %p50 = scmp.eq.s32.totalorder %s14, 1
    %p51 = por %p49, %p50
    %p53 = scmp.ne.s32.totalorder %s36, %s52
    %p54 = scmp.eq.s32.totalorder %s14, 0
    %p55 = por %p53, %p54
    %s56 = ssub.s32 %s16, %s23
    %s57 = ssub.s32 %s15, %s27
    %s58 = sor.u32 %s56, %s57
    %p59 = scmp.eq.s32.totalorder %s58, 0
    %s61 = sadd.s32 %s60, 1
    %s62 = scalar_select %p59, %s60, %s61
    %p65 = pneg %p59
    %p66 = scmp.eq.s32.totalorder %s8, 1
    %p67 = por %p65, %p66
    %p68 = scmp.ne.s32.totalorder %s60, %s63
    %p69 = scmp.eq.s32.totalorder %s8, 0
    %p70 = por %p68, %p69
    %p71 = scmp.ne.s32.totalorder %s60, %s63
    %p72 = scmp.eq.s32.totalorder %s13, 1
    %p73 = por %p71, %p72
    %p74 = scmp.ne.s32.totalorder %s63, %s64
    %p75 = scmp.eq.s32.totalorder %s13, 0
    %p76 = por %p74, %p75
    %p77 = scmp.ne.s32.totalorder %s63, %s64
    %p78 = scmp.eq.s32.totalorder %s14, 1
    %p79 = por %p77, %p78
    %p81 = scmp.ne.s32.totalorder %s64, %s80
    %p82 = scmp.eq.s32.totalorder %s14, 0
    %p83 = por %p81, %p82
    %s84 = ssub.s32 %s16, %s23
    %s85 = ssub.s32 %s15, %s27
    %s86 = sor.u32 %s84, %s85
    %p87 = scmp.eq.s32.totalorder %s86, 0
    %s89 = sadd.s32 %s88, 1
    %s90 = scalar_select %p87, %s88, %s89
    %p93 = pneg %p87
    %p94 = scmp.eq.s32.totalorder %s8, 1
    %p95 = por %p93, %p94
    %p96 = scmp.ne.s32.totalorder %s88, %s91
    %p97 = scmp.eq.s32.totalorder %s8, 0
    %p98 = por %p96, %p97
    %p99 = scmp.ne.s32.totalorder %s88, %s91
    %p100 = scmp.eq.s32.totalorder %s13, 1
    %p101 = por %p99, %p100
    %p102 = scmp.ne.s32.totalorder %s91, %s92
    %p103 = scmp.eq.s32.totalorder %s13, 0
    %p104 = por %p102, %p103
    %p105 = scmp.ne.s32.totalorder %s91, %s92
    %p106 = scmp.eq.s32.totalorder %s14, 1
    %p107 = por %p105, %p106
    %p109 = scmp.ne.s32.totalorder %s92, %s108
    %p110 = scmp.eq.s32.totalorder %s14, 0
    %p111 = por %p109, %p110
    %p112 = scmp.le.s32.totalorder 1, %s8
    %p113 = scmp.lt.s32.totalorder %s8, 3
    %p114 = pnand %p112, %p113
    %p115 = pneg %p114
    // Predicated region
    $region9: #{simple_block3d_forward.10} parent=5 // pred_check
      _
    $region10: #{simple_block3d_forward.10} parent=5 // pred_check_branch
      %117 = sbr.rel (%p114) target = $region12
    $region11: #{simple_block3d_forward.10} parent=5 // pred_region
      %s118 = ssub.s32 %s8, 1
    $region12: #{simple_block3d_forward.10} parent=5 // pred_fallthru
      _
    %p119 = scmp.lt.s32.totalorder %s8, 2
    // Predicated region
    $region13: #{simple_block3d_forward.10} parent=5 // pred_check
      %p120 = pneg %p119
    $region14: #{simple_block3d_forward.10} parent=5 // pred_check_branch
      %122 = sbr.rel (%p120) target = $region16
    $region15: #{simple_block3d_forward.10} parent=5 // pred_region
      // Predicated region
      $region17: #{simple_block3d_forward.10} parent=15 // pred_check
        %p123 = pneg %p42
      $region18: #{simple_block3d_forward.10} parent=15 // pred_check_branch
        %125 = sbr.rel (%p123) target = $region20
      $region19: #{simple_block3d_forward.10} parent=15 // pred_region
        %s126 = smul.u32 16, %s15
        %p127 = scmp.lt.s32.totalorder %s16, 1
        %s128 = scalar_select %p127, %s16, 1
        %p129 = scmp.lt.s32.totalorder %s126, 15
        %s130 = scalar_select %p129, %s126, 15
        %s131 = smul.addr %s128, 16
        %s132 = sadd.s32 %s130, %s131
        %s133 = smul.addr %s132, 2
        %s134 = scalar_lea.vmem %s0, %s133
        %s135 = smul.u32 16, %s15
      $region20: #{simple_block3d_forward.10} parent=15 // pred_fallthru
        _
      // Predicated region
      $region21: #{simple_block3d_forward.10} parent=15 // pred_check
        %p136 = pneg %p70
      $region22: #{simple_block3d_forward.10} parent=15 // pred_check_branch
        %138 = sbr.rel (%p136) target = $region24
      $region23: #{simple_block3d_forward.10} parent=15 // pred_region
        %s139 = smul.u32 16, %s15
        %p140 = scmp.lt.s32.totalorder %s16, 1
        %s141 = scalar_select %p140, %s16, 1
        %p142 = scmp.lt.s32.totalorder %s139, 15
        %s143 = scalar_select %p142, %s139, 15
        %s144 = smul.addr %s143, 5
        %s145 = smul.addr %s141, 80
        %s146 = sadd.s32 %s144, %s145
        %s147 = smul.addr %s146, 8
        %s148 = scalar_lea.vmem %s1, %s147
        %s149 = smul.u32 16, %s15
      $region24: #{simple_block3d_forward.10} parent=15 // pred_fallthru
        _
    $region16: #{simple_block3d_forward.10} parent=5 // pred_fallthru
      _
    %p150 = scmp.le.s32.totalorder 1, %s8
    %p151 = scmp.lt.s32.totalorder %s8, 3
    %p152 = pnand %p150, %p151
    %p153 = pneg %p152
    // Predicated region
    $region25: #{simple_block3d_forward.10} parent=5 // pred_check
      _
    $region26: #{simple_block3d_forward.10} parent=5 // pred_check_branch
      %155 = sbr.rel (%p152) target = $region28
    $region27: #{simple_block3d_forward.10} parent=5 // pred_region
      %s156 = ssub.s32 %s8, 1
      %s157 = smul.u32 16, %s17
      %p158 = scmp.lt.s32.totalorder %s18, 1
      %s159 = scalar_select %p158, %s18, 1
      %p160 = scmp.lt.s32.totalorder %s157, 15
      %s161 = scalar_select %p160, %s157, 15
      %s162 = smul.addr %s159, 16
      %s163 = sadd.s32 %s161, %s162
      %s164 = smul.addr %s163, 2
      %s165 = scalar_lea.vmem %s0, %s164
      %p166 = pneg %p48
      %p167 = pneg %p45
      %s168 = smul.u32 16, %s17
      %p169 = scmp.lt.s32.totalorder %s18, 1
      %s170 = scalar_select %p169, %s18, 1
      %p171 = scmp.lt.s32.totalorder %s168, 15
      %s172 = scalar_select %p171, %s168, 15
      %s173 = smul.addr %s172, 5
      %s174 = smul.addr %s170, 80
      %s175 = sadd.s32 %s173, %s174
      %s176 = smul.addr %s175, 8
      %s177 = scalar_lea.vmem %s1, %s176
      %p178 = pneg %p76
      %p179 = pneg %p73
      %p180 = pneg %p104
      %p181 = pneg %p101
      %s182 = smul.u32 16, %s17
      %p183 = scmp.lt.s32.totalorder %s18, 1
      %s184 = scalar_select %p183, %s18, 1
      %p185 = scmp.lt.s32.totalorder %s182, 15
      %s186 = scalar_select %p185, %s182, 15
      %s187 = smul.addr %s184, 16
      %s188 = sadd.s32 %s186, %s187
      %s189 = smul.addr %s188, 2
      %s190 = scalar_lea.vmem %s2, %s189
      %s191 = smul.u32 16, %s17
      %p192 = scmp.lt.s32.totalorder %s18, 1
      %s193 = scalar_select %p192, %s18, 1
      %p194 = scmp.lt.s32.totalorder %s191, 15
      %s195 = scalar_select %p194, %s191, 15
      %s196 = smul.addr %s193, 16
      %s197 = sadd.s32 %s195, %s196
      %s198 = smul.addr %s197, 2
      %s199 = scalar_lea.vmem %s0, %s198
      %s200 = smul.u32 16, %s17
      %s201 = smul.u32 16, %s17
      %p202 = scmp.lt.s32.totalorder %s18, 1
      %s203 = scalar_select %p202, %s18, 1
      %p204 = scmp.lt.s32.totalorder %s201, 15
      %s205 = scalar_select %p204, %s201, 15
      %s206 = smul.addr %s205, 5
      %s207 = smul.addr %s203, 80
      %s208 = sadd.s32 %s206, %s207
      %s209 = smul.addr %s208, 8
      %s210 = scalar_lea.vmem %s1, %s209
      %s211 = smul.u32 16, %s17
      %s212 = smul.u32 16, %s17
      %p213 = scmp.lt.s32.totalorder %s18, 1
      %s214 = scalar_select %p213, %s18, 1
      %p215 = scmp.lt.s32.totalorder %s212, 15
      %s216 = scalar_select %p215, %s212, 15
      %s217 = smul.addr %s214, 16
      %s218 = sadd.s32 %s216, %s217
      %s219 = smul.addr %s218, 2
      %s220 = scalar_lea.vmem %s2, %s219
      %s221 = smul.u32 16, %s17
      %v222 = vld [vmem:[%s199] sm:$0x3]
      %v223 = vld [vmem:[%s199 + $0x2] sm:$0x3]
      %v224 = vld [vmem:[%s199 + $0x4] sm:$0x3]
      %v225 = vld [vmem:[%s199 + $0x6] sm:$0x3]
      %v226 = vld [vmem:[%s199 + $0x8] sm:$0x3]
      %v227 = vld [vmem:[%s199 + $0xa] sm:$0x3]
      %v228 = vld [vmem:[%s199 + $0xc] sm:$0x3]
      %v229 = vld [vmem:[%s199 + $0xe] sm:$0x3]
      %v230 = vld [vmem:[%s199 + $0x10] sm:$0x3]
      %v231 = vld [vmem:[%s199 + $0x12] sm:$0x3]
      %v232 = vld [vmem:[%s199 + $0x14] sm:$0x3]
      %v233 = vld [vmem:[%s199 + $0x16] sm:$0x3]
      %v234 = vld [vmem:[%s199 + $0x18] sm:$0x3]
      %v235 = vld [vmem:[%s199 + $0x1a] sm:$0x3]
      %v236 = vld [vmem:[%s199 + $0x1c] sm:$0x3]
      %v237 = vld [vmem:[%s199 + $0x1e] sm:$0x3]
      %v238 = vld [vmem:[%s210] sm:$0xff]
      %v239 = vld [vmem:[%s210 + $0x8] sm:$0xff]
      %v240 = vld [vmem:[%s210 + $0x10] sm:$0xff]
      %v241 = vld [vmem:[%s210 + $0x18] sm:$0xff]
      %v242 = vld [vmem:[%s210 + $0x20] sm:$0xff]
      %v243 = vld [vmem:[%s210 + $0x28] sm:$0xff]
      %v244 = vld [vmem:[%s210 + $0x30] sm:$0xff]
      %v245 = vld [vmem:[%s210 + $0x38] sm:$0xff]
      %v246 = vld [vmem:[%s210 + $0x40] sm:$0xff]
      %v247 = vld [vmem:[%s210 + $0x48] sm:$0xff]
      %v248 = vld [vmem:[%s210 + $0x50] sm:$0xff]
      %v249 = vld [vmem:[%s210 + $0x58] sm:$0xff]
      %v250 = vld [vmem:[%s210 + $0x60] sm:$0xff]
      %v251 = vld [vmem:[%s210 + $0x68] sm:$0xff]
      %v252 = vld [vmem:[%s210 + $0x70] sm:$0xff]
      %v253 = vld [vmem:[%s210 + $0x78] sm:$0xff]
      %v254 = vld [vmem:[%s210 + $0x80] sm:$0xff]
      %v255 = vld [vmem:[%s210 + $0x88] sm:$0xff]
      %v256 = vld [vmem:[%s210 + $0x90] sm:$0xff]
      %v257 = vld [vmem:[%s210 + $0x98] sm:$0xff]
      %v258 = vld [vmem:[%s210 + $0xa0] sm:$0xff]
      %v259 = vld [vmem:[%s210 + $0xa8] sm:$0xff]
      %v260 = vld [vmem:[%s210 + $0xb0] sm:$0xff]
      %v261 = vld [vmem:[%s210 + $0xb8] sm:$0xff]
      %v262 = vld [vmem:[%s210 + $0xc0] sm:$0xff]
      %v263 = vld [vmem:[%s210 + $0xc8] sm:$0xff]
      %v264 = vld [vmem:[%s210 + $0xd0] sm:$0xff]
      %v265 = vld [vmem:[%s210 + $0xd8] sm:$0xff]
      %v266 = vld [vmem:[%s210 + $0xe0] sm:$0xff]
      %v267 = vld [vmem:[%s210 + $0xe8] sm:$0xff]
      %v268 = vld [vmem:[%s210 + $0xf0] sm:$0xff]
      %v269 = vld [vmem:[%s210 + $0xf8] sm:$0xff]
      %v270 = vld [vmem:[%s210 + $0x100] sm:$0xff]
      %v271 = vld [vmem:[%s210 + $0x108] sm:$0xff]
      %v272 = vld [vmem:[%s210 + $0x110] sm:$0xff]
      %v273 = vld [vmem:[%s210 + $0x118] sm:$0xff]
      %v274 = vld [vmem:[%s210 + $0x120] sm:$0xff]
      %v275 = vld [vmem:[%s210 + $0x128] sm:$0xff]
      %v276 = vld [vmem:[%s210 + $0x130] sm:$0xff]
      %v277 = vld [vmem:[%s210 + $0x138] sm:$0xff]
      %v278 = vld [vmem:[%s210 + $0x140] sm:$0xff]
      %v279 = vld [vmem:[%s210 + $0x148] sm:$0xff]
      %v280 = vld [vmem:[%s210 + $0x150] sm:$0xff]
      %v281 = vld [vmem:[%s210 + $0x158] sm:$0xff]
      %v282 = vld [vmem:[%s210 + $0x160] sm:$0xff]
      %v283 = vld [vmem:[%s210 + $0x168] sm:$0xff]
      %v284 = vld [vmem:[%s210 + $0x170] sm:$0xff]
      %v285 = vld [vmem:[%s210 + $0x178] sm:$0xff]
      %v286 = vld [vmem:[%s210 + $0x180] sm:$0xff]
      %v287 = vld [vmem:[%s210 + $0x188] sm:$0xff]
      %v288 = vld [vmem:[%s210 + $0x190] sm:$0xff]
      %v289 = vld [vmem:[%s210 + $0x198] sm:$0xff]
      %v290 = vld [vmem:[%s210 + $0x1a0] sm:$0xff]
      %v291 = vld [vmem:[%s210 + $0x1a8] sm:$0xff]
      %v292 = vld [vmem:[%s210 + $0x1b0] sm:$0xff]
      %v293 = vld [vmem:[%s210 + $0x1b8] sm:$0xff]
      %v294 = vld [vmem:[%s210 + $0x1c0] sm:$0xff]
      %v295 = vld [vmem:[%s210 + $0x1c8] sm:$0xff]
      %v296 = vld [vmem:[%s210 + $0x1d0] sm:$0xff]
      %v297 = vld [vmem:[%s210 + $0x1d8] sm:$0xff]
      %v298 = vld [vmem:[%s210 + $0x1e0] sm:$0xff]
      %v299 = vld [vmem:[%s210 + $0x1e8] sm:$0xff]
      %v300 = vld [vmem:[%s210 + $0x1f0] sm:$0xff]
      %v301 = vld [vmem:[%s210 + $0x1f8] sm:$0xff]
      %v302 = vld [vmem:[%s210 + $0x200] sm:$0xff]
      %v303 = vld [vmem:[%s210 + $0x208] sm:$0xff]
      %v304 = vld [vmem:[%s210 + $0x210] sm:$0xff]
      %v305 = vld [vmem:[%s210 + $0x218] sm:$0xff]
      %v306 = vld [vmem:[%s210 + $0x220] sm:$0xff]
      %v307 = vld [vmem:[%s210 + $0x228] sm:$0xff]
      %v308 = vld [vmem:[%s210 + $0x230] sm:$0xff]
      %v309 = vld [vmem:[%s210 + $0x238] sm:$0xff]
      %v310 = vld [vmem:[%s210 + $0x240] sm:$0xff]
      %v311 = vld [vmem:[%s210 + $0x248] sm:$0xff]
      %v312 = vld [vmem:[%s210 + $0x250] sm:$0xff]
      %v313 = vld [vmem:[%s210 + $0x258] sm:$0xff]
      %v314 = vld [vmem:[%s210 + $0x260] sm:$0xff]
      %v315 = vld [vmem:[%s210 + $0x268] sm:$0xff]
      %v316 = vld [vmem:[%s210 + $0x270] sm:$0xff]
      %v317 = vld [vmem:[%s210 + $0x278] sm:$0xff]
      %vm318 = vcmask 326656
      %v320 = vsel %vm318, %v222, 0
      %322 = vmatprep.subr.mxu0 0.0
      %323 = vmatpush1.msra.mxu0 %v238
      %324 = vmatprep.subr.mxu0 0.0
      %325 = vmatpush1.msra.mxu0 %v239
      %326 = vmatprep.subr.mxu0 0.0
      %327 = vmatpush1.msra.mxu0 %v240
      %328 = vmatprep.subr.mxu0 0.0
      %329 = vmatpush1.msra.mxu0 %v241
      %330 = vmatprep.subr.mxu0 0.0
      %331 = vmatpush1.msra.mxu0 %v242
      %332 = vmatprep.subr.mxu0 0.0
      %333 = vmatpush1.msra.mxu0 0.0
      %334 = vmatprep.subr.mxu0 0.0
      %335 = vmatpush1.msra.mxu0 0.0
      %336 = vmatprep.subr.mxu0 0.0
      %337 = vmatpush1.msra.mxu0 0.0
      %338 = vmatprep.subr.mxu0 0.0
      %339 = vmatpush1.msra.mxu0 0.0
      %340 = vmatprep.subr.mxu0 0.0
      %341 = vmatpush1.msra.mxu0 0.0
      %342 = vmatprep.subr.mxu0 0.0
      %343 = vmatpush1.msra.mxu0 0.0
      %344 = vmatprep.subr.mxu0 0.0
      %345 = vmatpush1.msra.mxu0 0.0
      %346 = vmatprep.subr.mxu0 0.0
      %347 = vmatpush1.msra.mxu0 0.0
      %348 = vmatprep.subr.mxu0 0.0
      %349 = vmatpush1.msra.mxu0 0.0
      %350 = vmatprep.subr.mxu0 0.0
      %351 = vmatpush1.msra.mxu0 0.0
      %352 = vmatprep.subr.mxu0 0.0
      %353 = vmatpush1.msra.mxu0 0.0
      %354 = vmatprep.subr.mxu0 0.0
      %355 = vmatpush1.msra.mxu0 0.0
      %356 = vmatprep.subr.mxu0 0.0
      %357 = vmatpush1.msra.mxu0 0.0
      %358 = vmatprep.subr.mxu0 0.0
      %359 = vmatpush1.msra.mxu0 0.0
      %360 = vmatprep.subr.mxu0 0.0
      %361 = vmatpush1.msra.mxu0 0.0
      %362 = vmatprep.subr.mxu0 0.0
      %363 = vmatpush1.msra.mxu0 0.0
      %364 = vmatprep.subr.mxu0 0.0
      %365 = vmatpush1.msra.mxu0 0.0
      %366 = vmatprep.subr.mxu0 0.0
      %367 = vmatpush1.msra.mxu0 0.0
      %368 = vmatprep.subr.mxu0 0.0
      %369 = vmatpush1.msra.mxu0 0.0
      %370 = vmatprep.subr.mxu0 0.0
      %371 = vmatpush1.msra.mxu0 0.0
      %372 = vmatprep.subr.mxu0 0.0
      %373 = vmatpush1.msra.mxu0 0.0
      %374 = vmatprep.subr.mxu0 0.0
      %375 = vmatpush1.msra.mxu0 0.0
      %376 = vmatprep.subr.mxu0 0.0
      %377 = vmatpush1.msra.mxu0 0.0
      %378 = vmatprep.subr.mxu0 0.0
      %379 = vmatpush1.msra.mxu0 0.0
      %380 = vmatprep.subr.mxu0 0.0
      %381 = vmatpush1.msra.mxu0 0.0
      %382 = vmatprep.subr.mxu0 0.0
      %383 = vmatpush1.msra.mxu0 0.0
      %384 = vmatprep.subr.mxu0 0.0
      %385 = vmatpush1.msra.mxu0 0.0
      %386 = vmatprep.mubr.f32.mxu0 0.0
      %387 = vmatmul.mubr.f32.gmra.mrb[0].mxu0 %v320
      %v388 = vpop.f32.mrb[0].mxu0
      %v389 = vadd.f32 0.0, %v388
      %v390 = vpop.f32.mrb[0].mxu0
      %391 = vdwg.mxu0
      %v393 = vsel %vm318, %v223, 0
      %395 = vmatprep.subr.mxu0 0.0
      %396 = vmatpush1.msra.mxu0 %v243
      %397 = vmatprep.subr.mxu0 0.0
      %398 = vmatpush1.msra.mxu0 %v244
      %399 = vmatprep.subr.mxu0 0.0
      %400 = vmatpush1.msra.mxu0 %v245
      %401 = vmatprep.subr.mxu0 0.0
      %402 = vmatpush1.msra.mxu0 %v246
      %403 = vmatprep.subr.mxu0 0.0
      %404 = vmatpush1.msra.mxu0 %v247
      %405 = vmatprep.subr.mxu0 0.0
      %406 = vmatpush1.msra.mxu0 0.0
      %407 = vmatprep.subr.mxu0 0.0
      %408 = vmatpush1.msra.mxu0 0.0
      %409 = vmatprep.subr.mxu0 0.0
      %410 = vmatpush1.msra.mxu0 0.0
      %411 = vmatprep.subr.mxu0 0.0
      %412 = vmatpush1.msra.mxu0 0.0
      %413 = vmatprep.subr.mxu0 0.0
      %414 = vmatpush1.msra.mxu0 0.0
      %415 = vmatprep.subr.mxu0 0.0
      %416 = vmatpush1.msra.mxu0 0.0
      %417 = vmatprep.subr.mxu0 0.0
      %418 = vmatpush1.msra.mxu0 0.0
      %419 = vmatprep.subr.mxu0 0.0
      %420 = vmatpush1.msra.mxu0 0.0
      %421 = vmatprep.subr.mxu0 0.0
      %422 = vmatpush1.msra.mxu0 0.0
      %423 = vmatprep.subr.mxu0 0.0
      %424 = vmatpush1.msra.mxu0 0.0
      %425 = vmatprep.subr.mxu0 0.0
      %426 = vmatpush1.msra.mxu0 0.0
      %427 = vmatprep.subr.mxu0 0.0
      %428 = vmatpush1.msra.mxu0 0.0
      %429 = vmatprep.subr.mxu0 0.0
      %430 = vmatpush1.msra.mxu0 0.0
      %431 = vmatprep.subr.mxu0 0.0
      %432 = vmatpush1.msra.mxu0 0.0
      %433 = vmatprep.subr.mxu0 0.0
      %434 = vmatpush1.msra.mxu0 0.0
      %435 = vmatprep.subr.mxu0 0.0
      %436 = vmatpush1.msra.mxu0 0.0
      %437 = vmatprep.subr.mxu0 0.0
      %438 = vmatpush1.msra.mxu0 0.0
      %439 = vmatprep.subr.mxu0 0.0
      %440 = vmatpush1.msra.mxu0 0.0
      %441 = vmatprep.subr.mxu0 0.0
      %442 = vmatpush1.msra.mxu0 0.0
      %443 = vmatprep.subr.mxu0 0.0
      %444 = vmatpush1.msra.mxu0 0.0
      %445 = vmatprep.subr.mxu0 0.0
      %446 = vmatpush1.msra.mxu0 0.0
      %447 = vmatprep.subr.mxu0 0.0
      %448 = vmatpush1.msra.mxu0 0.0
      %449 = vmatprep.subr.mxu0 0.0
      %450 = vmatpush1.msra.mxu0 0.0
      %451 = vmatprep.subr.mxu0 0.0
      %452 = vmatpush1.msra.mxu0 0.0
      %453 = vmatprep.subr.mxu0 0.0
      %454 = vmatpush1.msra.mxu0 0.0
      %455 = vmatprep.subr.mxu0 0.0
      %456 = vmatpush1.msra.mxu0 0.0
      %457 = vmatprep.subr.mxu0 0.0
      %458 = vmatpush1.msra.mxu0 0.0
      %459 = vmatprep.mubr.f32.mxu0 0.0
      %460 = vmatmul.mubr.f32.gmra.mrb[0].mxu0 %v393
      %v461 = vpop.f32.mrb[0].mxu0
      %v462 = vadd.f32 0.0, %v461
      %v463 = vpop.f32.mrb[0].mxu0
      %464 = vdwg.mxu0
      %v466 = vsel %vm318, %v224, 0
      %468 = vmatprep.subr.mxu0 0.0
      %469 = vmatpush1.msra.mxu0 %v248
      %470 = vmatprep.subr.mxu0 0.0
      %471 = vmatpush1.msra.mxu0 %v249
      %472 = vmatprep.subr.mxu0 0.0
      %473 = vmatpush1.msra.mxu0 %v250
      %474 = vmatprep.subr.mxu0 0.0
      %475 = vmatpush1.msra.mxu0 %v251
      %476 = vmatprep.subr.mxu0 0.0
      %477 = vmatpush1.msra.mxu0 %v252
      %478 = vmatprep.subr.mxu0 0.0
      %479 = vmatpush1.msra.mxu0 0.0
      %480 = vmatprep.subr.mxu0 0.0
      %481 = vmatpush1.msra.mxu0 0.0
      %482 = vmatprep.subr.mxu0 0.0
      %483 = vmatpush1.msra.mxu0 0.0
      %484 = vmatprep.subr.mxu0 0.0
      %485 = vmatpush1.msra.mxu0 0.0
      %486 = vmatprep.subr.mxu0 0.0
      %487 = vmatpush1.msra.mxu0 0.0
      %488 = vmatprep.subr.mxu0 0.0
      %489 = vmatpush1.msra.mxu0 0.0
      %490 = vmatprep.subr.mxu0 0.0
      %491 = vmatpush1.msra.mxu0 0.0
      %492 = vmatprep.subr.mxu0 0.0
      %493 = vmatpush1.msra.mxu0 0.0
      %494 = vmatprep.subr.mxu0 0.0
      %495 = vmatpush1.msra.mxu0 0.0
      %496 = vmatprep.subr.mxu0 0.0
      %497 = vmatpush1.msra.mxu0 0.0
      %498 = vmatprep.subr.mxu0 0.0
      %499 = vmatpush1.msra.mxu0 0.0
      %500 = vmatprep.subr.mxu0 0.0
      %501 = vmatpush1.msra.mxu0 0.0
      %502 = vmatprep.subr.mxu0 0.0
      %503 = vmatpush1.msra.mxu0 0.0
      %504 = vmatprep.subr.mxu0 0.0
      %505 = vmatpush1.msra.mxu0 0.0
      %506 = vmatprep.subr.mxu0 0.0
      %507 = vmatpush1.msra.mxu0 0.0
      %508 = vmatprep.subr.mxu0 0.0
      %509 = vmatpush1.msra.mxu0 0.0
      %510 = vmatprep.subr.mxu0 0.0
      %511 = vmatpush1.msra.mxu0 0.0
      %512 = vmatprep.subr.mxu0 0.0
      %513 = vmatpush1.msra.mxu0 0.0
      %514 = vmatprep.subr.mxu0 0.0
      %515 = vmatpush1.msra.mxu0 0.0
      %516 = vmatprep.subr.mxu0 0.0
      %517 = vmatpush1.msra.mxu0 0.0
      %518 = vmatprep.subr.mxu0 0.0
      %519 = vmatpush1.msra.mxu0 0.0
      %520 = vmatprep.subr.mxu0 0.0
      %521 = vmatpush1.msra.mxu0 0.0
      %522 = vmatprep.subr.mxu0 0.0
      %523 = vmatpush1.msra.mxu0 0.0
      %524 = vmatprep.subr.mxu0 0.0
      %525 = vmatpush1.msra.mxu0 0.0
      %526 = vmatprep.subr.mxu0 0.0
      %527 = vmatpush1.msra.mxu0 0.0
      %528 = vmatprep.subr.mxu0 0.0
      %529 = vmatpush1.msra.mxu0 0.0
      %530 = vmatprep.subr.mxu0 0.0
      %531 = vmatpush1.msra.mxu0 0.0
      %532 = vmatprep.mubr.f32.mxu0 0.0
      %533 = vmatmul.mubr.f32.gmra.mrb[0].mxu0 %v466
      %v534 = vpop.f32.mrb[0].mxu0
      %v535 = vadd.f32 0.0, %v534
      %v536 = vpop.f32.mrb[0].mxu0
      %537 = vdwg.mxu0
      %v539 = vsel %vm318, %v225, 0
      %541 = vmatprep.subr.mxu0 0.0
      %542 = vmatpush1.msra.mxu0 %v253
      %543 = vmatprep.subr.mxu0 0.0
      %544 = vmatpush1.msra.mxu0 %v254
      %545 = vmatprep.subr.mxu0 0.0
      %546 = vmatpush1.msra.mxu0 %v255
      %547 = vmatprep.subr.mxu0 0.0
      %548 = vmatpush1.msra.mxu0 %v256
      %549 = vmatprep.subr.mxu0 0.0
      %550 = vmatpush1.msra.mxu0 %v257
      %551 = vmatprep.subr.mxu0 0.0
      %552 = vmatpush1.msra.mxu0 0.0
      %553 = vmatprep.subr.mxu0 0.0
      %554 = vmatpush1.msra.mxu0 0.0
      %555 = vmatprep.subr.mxu0 0.0
      %556 = vmatpush1.msra.mxu0 0.0
      %557 = vmatprep.subr.mxu0 0.0
      %558 = vmatpush1.msra.mxu0 0.0
      %559 = vmatprep.subr.mxu0 0.0
      %560 = vmatpush1.msra.mxu0 0.0
      %561 = vmatprep.subr.mxu0 0.0
      %562 = vmatpush1.msra.mxu0 0.0
      %563 = vmatprep.subr.mxu0 0.0
      %564 = vmatpush1.msra.mxu0 0.0
      %565 = vmatprep.subr.mxu0 0.0
      %566 = vmatpush1.msra.mxu0 0.0
      %567 = vmatprep.subr.mxu0 0.0
      %568 = vmatpush1.msra.mxu0 0.0
      %569 = vmatprep.subr.mxu0 0.0
      %570 = vmatpush1.msra.mxu0 0.0
      %571 = vmatprep.subr.mxu0 0.0
      %572 = vmatpush1.msra.mxu0 0.0
      %573 = vmatprep.subr.mxu0 0.0
      %574 = vmatpush1.msra.mxu0 0.0
      %575 = vmatprep.subr.mxu0 0.0
      %576 = vmatpush1.msra.mxu0 0.0
      %577 = vmatprep.subr.mxu0 0.0
      %578 = vmatpush1.msra.mxu0 0.0
      %579 = vmatprep.subr.mxu0 0.0
      %580 = vmatpush1.msra.mxu0 0.0
      %581 = vmatprep.subr.mxu0 0.0
      %582 = vmatpush1.msra.mxu0 0.0
      %583 = vmatprep.subr.mxu0 0.0
      %584 = vmatpush1.msra.mxu0 0.0
      %585 = vmatprep.subr.mxu0 0.0
      %586 = vmatpush1.msra.mxu0 0.0
      %587 = vmatprep.subr.mxu0 0.0
      %588 = vmatpush1.msra.mxu0 0.0
      %589 = vmatprep.subr.mxu0 0.0
      %590 = vmatpush1.msra.mxu0 0.0
      %591 = vmatprep.subr.mxu0 0.0
      %592 = vmatpush1.msra.mxu0 0.0
      %593 = vmatprep.subr.mxu0 0.0
      %594 = vmatpush1.msra.mxu0 0.0
      %595 = vmatprep.subr.mxu0 0.0
      %596 = vmatpush1.msra.mxu0 0.0
      %597 = vmatprep.subr.mxu0 0.0
      %598 = vmatpush1.msra.mxu0 0.0
      %599 = vmatprep.subr.mxu0 0.0
      %600 = vmatpush1.msra.mxu0 0.0
      %601 = vmatprep.subr.mxu0 0.0
      %602 = vmatpush1.msra.mxu0 0.0
      %603 = vmatprep.subr.mxu0 0.0
      %604 = vmatpush1.msra.mxu0 0.0
      %605 = vmatprep.mubr.f32.mxu0 0.0
      %606 = vmatmul.mubr.f32.gmra.mrb[0].mxu0 %v539
      %v607 = vpop.f32.mrb[0].mxu0
      %v608 = vadd.f32 0.0, %v607
      %v609 = vpop.f32.mrb[0].mxu0
      %610 = vdwg.mxu0
      %v612 = vsel %vm318, %v226, 0
      %614 = vmatprep.subr.mxu0 0.0
      %615 = vmatpush1.msra.mxu0 %v258
      %616 = vmatprep.subr.mxu0 0.0
      %617 = vmatpush1.msra.mxu0 %v259
      %618 = vmatprep.subr.mxu0 0.0
      %619 = vmatpush1.msra.mxu0 %v260
      %620 = vmatprep.subr.mxu0 0.0
      %621 = vmatpush1.msra.mxu0 %v261
      %622 = vmatprep.subr.mxu0 0.0
      %623 = vmatpush1.msra.mxu0 %v262
      %624 = vmatprep.subr.mxu0 0.0
      %625 = vmatpush1.msra.mxu0 0.0
      %626 = vmatprep.subr.mxu0 0.0
      %627 = vmatpush1.msra.mxu0 0.0
      %628 = vmatprep.subr.mxu0 0.0
      %629 = vmatpush1.msra.mxu0 0.0
      %630 = vmatprep.subr.mxu0 0.0
      %631 = vmatpush1.msra.mxu0 0.0
      %632 = vmatprep.subr.mxu0 0.0
      %633 = vmatpush1.msra.mxu0 0.0
      %634 = vmatprep.subr.mxu0 0.0
      %635 = vmatpush1.msra.mxu0 0.0
      %636 = vmatprep.subr.mxu0 0.0
      %637 = vmatpush1.msra.mxu0 0.0
      %638 = vmatprep.subr.mxu0 0.0
      %639 = vmatpush1.msra.mxu0 0.0
      %640 = vmatprep.subr.mxu0 0.0
      %641 = vmatpush1.msra.mxu0 0.0
      %642 = vmatprep.subr.mxu0 0.0
      %643 = vmatpush1.msra.mxu0 0.0
      %644 = vmatprep.subr.mxu0 0.0
      %645 = vmatpush1.msra.mxu0 0.0
      %646 = vmatprep.subr.mxu0 0.0
      %647 = vmatpush1.msra.mxu0 0.0
      %648 = vmatprep.subr.mxu0 0.0
      %649 = vmatpush1.msra.mxu0 0.0
      %650 = vmatprep.subr.mxu0 0.0
      %651 = vmatpush1.msra.mxu0 0.0
      %652 = vmatprep.subr.mxu0 0.0
      %653 = vmatpush1.msra.mxu0 0.0
      %654 = vmatprep.subr.mxu0 0.0
      %655 = vmatpush1.msra.mxu0 0.0
      %656 = vmatprep.subr.mxu0 0.0
      %657 = vmatpush1.msra.mxu0 0.0
      %658 = vmatprep.subr.mxu0 0.0
      %659 = vmatpush1.msra.mxu0 0.0
      %660 = vmatprep.subr.mxu0 0.0
      %661 = vmatpush1.msra.mxu0 0.0
      %662 = vmatprep.subr.mxu0 0.0
      %663 = vmatpush1.msra.mxu0 0.0
      %664 = vmatprep.subr.mxu0 0.0
      %665 = vmatpush1.msra.mxu0 0.0
      %666 = vmatprep.subr.mxu0 0.0
      %667 = vmatpush1.msra.mxu0 0.0
      %668 = vmatprep.subr.mxu0 0.0
      %669 = vmatpush1.msra.mxu0 0.0
      %670 = vmatprep.subr.mxu0 0.0
      %671 = vmatpush1.msra.mxu0 0.0
      %672 = vmatprep.subr.mxu0 0.0
      %673 = vmatpush1.msra.mxu0 0.0
      %674 = vmatprep.subr.mxu0 0.0
      %675 = vmatpush1.msra.mxu0 0.0
      %676 = vmatprep.subr.mxu0 0.0
      %677 = vmatpush1.msra.mxu0 0.0
      %678 = vmatprep.mubr.f32.mxu0 0.0
      %679 = vmatmul.mubr.f32.gmra.mrb[0].mxu0 %v612
      %v680 = vpop.f32.mrb[0].mxu0
      %v681 = vadd.f32 0.0, %v680
      %v682 = vpop.f32.mrb[0].mxu0
      %683 = vdwg.mxu0
      %v685 = vsel %vm318, %v227, 0
      %687 = vmatprep.subr.mxu0 0.0
      %688 = vmatpush1.msra.mxu0 %v263
      %689 = vmatprep.subr.mxu0 0.0
      %690 = vmatpush1.msra.mxu0 %v264
      %691 = vmatprep.subr.mxu0 0.0
      %692 = vmatpush1.msra.mxu0 %v265
      %693 = vmatprep.subr.mxu0 0.0
      %694 = vmatpush1.msra.mxu0 %v266
      %695 = vmatprep.subr.mxu0 0.0
      %696 = vmatpush1.msra.mxu0 %v267
      %697 = vmatprep.subr.mxu0 0.0
      %698 = vmatpush1.msra.mxu0 0.0
      %699 = vmatprep.subr.mxu0 0.0
      %700 = vmatpush1.msra.mxu0 0.0
      %701 = vmatprep.subr.mxu0 0.0
      %702 = vmatpush1.msra.mxu0 0.0
      %703 = vmatprep.subr.mxu0 0.0
      %704 = vmatpush1.msra.mxu0 0.0
      %705 = vmatprep.subr.mxu0 0.0
      %706 = vmatpush1.msra.mxu0 0.0
      %707 = vmatprep.subr.mxu0 0.0
      %708 = vmatpush1.msra.mxu0 0.0
      %709 = vmatprep.subr.mxu0 0.0
      %710 = vmatpush1.msra.mxu0 0.0
      %711 = vmatprep.subr.mxu0 0.0
      %712 = vmatpush1.msra.mxu0 0.0
      %713 = vmatprep.subr.mxu0 0.0
      %714 = vmatpush1.msra.mxu0 0.0
      %715 = vmatprep.subr.mxu0 0.0
      %716 = vmatpush1.msra.mxu0 0.0
      %717 = vmatprep.subr.mxu0 0.0
      %718 = vmatpush1.msra.mxu0 0.0
      %719 = vmatprep.subr.mxu0 0.0
      %720 = vmatpush1.msra.mxu0 0.0
      %721 = vmatprep.subr.mxu0 0.0
      %722 = vmatpush1.msra.mxu0 0.0
      %723 = vmatprep.subr.mxu0 0.0
      %724 = vmatpush1.msra.mxu0 0.0
      %725 = vmatprep.subr.mxu0 0.0
      %726 = vmatpush1.msra.mxu0 0.0
      %727 = vmatprep.subr.mxu0 0.0
      %728 = vmatpush1.msra.mxu0 0.0
      %729 = vmatprep.subr.mxu0 0.0
      %730 = vmatpush1.msra.mxu0 0.0
      %731 = vmatprep.subr.mxu0 0.0
      %732 = vmatpush1.msra.mxu0 0.0
      %733 = vmatprep.subr.mxu0 0.0
      %734 = vmatpush1.msra.mxu0 0.0
      %735 = vmatprep.subr.mxu0 0.0
      %736 = vmatpush1.msra.mxu0 0.0
      %737 = vmatprep.subr.mxu0 0.0
      %738 = vmatpush1.msra.mxu0 0.0
      %739 = vmatprep.subr.mxu0 0.0
      %740 = vmatpush1.msra.mxu0 0.0
      %741 = vmatprep.subr.mxu0 0.0
      %742 = vmatpush1.msra.mxu0 0.0
      %743 = vmatprep.subr.mxu0 0.0
      %744 = vmatpush1.msra.mxu0 0.0
      %745 = vmatprep.subr.mxu0 0.0
      %746 = vmatpush1.msra.mxu0 0.0
      %747 = vmatprep.subr.mxu0 0.0
      %748 = vmatpush1.msra.mxu0 0.0
      %749 = vmatprep.subr.mxu0 0.0
      %750 = vmatpush1.msra.mxu0 0.0
      %751 = vmatprep.mubr.f32.mxu0 0.0
      %752 = vmatmul.mubr.f32.gmra.mrb[0].mxu0 %v685
      %v753 = vpop.f32.mrb[0].mxu0
      %v754 = vadd.f32 0.0, %v753
      %v755 = vpop.f32.mrb[0].mxu0
      %756 = vdwg.mxu0
      %v758 = vsel %vm318, %v228, 0
      %760 = vmatprep.subr.mxu0 0.0
      %761 = vmatpush1.msra.mxu0 %v268
      %762 = vmatprep.subr.mxu0 0.0
      %763 = vmatpush1.msra.mxu0 %v269
      %764 = vmatprep.subr.mxu0 0.0
      %765 = vmatpush1.msra.mxu0 %v270
      %766 = vmatprep.subr.mxu0 0.0
      %767 = vmatpush1.msra.mxu0 %v271
      %768 = vmatprep.subr.mxu0 0.0
      %769 = vmatpush1.msra.mxu0 %v272
      %770 = vmatprep.subr.mxu0 0.0
      %771 = vmatpush1.msra.mxu0 0.0
      %772 = vmatprep.subr.mxu0 0.0
      %773 = vmatpush1.msra.mxu0 0.0
      %774 = vmatprep.subr.mxu0 0.0
      %775 = vmatpush1.msra.mxu0 0.0
      %776 = vmatprep.subr.mxu0 0.0
      %777 = vmatpush1.msra.mxu0 0.0
      %778 = vmatprep.subr.mxu0 0.0
      %779 = vmatpush1.msra.mxu0 0.0
      %780 = vmatprep.subr.mxu0 0.0
      %781 = vmatpush1.msra.mxu0 0.0
      %782 = vmatprep.subr.mxu0 0.0
      %783 = vmatpush1.msra.mxu0 0.0
      %784 = vmatprep.subr.mxu0 0.0
      %785 = vmatpush1.msra.mxu0 0.0
      %786 = vmatprep.subr.mxu0 0.0
      %787 = vmatpush1.msra.mxu0 0.0
      %788 = vmatprep.subr.mxu0 0.0
      %789 = vmatpush1.msra.mxu0 0.0
      %790 = vmatprep.subr.mxu0 0.0
      %791 = vmatpush1.msra.mxu0 0.0
      %792 = vmatprep.subr.mxu0 0.0
      %793 = vmatpush1.msra.mxu0 0.0
      %794 = vmatprep.subr.mxu0 0.0
      %795 = vmatpush1.msra.mxu0 0.0
      %796 = vmatprep.subr.mxu0 0.0
      %797 = vmatpush1.msra.mxu0 0.0
      %798 = vmatprep.subr.mxu0 0.0
      %799 = vmatpush1.msra.mxu0 0.0
      %800 = vmatprep.subr.mxu0 0.0
      %801 = vmatpush1.msra.mxu0 0.0
      %802 = vmatprep.subr.mxu0 0.0
      %803 = vmatpush1.msra.mxu0 0.0
      %804 = vmatprep.subr.mxu0 0.0
      %805 = vmatpush1.msra.mxu0 0.0
      %806 = vmatprep.subr.mxu0 0.0
      %807 = vmatpush1.msra.mxu0 0.0
      %808 = vmatprep.subr.mxu0 0.0
      %809 = vmatpush1.msra.mxu0 0.0
      %810 = vmatprep.subr.mxu0 0.0
      %811 = vmatpush1.msra.mxu0 0.0
      %812 = vmatprep.subr.mxu0 0.0
      %813 = vmatpush1.msra.mxu0 0.0
      %814 = vmatprep.subr.mxu0 0.0
      %815 = vmatpush1.msra.mxu0 0.0
      %816 = vmatprep.subr.mxu0 0.0
      %817 = vmatpush1.msra.mxu0 0.0
      %818 = vmatprep.subr.mxu0 0.0
      %819 = vmatpush1.msra.mxu0 0.0
      %820 = vmatprep.subr.mxu0 0.0
      %821 = vmatpush1.msra.mxu0 0.0
      %822 = vmatprep.subr.mxu0 0.0
      %823 = vmatpush1.msra.mxu0 0.0
      %824 = vmatprep.mubr.f32.mxu0 0.0
      %825 = vmatmul.mubr.f32.gmra.mrb[0].mxu0 %v758
      %v826 = vpop.f32.mrb[0].mxu0
      %v827 = vadd.f32 0.0, %v826
      %v828 = vpop.f32.mrb[0].mxu0
      %829 = vdwg.mxu0
      %v831 = vsel %vm318, %v229, 0
      %833 = vmatprep.subr.mxu0 0.0
      %834 = vmatpush1.msra.mxu0 %v273
      %835 = vmatprep.subr.mxu0 0.0
      %836 = vmatpush1.msra.mxu0 %v274
      %837 = vmatprep.subr.mxu0 0.0
      %838 = vmatpush1.msra.mxu0 %v275
      %839 = vmatprep.subr.mxu0 0.0
      %840 = vmatpush1.msra.mxu0 %v276
      %841 = vmatprep.subr.mxu0 0.0
      %842 = vmatpush1.msra.mxu0 %v277
      %843 = vmatprep.subr.mxu0 0.0
      %844 = vmatpush1.msra.mxu0 0.0
      %845 = vmatprep.subr.mxu0 0.0
      %846 = vmatpush1.msra.mxu0 0.0
      %847 = vmatprep.subr.mxu0 0.0
      %848 = vmatpush1.msra.mxu0 0.0
      %849 = vmatprep.subr.mxu0 0.0
      %850 = vmatpush1.msra.mxu0 0.0
      %851 = vmatprep.subr.mxu0 0.0
      %852 = vmatpush1.msra.mxu0 0.0
      %853 = vmatprep.subr.mxu0 0.0
      %854 = vmatpush1.msra.mxu0 0.0
      %855 = vmatprep.subr.mxu0 0.0
      %856 = vmatpush1.msra.mxu0 0.0
      %857 = vmatprep.subr.mxu0 0.0
      %858 = vmatpush1.msra.mxu0 0.0
      %859 = vmatprep.subr.mxu0 0.0
      %860 = vmatpush1.msra.mxu0 0.0
      %861 = vmatprep.subr.mxu0 0.0
      %862 = vmatpush1.msra.mxu0 0.0
      %863 = vmatprep.subr.mxu0 0.0
      %864 = vmatpush1.msra.mxu0 0.0
      %865 = vmatprep.subr.mxu0 0.0
      %866 = vmatpush1.msra.mxu0 0.0
      %867 = vmatprep.subr.mxu0 0.0
      %868 = vmatpush1.msra.mxu0 0.0
      %869 = vmatprep.subr.mxu0 0.0
      %870 = vmatpush1.msra.mxu0 0.0
      %871 = vmatprep.subr.mxu0 0.0
      %872 = vmatpush1.msra.mxu0 0.0
      %873 = vmatprep.subr.mxu0 0.0
      %874 = vmatpush1.msra.mxu0 0.0
      %875 = vmatprep.subr.mxu0 0.0
      %876 = vmatpush1.msra.mxu0 0.0
      %877 = vmatprep.subr.mxu0 0.0
      %878 = vmatpush1.msra.mxu0 0.0
      %879 = vmatprep.subr.mxu0 0.0
      %880 = vmatpush1.msra.mxu0 0.0
      %881 = vmatprep.subr.mxu0 0.0
      %882 = vmatpush1.msra.mxu0 0.0
      %883 = vmatprep.subr.mxu0 0.0
      %884 = vmatpush1.msra.mxu0 0.0
      %885 = vmatprep.subr.mxu0 0.0
      %886 = vmatpush1.msra.mxu0 0.0
      %887 = vmatprep.subr.mxu0 0.0
      %888 = vmatpush1.msra.mxu0 0.0
      %889 = vmatprep.subr.mxu0 0.0
      %890 = vmatpush1.msra.mxu0 0.0
      %891 = vmatprep.subr.mxu0 0.0
      %892 = vmatpush1.msra.mxu0 0.0
      %893 = vmatprep.subr.mxu0 0.0
      %894 = vmatpush1.msra.mxu0 0.0
      %895 = vmatprep.subr.mxu0 0.0
      %896 = vmatpush1.msra.mxu0 0.0
      %897 = vmatprep.mubr.f32.mxu0 0.0
      %898 = vmatmul.mubr.f32.gmra.mrb[0].mxu0 %v831
      %v899 = vpop.f32.mrb[0].mxu0
      %v900 = vadd.f32 0.0, %v899
      %v901 = vpop.f32.mrb[0].mxu0
      %902 = vdwg.mxu0
      %v904 = vsel %vm318, %v230, 0
      %906 = vmatprep.subr.mxu0 0.0
      %907 = vmatpush1.msra.mxu0 %v278
      %908 = vmatprep.subr.mxu0 0.0
      %909 = vmatpush1.msra.mxu0 %v279
      %910 = vmatprep.subr.mxu0 0.0
      %911 = vmatpush1.msra.mxu0 %v280
      %912 = vmatprep.subr.mxu0 0.0
      %913 = vmatpush1.msra.mxu0 %v281
      %914 = vmatprep.subr.mxu0 0.0
      %915 = vmatpush1.msra.mxu0 %v282
      %916 = vmatprep.subr.mxu0 0.0
      %917 = vmatpush1.msra.mxu0 0.0
      %918 = vmatprep.subr.mxu0 0.0
      %919 = vmatpush1.msra.mxu0 0.0
      %920 = vmatprep.subr.mxu0 0.0
      %921 = vmatpush1.msra.mxu0 0.0
      %922 = vmatprep.subr.mxu0 0.0
      %923 = vmatpush1.msra.mxu0 0.0
      %924 = vmatprep.subr.mxu0 0.0
      %925 = vmatpush1.msra.mxu0 0.0
      %926 = vmatprep.subr.mxu0 0.0
      %927 = vmatpush1.msra.mxu0 0.0
      %928 = vmatprep.subr.mxu0 0.0
      %929 = vmatpush1.msra.mxu0 0.0
      %930 = vmatprep.subr.mxu0 0.0
      %931 = vmatpush1.msra.mxu0 0.0
      %932 = vmatprep.subr.mxu0 0.0
      %933 = vmatpush1.msra.mxu0 0.0
      %934 = vmatprep.subr.mxu0 0.0
      %935 = vmatpush1.msra.mxu0 0.0
      %936 = vmatprep.subr.mxu0 0.0
      %937 = vmatpush1.msra.mxu0 0.0
      %938 = vmatprep.subr.mxu0 0.0
      %939 = vmatpush1.msra.mxu0 0.0
      %940 = vmatprep.subr.mxu0 0.0
      %941 = vmatpush1.msra.mxu0 0.0
      %942 = vmatprep.subr.mxu0 0.0
      %943 = vmatpush1.msra.mxu0 0.0
      %944 = vmatprep.subr.mxu0 0.0
      %945 = vmatpush1.msra.mxu0 0.0
      %946 = vmatprep.subr.mxu0 0.0
      %947 = vmatpush1.msra.mxu0 0.0
      %948 = vmatprep.subr.mxu0 0.0
      %949 = vmatpush1.msra.mxu0 0.0
      %950 = vmatprep.subr.mxu0 0.0
      %951 = vmatpush1.msra.mxu0 0.0
      %952 = vmatprep.subr.mxu0 0.0
      %953 = vmatpush1.msra.mxu0 0.0
      %954 = vmatprep.subr.mxu0 0.0
      %955 = vmatpush1.msra.mxu0 0.0
      %956 = vmatprep.subr.mxu0 0.0
      %957 = vmatpush1.msra.mxu0 0.0
      %958 = vmatprep.subr.mxu0 0.0
      %959 = vmatpush1.msra.mxu0 0.0
      %960 = vmatprep.subr.mxu0 0.0
      %961 = vmatpush1.msra.mxu0 0.0
      %962 = vmatprep.subr.mxu0 0.0
      %963 = vmatpush1.msra.mxu0 0.0
      %964 = vmatprep.subr.mxu0 0.0
      %965 = vmatpush1.msra.mxu0 0.0
      %966 = vmatprep.subr.mxu0 0.0
      %967 = vmatpush1.msra.mxu0 0.0
      %968 = vmatprep.subr.mxu0 0.0
      %969 = vmatpush1.msra.mxu0 0.0
      %970 = vmatprep.mubr.f32.mxu0 0.0
      %971 = vmatmul.mubr.f32.gmra.mrb[0].mxu0 %v904
      %v972 = vpop.f32.mrb[0].mxu0
      %v973 = vadd.f32 0.0, %v972
      %v974 = vpop.f32.mrb[0].mxu0
      %975 = vdwg.mxu0
      %v977 = vsel %vm318, %v231, 0
      %979 = vmatprep.subr.mxu0 0.0
      %980 = vmatpush1.msra.mxu0 %v283
      %981 = vmatprep.subr.mxu0 0.0
      %982 = vmatpush1.msra.mxu0 %v284
      %983 = vmatprep.subr.mxu0 0.0
      %984 = vmatpush1.msra.mxu0 %v285
      %985 = vmatprep.subr.mxu0 0.0
      %986 = vmatpush1.msra.mxu0 %v286
      %987 = vmatprep.subr.mxu0 0.0
      %988 = vmatpush1.msra.mxu0 %v287
      %989 = vmatprep.subr.mxu0 0.0
      %990 = vmatpush1.msra.mxu0 0.0
      %991 = vmatprep.subr.mxu0 0.0
      %992 = vmatpush1.msra.mxu0 0.0
      %993 = vmatprep.subr.mxu0 0.0
      %994 = vmatpush1.msra.mxu0 0.0
      %995 = vmatprep.subr.mxu0 0.0
      %996 = vmatpush1.msra.mxu0 0.0
      %997 = vmatprep.subr.mxu0 0.0
      %998 = vmatpush1.msra.mxu0 0.0
      %999 = vmatprep.subr.mxu0 0.0
      %1000 = vmatpush1.msra.mxu0 0.0
      %1001 = vmatprep.subr.mxu0 0.0
      %1002 = vmatpush1.msra.mxu0 0.0
      %1003 = vmatprep.subr.mxu0 0.0
      %1004 = vmatpush1.msra.mxu0 0.0
      %1005 = vmatprep.subr.mxu0 0.0
      %1006 = vmatpush1.msra.mxu0 0.0
      %1007 = vmatprep.subr.mxu0 0.0
      %1008 = vmatpush1.msra.mxu0 0.0
      %1009 = vmatprep.subr.mxu0 0.0
      %1010 = vmatpush1.msra.mxu0 0.0
      %1011 = vmatprep.subr.mxu0 0.0
      %1012 = vmatpush1.msra.mxu0 0.0
      %1013 = vmatprep.subr.mxu0 0.0
      %1014 = vmatpush1.msra.mxu0 0.0
      %1015 = vmatprep.subr.mxu0 0.0
      %1016 = vmatpush1.msra.mxu0 0.0
      %1017 = vmatprep.subr.mxu0 0.0
      %1018 = vmatpush1.msra.mxu0 0.0
      %1019 = vmatprep.subr.mxu0 0.0
      %1020 = vmatpush1.msra.mxu0 0.0
      %1021 = vmatprep.subr.mxu0 0.0
      %1022 = vmatpush1.msra.mxu0 0.0
      %1023 = vmatprep.subr.mxu0 0.0
      %1024 = vmatpush1.msra.mxu0 0.0
      %1025 = vmatprep.subr.mxu0 0.0
      %1026 = vmatpush1.msra.mxu0 0.0
      %1027 = vmatprep.subr.mxu0 0.0
      %1028 = vmatpush1.msra.mxu0 0.0
      %1029 = vmatprep.subr.mxu0 0.0
      %1030 = vmatpush1.msra.mxu0 0.0
      %1031 = vmatprep.subr.mxu0 0.0
      %1032 = vmatpush1.msra.mxu0 0.0
      %1033 = vmatprep.subr.mxu0 0.0
      %1034 = vmatpush1.msra.mxu0 0.0
      %1035 = vmatprep.subr.mxu0 0.0
      %1036 = vmatpush1.msra.mxu0 0.0
      %1037 = vmatprep.subr.mxu0 0.0
      %1038 = vmatpush1.msra.mxu0 0.0
      %1039 = vmatprep.subr.mxu0 0.0
      %1040 = vmatpush1.msra.mxu0 0.0
      %1041 = vmatprep.subr.mxu0 0.0
      %1042 = vmatpush1.msra.mxu0 0.0
      %1043 = vmatprep.mubr.f32.mxu0 0.0
      %1044 = vmatmul.mubr.f32.gmra.mrb[0].mxu0 %v977
      %v1045 = vpop.f32.mrb[0].mxu0
      %v1046 = vadd.f32 0.0, %v1045
      %v1047 = vpop.f32.mrb[0].mxu0
      %1048 = vdwg.mxu0
      %v1050 = vsel %vm318, %v232, 0
      %1052 = vmatprep.subr.mxu0 0.0
      %1053 = vmatpush1.msra.mxu0 %v288
      %1054 = vmatprep.subr.mxu0 0.0
      %1055 = vmatpush1.msra.mxu0 %v289
      %1056 = vmatprep.subr.mxu0 0.0
      %1057 = vmatpush1.msra.mxu0 %v290
      %1058 = vmatprep.subr.mxu0 0.0
      %1059 = vmatpush1.msra.mxu0 %v291
      %1060 = vmatprep.subr.mxu0 0.0
      %1061 = vmatpush1.msra.mxu0 %v292
      %1062 = vmatprep.subr.mxu0 0.0
      %1063 = vmatpush1.msra.mxu0 0.0
      %1064 = vmatprep.subr.mxu0 0.0
      %1065 = vmatpush1.msra.mxu0 0.0
      %1066 = vmatprep.subr.mxu0 0.0
      %1067 = vmatpush1.msra.mxu0 0.0
      %1068 = vmatprep.subr.mxu0 0.0
      %1069 = vmatpush1.msra.mxu0 0.0
      %1070 = vmatprep.subr.mxu0 0.0
      %1071 = vmatpush1.msra.mxu0 0.0
      %1072 = vmatprep.subr.mxu0 0.0
      %1073 = vmatpush1.msra.mxu0 0.0
      %1074 = vmatprep.subr.mxu0 0.0
      %1075 = vmatpush1.msra.mxu0 0.0
      %1076 = vmatprep.subr.mxu0 0.0
      %1077 = vmatpush1.msra.mxu0 0.0
      %1078 = vmatprep.subr.mxu0 0.0
      %1079 = vmatpush1.msra.mxu0 0.0
      %1080 = vmatprep.subr.mxu0 0.0
      %1081 = vmatpush1.msra.mxu0 0.0
      %1082 = vmatprep.subr.mxu0 0.0
      %1083 = vmatpush1.msra.mxu0 0.0
      %1084 = vmatprep.subr.mxu0 0.0
      %1085 = vmatpush1.msra.mxu0 0.0
      %1086 = vmatprep.subr.mxu0 0.0
      %1087 = vmatpush1.msra.mxu0 0.0
      %1088 = vmatprep.subr.mxu0 0.0
      %1089 = vmatpush1.msra.mxu0 0.0
      %1090 = vmatprep.subr.mxu0 0.0
      %1091 = vmatpush1.msra.mxu0 0.0
      %1092 = vmatprep.subr.mxu0 0.0
      %1093 = vmatpush1.msra.mxu0 0.0
      %1094 = vmatprep.subr.mxu0 0.0
      %1095 = vmatpush1.msra.mxu0 0.0
      %1096 = vmatprep.subr.mxu0 0.0
      %1097 = vmatpush1.msra.mxu0 0.0
      %1098 = vmatprep.subr.mxu0 0.0
      %1099 = vmatpush1.msra.mxu0 0.0
      %1100 = vmatprep.subr.mxu0 0.0
      %1101 = vmatpush1.msra.mxu0 0.0
      %1102 = vmatprep.subr.mxu0 0.0
      %1103 = vmatpush1.msra.mxu0 0.0
      %1104 = vmatprep.subr.mxu0 0.0
      %1105 = vmatpush1.msra.mxu0 0.0
      %1106 = vmatprep.subr.mxu0 0.0
      %1107 = vmatpush1.msra.mxu0 0.0
      %1108 = vmatprep.subr.mxu0 0.0
      %1109 = vmatpush1.msra.mxu0 0.0
      %1110 = vmatprep.subr.mxu0 0.0
      %1111 = vmatpush1.msra.mxu0 0.0
      %1112 = vmatprep.subr.mxu0 0.0
      %1113 = vmatpush1.msra.mxu0 0.0
      %1114 = vmatprep.subr.mxu0 0.0
      %1115 = vmatpush1.msra.mxu0 0.0
      %1116 = vmatprep.mubr.f32.mxu0 0.0
      %1117 = vmatmul.mubr.f32.gmra.mrb[0].mxu0 %v1050
      %v1118 = vpop.f32.mrb[0].mxu0
      %v1119 = vadd.f32 0.0, %v1118
      %v1120 = vpop.f32.mrb[0].mxu0
      %1121 = vdwg.mxu0
      %v1123 = vsel %vm318, %v233, 0
      %1125 = vmatprep.subr.mxu0 0.0
      %1126 = vmatpush1.msra.mxu0 %v293
      %1127 = vmatprep.subr.mxu0 0.0
      %1128 = vmatpush1.msra.mxu0 %v294
      %1129 = vmatprep.subr.mxu0 0.0
      %1130 = vmatpush1.msra.mxu0 %v295
      %1131 = vmatprep.subr.mxu0 0.0
      %1132 = vmatpush1.msra.mxu0 %v296
      %1133 = vmatprep.subr.mxu0 0.0
      %1134 = vmatpush1.msra.mxu0 %v297
      %1135 = vmatprep.subr.mxu0 0.0
      %1136 = vmatpush1.msra.mxu0 0.0
      %1137 = vmatprep.subr.mxu0 0.0
      %1138 = vmatpush1.msra.mxu0 0.0
      %1139 = vmatprep.subr.mxu0 0.0
      %1140 = vmatpush1.msra.mxu0 0.0
      %1141 = vmatprep.subr.mxu0 0.0
      %1142 = vmatpush1.msra.mxu0 0.0
      %1143 = vmatprep.subr.mxu0 0.0
      %1144 = vmatpush1.msra.mxu0 0.0
      %1145 = vmatprep.subr.mxu0 0.0
      %1146 = vmatpush1.msra.mxu0 0.0
      %1147 = vmatprep.subr.mxu0 0.0
      %1148 = vmatpush1.msra.mxu0 0.0
      %1149 = vmatprep.subr.mxu0 0.0
      %1150 = vmatpush1.msra.mxu0 0.0
      %1151 = vmatprep.subr.mxu0 0.0
      %1152 = vmatpush1.msra.mxu0 0.0
      %1153 = vmatprep.subr.mxu0 0.0
      %1154 = vmatpush1.msra.mxu0 0.0
      %1155 = vmatprep.subr.mxu0 0.0
      %1156 = vmatpush1.msra.mxu0 0.0
      %1157 = vmatprep.subr.mxu0 0.0
      %1158 = vmatpush1.msra.mxu0 0.0
      %1159 = vmatprep.subr.mxu0 0.0
      %1160 = vmatpush1.msra.mxu0 0.0
      %1161 = vmatprep.subr.mxu0 0.0
      %1162 = vmatpush1.msra.mxu0 0.0
      %1163 = vmatprep.subr.mxu0 0.0
      %1164 = vmatpush1.msra.mxu0 0.0
      %1165 = vmatprep.subr.mxu0 0.0
      %1166 = vmatpush1.msra.mxu0 0.0
      %1167 = vmatprep.subr.mxu0 0.0
      %1168 = vmatpush1.msra.mxu0 0.0
      %1169 = vmatprep.subr.mxu0 0.0
      %1170 = vmatpush1.msra.mxu0 0.0
      %1171 = vmatprep.subr.mxu0 0.0
      %1172 = vmatpush1.msra.mxu0 0.0
      %1173 = vmatprep.subr.mxu0 0.0
      %1174 = vmatpush1.msra.mxu0 0.0
      %1175 = vmatprep.subr.mxu0 0.0
      %1176 = vmatpush1.msra.mxu0 0.0
      %1177 = vmatprep.subr.mxu0 0.0
      %1178 = vmatpush1.msra.mxu0 0.0
      %1179 = vmatprep.subr.mxu0 0.0
      %1180 = vmatpush1.msra.mxu0 0.0
      %1181 = vmatprep.subr.mxu0 0.0
      %1182 = vmatpush1.msra.mxu0 0.0
      %1183 = vmatprep.subr.mxu0 0.0
      %1184 = vmatpush1.msra.mxu0 0.0
      %1185 = vmatprep.subr.mxu0 0.0
      %1186 = vmatpush1.msra.mxu0 0.0
      %1187 = vmatprep.subr.mxu0 0.0
      %1188 = vmatpush1.msra.mxu0 0.0
      %1189 = vmatprep.mubr.f32.mxu0 0.0
      %1190 = vmatmul.mubr.f32.gmra.mrb[0].mxu0 %v1123
      %v1191 = vpop.f32.mrb[0].mxu0
      %v1192 = vadd.f32 0.0, %v1191
      %v1193 = vpop.f32.mrb[0].mxu0
      %1194 = vdwg.mxu0
      %v1196 = vsel %vm318, %v234, 0
      %1198 = vmatprep.subr.mxu0 0.0
      %1199 = vmatpush1.msra.mxu0 %v298
      %1200 = vmatprep.subr.mxu0 0.0
      %1201 = vmatpush1.msra.mxu0 %v299
      %1202 = vmatprep.subr.mxu0 0.0
      %1203 = vmatpush1.msra.mxu0 %v300
      %1204 = vmatprep.subr.mxu0 0.0
      %1205 = vmatpush1.msra.mxu0 %v301
      %1206 = vmatprep.subr.mxu0 0.0
      %1207 = vmatpush1.msra.mxu0 %v302
      %1208 = vmatprep.subr.mxu0 0.0
      %1209 = vmatpush1.msra.mxu0 0.0
      %1210 = vmatprep.subr.mxu0 0.0
      %1211 = vmatpush1.msra.mxu0 0.0
      %1212 = vmatprep.subr.mxu0 0.0
      %1213 = vmatpush1.msra.mxu0 0.0
      %1214 = vmatprep.subr.mxu0 0.0
      %1215 = vmatpush1.msra.mxu0 0.0
      %1216 = vmatprep.subr.mxu0 0.0
      %1217 = vmatpush1.msra.mxu0 0.0
      %1218 = vmatprep.subr.mxu0 0.0
      %1219 = vmatpush1.msra.mxu0 0.0
      %1220 = vmatprep.subr.mxu0 0.0
      %1221 = vmatpush1.msra.mxu0 0.0
      %1222 = vmatprep.subr.mxu0 0.0
      %1223 = vmatpush1.msra.mxu0 0.0
      %1224 = vmatprep.subr.mxu0 0.0
      %1225 = vmatpush1.msra.mxu0 0.0
      %1226 = vmatprep.subr.mxu0 0.0
      %1227 = vmatpush1.msra.mxu0 0.0
      %1228 = vmatprep.subr.mxu0 0.0
      %1229 = vmatpush1.msra.mxu0 0.0
      %1230 = vmatprep.subr.mxu0 0.0
      %1231 = vmatpush1.msra.mxu0 0.0
      %1232 = vmatprep.subr.mxu0 0.0
      %1233 = vmatpush1.msra.mxu0 0.0
      %1234 = vmatprep.subr.mxu0 0.0
      %1235 = vmatpush1.msra.mxu0 0.0
      %1236 = vmatprep.subr.mxu0 0.0
      %1237 = vmatpush1.msra.mxu0 0.0
      %1238 = vmatprep.subr.mxu0 0.0
      %1239 = vmatpush1.msra.mxu0 0.0
      %1240 = vmatprep.subr.mxu0 0.0
      %1241 = vmatpush1.msra.mxu0 0.0
      %1242 = vmatprep.subr.mxu0 0.0
      %1243 = vmatpush1.msra.mxu0 0.0
      %1244 = vmatprep.subr.mxu0 0.0
      %1245 = vmatpush1.msra.mxu0 0.0
      %1246 = vmatprep.subr.mxu0 0.0
      %1247 = vmatpush1.msra.mxu0 0.0
      %1248 = vmatprep.subr.mxu0 0.0
      %1249 = vmatpush1.msra.mxu0 0.0
      %1250 = vmatprep.subr.mxu0 0.0
      %1251 = vmatpush1.msra.mxu0 0.0
      %1252 = vmatprep.subr.mxu0 0.0
      %1253 = vmatpush1.msra.mxu0 0.0
      %1254 = vmatprep.subr.mxu0 0.0
      %1255 = vmatpush1.msra.mxu0 0.0
      %1256 = vmatprep.subr.mxu0 0.0
      %1257 = vmatpush1.msra.mxu0 0.0
      %1258 = vmatprep.subr.mxu0 0.0
      %1259 = vmatpush1.msra.mxu0 0.0
      %1260 = vmatprep.subr.mxu0 0.0
      %1261 = vmatpush1.msra.mxu0 0.0
      %1262 = vmatprep.mubr.f32.mxu0 0.0
      %1263 = vmatmul.mubr.f32.gmra.mrb[0].mxu0 %v1196
      %v1264 = vpop.f32.mrb[0].mxu0
      %v1265 = vadd.f32 0.0, %v1264
      %v1266 = vpop.f32.mrb[0].mxu0
      %1267 = vdwg.mxu0
      %v1269 = vsel %vm318, %v235, 0
      %1271 = vmatprep.subr.mxu0 0.0
      %1272 = vmatpush1.msra.mxu0 %v303
      %1273 = vmatprep.subr.mxu0 0.0
      %1274 = vmatpush1.msra.mxu0 %v304
      %1275 = vmatprep.subr.mxu0 0.0
      %1276 = vmatpush1.msra.mxu0 %v305
      %1277 = vmatprep.subr.mxu0 0.0
      %1278 = vmatpush1.msra.mxu0 %v306
      %1279 = vmatprep.subr.mxu0 0.0
      %1280 = vmatpush1.msra.mxu0 %v307
      %1281 = vmatprep.subr.mxu0 0.0
      %1282 = vmatpush1.msra.mxu0 0.0
      %1283 = vmatprep.subr.mxu0 0.0
      %1284 = vmatpush1.msra.mxu0 0.0
      %1285 = vmatprep.subr.mxu0 0.0
      %1286 = vmatpush1.msra.mxu0 0.0
      %1287 = vmatprep.subr.mxu0 0.0
      %1288 = vmatpush1.msra.mxu0 0.0
      %1289 = vmatprep.subr.mxu0 0.0
      %1290 = vmatpush1.msra.mxu0 0.0
      %1291 = vmatprep.subr.mxu0 0.0
      %1292 = vmatpush1.msra.mxu0 0.0
      %1293 = vmatprep.subr.mxu0 0.0
      %1294 = vmatpush1.msra.mxu0 0.0
      %1295 = vmatprep.subr.mxu0 0.0
      %1296 = vmatpush1.msra.mxu0 0.0
      %1297 = vmatprep.subr.mxu0 0.0
      %1298 = vmatpush1.msra.mxu0 0.0
      %1299 = vmatprep.subr.mxu0 0.0
      %1300 = vmatpush1.msra.mxu0 0.0
      %1301 = vmatprep.subr.mxu0 0.0
      %1302 = vmatpush1.msra.mxu0 0.0
      %1303 = vmatprep.subr.mxu0 0.0
      %1304 = vmatpush1.msra.mxu0 0.0
      %1305 = vmatprep.subr.mxu0 0.0
      %1306 = vmatpush1.msra.mxu0 0.0
      %1307 = vmatprep.subr.mxu0 0.0
      %1308 = vmatpush1.msra.mxu0 0.0
      %1309 = vmatprep.subr.mxu0 0.0
      %1310 = vmatpush1.msra.mxu0 0.0
      %1311 = vmatprep.subr.mxu0 0.0
      %1312 = vmatpush1.msra.mxu0 0.0
      %1313 = vmatprep.subr.mxu0 0.0
      %1314 = vmatpush1.msra.mxu0 0.0
      %1315 = vmatprep.subr.mxu0 0.0
      %1316 = vmatpush1.msra.mxu0 0.0
      %1317 = vmatprep.subr.mxu0 0.0
      %1318 = vmatpush1.msra.mxu0 0.0
      %1319 = vmatprep.subr.mxu0 0.0
      %1320 = vmatpush1.msra.mxu0 0.0
      %1321 = vmatprep.subr.mxu0 0.0
      %1322 = vmatpush1.msra.mxu0 0.0
      %1323 = vmatprep.subr.mxu0 0.0
      %1324 = vmatpush1.msra.mxu0 0.0
      %1325 = vmatprep.subr.mxu0 0.0
      %1326 = vmatpush1.msra.mxu0 0.0
      %1327 = vmatprep.subr.mxu0 0.0
      %1328 = vmatpush1.msra.mxu0 0.0
      %1329 = vmatprep.subr.mxu0 0.0
      %1330 = vmatpush1.msra.mxu0 0.0
      %1331 = vmatprep.subr.mxu0 0.0
      %1332 = vmatpush1.msra.mxu0 0.0
      %1333 = vmatprep.subr.mxu0 0.0
      %1334 = vmatpush1.msra.mxu0 0.0
      %1335 = vmatprep.mubr.f32.mxu0 0.0
      %1336 = vmatmul.mubr.f32.gmra.mrb[0].mxu0 %v1269
      %v1337 = vpop.f32.mrb[0].mxu0
      %v1338 = vadd.f32 0.0, %v1337
      %v1339 = vpop.f32.mrb[0].mxu0
      %1340 = vdwg.mxu0
      %v1342 = vsel %vm318, %v236, 0
      %1344 = vmatprep.subr.mxu0 0.0
      %1345 = vmatpush1.msra.mxu0 %v308
      %1346 = vmatprep.subr.mxu0 0.0
      %1347 = vmatpush1.msra.mxu0 %v309
      %1348 = vmatprep.subr.mxu0 0.0
      %1349 = vmatpush1.msra.mxu0 %v310
      %1350 = vmatprep.subr.mxu0 0.0
      %1351 = vmatpush1.msra.mxu0 %v311
      %1352 = vmatprep.subr.mxu0 0.0
      %1353 = vmatpush1.msra.mxu0 %v312
      %1354 = vmatprep.subr.mxu0 0.0
      %1355 = vmatpush1.msra.mxu0 0.0
      %1356 = vmatprep.subr.mxu0 0.0
      %1357 = vmatpush1.msra.mxu0 0.0
      %1358 = vmatprep.subr.mxu0 0.0
      %1359 = vmatpush1.msra.mxu0 0.0
      %1360 = vmatprep.subr.mxu0 0.0
      %1361 = vmatpush1.msra.mxu0 0.0
      %1362 = vmatprep.subr.mxu0 0.0
      %1363 = vmatpush1.msra.mxu0 0.0
      %1364 = vmatprep.subr.mxu0 0.0
      %1365 = vmatpush1.msra.mxu0 0.0
      %1366 = vmatprep.subr.mxu0 0.0
      %1367 = vmatpush1.msra.mxu0 0.0
      %1368 = vmatprep.subr.mxu0 0.0
      %1369 = vmatpush1.msra.mxu0 0.0
      %1370 = vmatprep.subr.mxu0 0.0
      %1371 = vmatpush1.msra.mxu0 0.0
      %1372 = vmatprep.subr.mxu0 0.0
      %1373 = vmatpush1.msra.mxu0 0.0
      %1374 = vmatprep.subr.mxu0 0.0
      %1375 = vmatpush1.msra.mxu0 0.0
      %1376 = vmatprep.subr.mxu0 0.0
      %1377 = vmatpush1.msra.mxu0 0.0
      %1378 = vmatprep.subr.mxu0 0.0
      %1379 = vmatpush1.msra.mxu0 0.0
      %1380 = vmatprep.subr.mxu0 0.0
      %1381 = vmatpush1.msra.mxu0 0.0
      %1382 = vmatprep.subr.mxu0 0.0
      %1383 = vmatpush1.msra.mxu0 0.0
      %1384 = vmatprep.subr.mxu0 0.0
      %1385 = vmatpush1.msra.mxu0 0.0
      %1386 = vmatprep.subr.mxu0 0.0
      %1387 = vmatpush1.msra.mxu0 0.0
      %1388 = vmatprep.subr.mxu0 0.0
      %1389 = vmatpush1.msra.mxu0 0.0
      %1390 = vmatprep.subr.mxu0 0.0
      %1391 = vmatpush1.msra.mxu0 0.0
      %1392 = vmatprep.subr.mxu0 0.0
      %1393 = vmatpush1.msra.mxu0 0.0
      %1394 = vmatprep.subr.mxu0 0.0
      %1395 = vmatpush1.msra.mxu0 0.0
      %1396 = vmatprep.subr.mxu0 0.0
      %1397 = vmatpush1.msra.mxu0 0.0
      %1398 = vmatprep.subr.mxu0 0.0
      %1399 = vmatpush1.msra.mxu0 0.0
      %1400 = vmatprep.subr.mxu0 0.0
      %1401 = vmatpush1.msra.mxu0 0.0
      %1402 = vmatprep.subr.mxu0 0.0
      %1403 = vmatpush1.msra.mxu0 0.0
      %1404 = vmatprep.subr.mxu0 0.0
      %1405 = vmatpush1.msra.mxu0 0.0
      %1406 = vmatprep.subr.mxu0 0.0
      %1407 = vmatpush1.msra.mxu0 0.0
      %1408 = vmatprep.mubr.f32.mxu0 0.0
      %1409 = vmatmul.mubr.f32.gmra.mrb[0].mxu0 %v1342
      %v1410 = vpop.f32.mrb[0].mxu0
      %v1411 = vadd.f32 0.0, %v1410
      %v1412 = vpop.f32.mrb[0].mxu0
      %1413 = vdwg.mxu0
      %v1415 = vsel %vm318, %v237, 0
      %1417 = vmatprep.subr.mxu0 0.0
      %1418 = vmatpush1.msra.mxu0 %v313
      %1419 = vmatprep.subr.mxu0 0.0
      %1420 = vmatpush1.msra.mxu0 %v314
      %1421 = vmatprep.subr.mxu0 0.0
      %1422 = vmatpush1.msra.mxu0 %v315
      %1423 = vmatprep.subr.mxu0 0.0
      %1424 = vmatpush1.msra.mxu0 %v316
      %1425 = vmatprep.subr.mxu0 0.0
      %1426 = vmatpush1.msra.mxu0 %v317
      %1427 = vmatprep.subr.mxu0 0.0
      %1428 = vmatpush1.msra.mxu0 0.0
      %1429 = vmatprep.subr.mxu0 0.0
      %1430 = vmatpush1.msra.mxu0 0.0
      %1431 = vmatprep.subr.mxu0 0.0
      %1432 = vmatpush1.msra.mxu0 0.0
      %1433 = vmatprep.subr.mxu0 0.0
      %1434 = vmatpush1.msra.mxu0 0.0
      %1435 = vmatprep.subr.mxu0 0.0
      %1436 = vmatpush1.msra.mxu0 0.0
      %1437 = vmatprep.subr.mxu0 0.0
      %1438 = vmatpush1.msra.mxu0 0.0
      %1439 = vmatprep.subr.mxu0 0.0
      %1440 = vmatpush1.msra.mxu0 0.0
      %1441 = vmatprep.subr.mxu0 0.0
      %1442 = vmatpush1.msra.mxu0 0.0
      %1443 = vmatprep.subr.mxu0 0.0
      %1444 = vmatpush1.msra.mxu0 0.0
      %1445 = vmatprep.subr.mxu0 0.0
      %1446 = vmatpush1.msra.mxu0 0.0
      %1447 = vmatprep.subr.mxu0 0.0
      %1448 = vmatpush1.msra.mxu0 0.0
      %1449 = vmatprep.subr.mxu0 0.0
      %1450 = vmatpush1.msra.mxu0 0.0
      %1451 = vmatprep.subr.mxu0 0.0
      %1452 = vmatpush1.msra.mxu0 0.0
      %1453 = vmatprep.subr.mxu0 0.0
      %1454 = vmatpush1.msra.mxu0 0.0
      %1455 = vmatprep.subr.mxu0 0.0
      %1456 = vmatpush1.msra.mxu0 0.0
      %1457 = vmatprep.subr.mxu0 0.0
      %1458 = vmatpush1.msra.mxu0 0.0
      %1459 = vmatprep.subr.mxu0 0.0
      %1460 = vmatpush1.msra.mxu0 0.0
      %1461 = vmatprep.subr.mxu0 0.0
      %1462 = vmatpush1.msra.mxu0 0.0
      %1463 = vmatprep.subr.mxu0 0.0
      %1464 = vmatpush1.msra.mxu0 0.0
      %1465 = vmatprep.subr.mxu0 0.0
      %1466 = vmatpush1.msra.mxu0 0.0
      %1467 = vmatprep.subr.mxu0 0.0
      %1468 = vmatpush1.msra.mxu0 0.0
      %1469 = vmatprep.subr.mxu0 0.0
      %1470 = vmatpush1.msra.mxu0 0.0
      %1471 = vmatprep.subr.mxu0 0.0
      %1472 = vmatpush1.msra.mxu0 0.0
      %1473 = vmatprep.subr.mxu0 0.0
      %1474 = vmatpush1.msra.mxu0 0.0
      %1475 = vmatprep.subr.mxu0 0.0
      %1476 = vmatpush1.msra.mxu0 0.0
      %1477 = vmatprep.subr.mxu0 0.0
      %1478 = vmatpush1.msra.mxu0 0.0
      %1479 = vmatprep.subr.mxu0 0.0
      %1480 = vmatpush1.msra.mxu0 0.0
      %1481 = vmatprep.mubr.f32.mxu0 0.0
      %1482 = vmatmul.mubr.f32.gmra.mrb[0].mxu0 %v1415
      %v1483 = vpop.f32.mrb[0].mxu0
      %v1484 = vadd.f32 0.0, %v1483
      %v1485 = vpop.f32.mrb[0].mxu0
      %1486 = vdwg.mxu0
      %vm1487 = vcmask 648192
      %1488 = vst.msk [vmem:[%s220] sm:$0x3] %vm1487, %v389
      %1489 = vst.msk [vmem:[%s220 + $0x2] sm:$0x3] %vm1487, %v462
      %1490 = vst.msk [vmem:[%s220 + $0x4] sm:$0x3] %vm1487, %v535
      %1491 = vst.msk [vmem:[%s220 + $0x6] sm:$0x3] %vm1487, %v608
      %1492 = vst.msk [vmem:[%s220 + $0x8] sm:$0x3] %vm1487, %v681
      %1493 = vst.msk [vmem:[%s220 + $0xa] sm:$0x3] %vm1487, %v754
      %1494 = vst.msk [vmem:[%s220 + $0xc] sm:$0x3] %vm1487, %v827
      %1495 = vst.msk [vmem:[%s220 + $0xe] sm:$0x3] %vm1487, %v900
      %1496 = vst.msk [vmem:[%s220 + $0x10] sm:$0x3] %vm1487, %v973
      %1497 = vst.msk [vmem:[%s220 + $0x12] sm:$0x3] %vm1487, %v1046
      %1498 = vst.msk [vmem:[%s220 + $0x14] sm:$0x3] %vm1487, %v1119
      %1499 = vst.msk [vmem:[%s220 + $0x16] sm:$0x3] %vm1487, %v1192
      %1500 = vst.msk [vmem:[%s220 + $0x18] sm:$0x3] %vm1487, %v1265
      %1501 = vst.msk [vmem:[%s220 + $0x1a] sm:$0x3] %vm1487, %v1338
      %1502 = vst.msk [vmem:[%s220 + $0x1c] sm:$0x3] %vm1487, %v1411
      %1503 = vst.msk [vmem:[%s220 + $0x1e] sm:$0x3] %vm1487, %v1484
      %s1504 = smul.u32 16, %s17
      %p1505 = scmp.lt.s32.totalorder %s18, 1
      %s1506 = scalar_select %p1505, %s18, 1
      %p1507 = scmp.lt.s32.totalorder %s1504, 15
      %s1508 = scalar_select %p1507, %s1504, 15
      %s1509 = smul.addr %s1506, 16
      %s1510 = sadd.s32 %s1508, %s1509
      %s1511 = smul.addr %s1510, 2
      %s1512 = scalar_lea.vmem %s2, %s1511
      // Predicated region
      $region29: #{simple_block3d_forward.10} parent=27 // pred_check
        %p1513 = pneg %p101
      $region30: #{simple_block3d_forward.10} parent=27 // pred_check_branch
        %1515 = sbr.rel (%p1513) target = $region32
      $region31: #{simple_block3d_forward.10} parent=27 // pred_region
        %s1516 = smul.u32 16, %s17
      $region32: #{simple_block3d_forward.10} parent=27 // pred_fallthru
        _
    $region28: #{simple_block3d_forward.10} parent=5 // pred_fallthru
      _
    %p1517 = scmp.le.s32.totalorder 2, %s8
    // Predicated region
    $region33: #{simple_block3d_forward.10} parent=5 // pred_check
      %p1518 = pneg %p1517
    $region34: #{simple_block3d_forward.10} parent=5 // pred_check_branch
      %1520 = sbr.rel (%p1518) target = $region36
    $region35: #{simple_block3d_forward.10} parent=5 // pred_region
      %s1521 = ssub.s32 %s8, 2
      // Predicated region
      $region37: #{simple_block3d_forward.10} parent=35 // pred_check
        %p1522 = pneg %p107
      $region38: #{simple_block3d_forward.10} parent=35 // pred_check_branch
        %1524 = sbr.rel (%p1522) target = $region40
      $region39: #{simple_block3d_forward.10} parent=35 // pred_region
        %s1525 = smul.u32 16, %s19
        %p1526 = scmp.lt.s32.totalorder %s20, 1
        %s1527 = scalar_select %p1526, %s20, 1
        %p1528 = scmp.lt.s32.totalorder %s1525, 15
        %s1529 = scalar_select %p1528, %s1525, 15
        %s1530 = smul.addr %s1527, 16
        %s1531 = sadd.s32 %s1529, %s1530
        %s1532 = smul.addr %s1531, 2
        %s1533 = scalar_lea.vmem %s2, %s1532
      $region40: #{simple_block3d_forward.10} parent=35 // pred_fallthru
        _
    $region36: #{simple_block3d_forward.10} parent=5 // pred_fallthru
      _
  $region6: #{simple_block3d_forward.10} parent=0 // loop_footer
    %s12 = sadd.s32 1, %s8
  $region7: #{simple_block3d_forward.10} parent=0 // loop_footer_branch
    %7 = sbr.rel target = $region3
  $region8: #{simple_block3d_forward.10} parent=0 // loop_exit
    _

// kernel: reverse.8
$region0: #{reverse.8}
  #allocation0 [shape = 's32[1]{0}', space=sflag, size = 0x4, scoped, tag = 'scoped memory for reverse.8']
  %s0 = inlined_call_operand.vmem [shape: f32[2,20,16,7], index: 0, kind: input, shape index: {}]
  %s1 = inlined_call_operand.vmem [shape: f32[2,20,16,7], index: 1, kind: output, shape index: {}]
  %s2 = scalar_lea.vmem %s0, 96
  %v3 = vld [vmem:[%s2] sm:$0xff]
  %4 = vst [vmem:[%s1] sm:$0xff] %v3
  %s5 = scalar_lea.vmem %s0, 208
  %v6 = vld [vmem:[%s5] sm:$0xff]
  %s7 = scalar_lea.vmem %s1, 112
  %8 = vst [vmem:[%s7] sm:$0xff] %v6
  %s9 = scalar_lea.vmem %s0, 80
  %v10 = vld [vmem:[%s9] sm:$0xff]
  %s11 = scalar_lea.vmem %s1, 16
  %12 = vst [vmem:[%s11] sm:$0xff] %v10
  %s13 = scalar_lea.vmem %s0, 192
  %v14 = vld [vmem:[%s13] sm:$0xff]
  %s15 = scalar_lea.vmem %s1, 128
  %16 = vst [vmem:[%s15] sm:$0xff] %v14
  %s17 = scalar_lea.vmem %s0, 64
  %v18 = vld [vmem:[%s17] sm:$0xff]
  %s19 = scalar_lea.vmem %s1, 32
  %20 = vst [vmem:[%s19] sm:$0xff] %v18
  %s21 = scalar_lea.vmem %s0, 176
  %v22 = vld [vmem:[%s21] sm:$0xff]
  %s23 = scalar_lea.vmem %s1, 144
  %24 = vst [vmem:[%s23] sm:$0xff] %v22
  %s25 = scalar_lea.vmem %s0, 48
  %v26 = vld [vmem:[%s25] sm:$0xff]
  %s27 = scalar_lea.vmem %s1, 48
  %28 = vst [vmem:[%s27] sm:$0xff] %v26
  %s29 = scalar_lea.vmem %s0, 160
  %v30 = vld [vmem:[%s29] sm:$0xff]
  %s31 = scalar_lea.vmem %s1, 160
  %32 = vst [vmem:[%s31] sm:$0xff] %v30
  %s33 = scalar_lea.vmem %s0, 32
  %v34 = vld [vmem:[%s33] sm:$0xff]
  %s35 = scalar_lea.vmem %s1, 64
  %36 = vst [vmem:[%s35] sm:$0xff] %v34
  %s37 = scalar_lea.vmem %s0, 144
  %v38 = vld [vmem:[%s37] sm:$0xff]
  %s39 = scalar_lea.vmem %s1, 176
  %40 = vst [vmem:[%s39] sm:$0xff] %v38
  %s41 = scalar_lea.vmem %s0, 16
  %v42 = vld [vmem:[%s41] sm:$0xff]
  %s43 = scalar_lea.vmem %s1, 80
  %44 = vst [vmem:[%s43] sm:$0xff] %v42
  %s45 = scalar_lea.vmem %s0, 128
  %v46 = vld [vmem:[%s45] sm:$0xff]
  %s47 = scalar_lea.vmem %s1, 192
  %48 = vst [vmem:[%s47] sm:$0xff] %v46
  %v49 = vld [vmem:[%s0] sm:$0xff]
  %s50 = scalar_lea.vmem %s1, 96
  %51 = vst [vmem:[%s50] sm:$0xff] %v49
  %s52 = scalar_lea.vmem %s0, 112
  %v53 = vld [vmem:[%s52] sm:$0xff]
  %s54 = scalar_lea.vmem %s1, 208
  %55 = vst [vmem:[%s54] sm:$0xff] %v53
  %s56 = scalar_lea.vmem %s0, 104
  %v57 = vld [vmem:[%s56] sm:$0xff]
  %s58 = scalar_lea.vmem %s1, 8
  %59 = vst [vmem:[%s58] sm:$0xff] %v57
  %s60 = scalar_lea.vmem %s0, 216
  %v61 = vld [vmem:[%s60] sm:$0xff]
  %s62 = scalar_lea.vmem %s1, 120
  %63 = vst [vmem:[%s62] sm:$0xff] %v61
  %s64 = scalar_lea.vmem %s0, 88
  %v65 = vld [vmem:[%s64] sm:$0xff]
  %s66 = scalar_lea.vmem %s1, 24
  %67 = vst [vmem:[%s66] sm:$0xff] %v65
  %s68 = scalar_lea.vmem %s0, 200
  %v69 = vld [vmem:[%s68] sm:$0xff]
  %s70 = scalar_lea.vmem %s1, 136
  %71 = vst [vmem:[%s70] sm:$0xff] %v69
  %s72 = scalar_lea.vmem %s0, 72
  %v73 = vld [vmem:[%s72] sm:$0xff]
  %s74 = scalar_lea.vmem %s1, 40
  %75 = vst [vmem:[%s74] sm:$0xff] %v73
  %s76 = scalar_lea.vmem %s0, 184
  %v77 = vld [vmem:[%s76] sm:$0xff]
  %s78 = scalar_lea.vmem %s1, 152
  %79 = vst [vmem:[%s78] sm:$0xff] %v77
  %s80 = scalar_lea.vmem %s0, 56
  %v81 = vld [vmem:[%s80] sm:$0xff]
  %s82 = scalar_lea.vmem %s1, 56
  %83 = vst [vmem:[%s82] sm:$0xff] %v81
  %s84 = scalar_lea.vmem %s0, 168
  %v85 = vld [vmem:[%s84] sm:$0xff]
  %s86 = scalar_lea.vmem %s1, 168
  %87 = vst [vmem:[%s86] sm:$0xff] %v85
  %s88 = scalar_lea.vmem %s0, 40
  %v89 = vld [vmem:[%s88] sm:$0xff]
  %s90 = scalar_lea.vmem %s1, 72
  %91 = vst [vmem:[%s90] sm:$0xff] %v89
  %s92 = scalar_lea.vmem %s0, 152
  %v93 = vld [vmem:[%s92] sm:$0xff]
  %s94 = scalar_lea.vmem %s1, 184
  %95 = vst [vmem:[%s94] sm:$0xff] %v93
  %s96 = scalar_lea.vmem %s0, 24
  %v97 = vld [vmem:[%s96] sm:$0xff]
  %s98 = scalar_lea.vmem %s1, 88
  %99 = vst [vmem:[%s98] sm:$0xff] %v97
  %s100 = scalar_lea.vmem %s0, 136
  %v101 = vld [vmem:[%s100] sm:$0xff]
  %s102 = scalar_lea.vmem %s1, 200
  %103 = vst [vmem:[%s102] sm:$0xff] %v101
  %s104 = scalar_lea.vmem %s0, 8
  %v105 = vld [vmem:[%s104] sm:$0xff]
  %s106 = scalar_lea.vmem %s1, 104
  %107 = vst [vmem:[%s106] sm:$0xff] %v105
  %s108 = scalar_lea.vmem %s0, 120
  %v109 = vld [vmem:[%s108] sm:$0xff]
  %s110 = scalar_lea.vmem %s1, 216
  %111 = vst [vmem:[%s110] sm:$0xff] %v109

// kernel: simple_block3d_forward.12
$region0: #{simple_block3d_forward.12}
  #allocation0 [shape = 'u32[]', space=smem, size = 0x4, offset = 0x4, fixed_abs, tag = 'smem constant byte address 0x4 - core index']
  #allocation1 [shape = 'u32[144,128]{1,0:T(1,128)}', space=vmem, size = 0x12000, scoped, tag = 'internal scratch']
  %s0 = inlined_call_operand.vmem [shape: f32[2,20,256], index: 0, kind: input, shape index: {}]
  %s1 = inlined_call_operand.vmem [shape: f32[20,20], index: 1, kind: input, shape index: {}]
  %s2 = inlined_call_operand.vmem [shape: f32[20,1], index: 2, kind: input, shape index: {}]
  %s3 = inlined_call_operand.vmem [shape: f32[2,20,256], index: 3, kind: input, shape index: {}]
  %s4 = inlined_call_operand.vmem [shape: f32[2,20,256], index: 4, kind: output, shape index: {}]
  %s5 = sld [smem:[#allocation0]]
  $region49: #{simple_block3d_forward.12} parent=0
    _
  %s7 = ssub.s32 1, %s5
  %s8 = scalar_select 0, %s7, %s5
  loop: start=0, step=1, limit=4
  $region2: #{simple_block3d_forward.12} parent=0 // loop_pre_header
    _
  $region3: #{simple_block3d_forward.12} parent=0 // loop_header
    %s10 = sphi 0, %s14
    %p11 = scmp.ge.s32.totalorder %s10, 4
    %s17 = sphi 0, %s29
    %s18 = sphi 0, %s25
    %s19 = sphi 0, %s17
    %s20 = sphi 0, %s18
    %s21 = sphi 0, %s19
    %s22 = sphi 0, %s20
    %s34 = sphi 0, %s36
    %s37 = sphi 0, %s34
    %s38 = sphi 0, %s37
    %s54 = sphi 0, %s38
    %s58 = sphi 0, %s58
    %s60 = sphi 0, %s58
    %s61 = sphi 0, %s60
    %s75 = sphi 0, %s61
    %s79 = sphi 0, %s79
    %s81 = sphi 0, %s79
    %s82 = sphi 0, %s81
    %s96 = sphi 0, %s82
    %s104 = sphi 0, %s106
    %s107 = sphi 0, %s104
    %s108 = sphi 0, %s107
    %s124 = sphi 0, %s108
    %s132 = sphi 0, %s134
    %s135 = sphi 0, %s132
    %s136 = sphi 0, %s135
    %s152 = sphi 0, %s136
  $region4: #{simple_block3d_forward.12} parent=0 // loop_header_branch
    %13 = sbr.rel (%p11) target = $region8
  $region5: #{simple_block3d_forward.12} parent=0 // loop_body
    %s15 = ssub.s32 %s10, 1
    %s16 = ssub.s32 %s10, 2
    %s23 = sadd.s32 1, %s18
    %p24 = scmp.ge.s32.totalorder %s23, 1
    %s25 = scalar_select %p24, 0, %s23
    %s26 = sadd.s32 1, %s17
    %s27 = scalar_select %p24, %s26, %s17
    %p28 = scmp.ge.s32.totalorder %s27, 2
    %s29 = scalar_select %p28, 0, %s27
    %s30 = ssub.s32 %s17, %s29
    %s31 = ssub.s32 %s18, %s25
    %s32 = sor.u32 %s30, %s31
    %p33 = scmp.eq.s32.totalorder %s32, 0
    %s35 = sadd.s32 %s34, 1
    %s36 = scalar_select %p33, %s34, %s35
    %p39 = pneg %p33
    %p40 = scmp.eq.s32.totalorder %s10, 1
    %p41 = por %p39, %p40
    %p42 = scmp.ne.s32.totalorder %s34, %s37
    %p43 = scmp.eq.s32.totalorder %s10, 0
    %p44 = por %p42, %p43
    %p45 = scmp.ne.s32.totalorder %s34, %s37
    %p46 = scmp.eq.s32.totalorder %s15, 1
    %p47 = por %p45, %p46
    %p48 = scmp.ne.s32.totalorder %s37, %s38
    %p49 = scmp.eq.s32.totalorder %s15, 0
    %p50 = por %p48, %p49
    %p51 = scmp.ne.s32.totalorder %s37, %s38
    %p52 = scmp.eq.s32.totalorder %s16, 1
    %p53 = por %p51, %p52
    %p55 = scmp.ne.s32.totalorder %s38, %s54
    %p56 = scmp.eq.s32.totalorder %s16, 0
    %p57 = por %p55, %p56
    %s59 = sadd.s32 %s58, 1
    %p62 = scmp.eq.s32.totalorder %s10, 1
    %p63 = scmp.ne.s32.totalorder %s58, %s60
    %p64 = scmp.eq.s32.totalorder %s10, 0
    %p65 = por %p63, %p64
    %p66 = scmp.ne.s32.totalorder %s58, %s60
    %p67 = scmp.eq.s32.totalorder %s15, 1
    %p68 = por %p66, %p67
    %p69 = scmp.ne.s32.totalorder %s60, %s61
    %p70 = scmp.eq.s32.totalorder %s15, 0
    %p71 = por %p69, %p70
    %p72 = scmp.ne.s32.totalorder %s60, %s61
    %p73 = scmp.eq.s32.totalorder %s16, 1
    %p74 = por %p72, %p73
    %p76 = scmp.ne.s32.totalorder %s61, %s75
    %p77 = scmp.eq.s32.totalorder %s16, 0
    %p78 = por %p76, %p77
    %s80 = sadd.s32 %s79, 1
    %p83 = scmp.eq.s32.totalorder %s10, 1
    %p84 = scmp.ne.s32.totalorder %s79, %s81
    %p85 = scmp.eq.s32.totalorder %s10, 0
    %p86 = por %p84, %p85
    %p87 = scmp.ne.s32.totalorder %s79, %s81
    %p88 = scmp.eq.s32.totalorder %s15, 1
    %p89 = por %p87, %p88
    %p90 = scmp.ne.s32.totalorder %s81, %s82
    %p91 = scmp.eq.s32.totalorder %s15, 0
    %p92 = por %p90, %p91
    %p93 = scmp.ne.s32.totalorder %s81, %s82
    %p94 = scmp.eq.s32.totalorder %s16, 1
    %p95 = por %p93, %p94
    %p97 = scmp.ne.s32.totalorder %s82, %s96
    %p98 = scmp.eq.s32.totalorder %s16, 0
    %p99 = por %p97, %p98
    %s100 = ssub.s32 %s17, %s29
    %s101 = ssub.s32 %s18, %s25
    %s102 = sor.u32 %s100, %s101
    %p103 = scmp.eq.s32.totalorder %s102, 0
    %s105 = sadd.s32 %s104, 1
    %s106 = scalar_select %p103, %s104, %s105
    %p109 = pneg %p103
    %p110 = scmp.eq.s32.totalorder %s10, 1
    %p111 = por %p109, %p110
    %p112 = scmp.ne.s32.totalorder %s104, %s107
    %p113 = scmp.eq.s32.totalorder %s10, 0
    %p114 = por %p112, %p113
    %p115 = scmp.ne.s32.totalorder %s104, %s107
    %p116 = scmp.eq.s32.totalorder %s15, 1
    %p117 = por %p115, %p116
    %p118 = scmp.ne.s32.totalorder %s107, %s108
    %p119 = scmp.eq.s32.totalorder %s15, 0
    %p120 = por %p118, %p119
    %p121 = scmp.ne.s32.totalorder %s107, %s108
    %p122 = scmp.eq.s32.totalorder %s16, 1
    %p123 = por %p121, %p122
    %p125 = scmp.ne.s32.totalorder %s108, %s124
    %p126 = scmp.eq.s32.totalorder %s16, 0
    %p127 = por %p125, %p126
    %s128 = ssub.s32 %s17, %s29
    %s129 = ssub.s32 %s18, %s25
    %s130 = sor.u32 %s128, %s129
    %p131 = scmp.eq.s32.totalorder %s130, 0
    %s133 = sadd.s32 %s132, 1
    %s134 = scalar_select %p131, %s132, %s133
    %p137 = pneg %p131
    %p138 = scmp.eq.s32.totalorder %s10, 1
    %p139 = por %p137, %p138
    %p140 = scmp.ne.s32.totalorder %s132, %s135
    %p141 = scmp.eq.s32.totalorder %s10, 0
    %p142 = por %p140, %p141
    %p143 = scmp.ne.s32.totalorder %s132, %s135
    %p144 = scmp.eq.s32.totalorder %s15, 1
    %p145 = por %p143, %p144
    %p146 = scmp.ne.s32.totalorder %s135, %s136
    %p147 = scmp.eq.s32.totalorder %s15, 0
    %p148 = por %p146, %p147
    %p149 = scmp.ne.s32.totalorder %s135, %s136
    %p150 = scmp.eq.s32.totalorder %s16, 1
    %p151 = por %p149, %p150
    %p153 = scmp.ne.s32.totalorder %s136, %s152
    %p154 = scmp.eq.s32.totalorder %s16, 0
    %p155 = por %p153, %p154
    %p156 = scmp.le.s32.totalorder 1, %s10
    %p157 = scmp.lt.s32.totalorder %s10, 3
    %p158 = pnand %p156, %p157
    %p159 = pneg %p158
    // Predicated region
    $region9: #{simple_block3d_forward.12} parent=5 // pred_check
      _
    $region10: #{simple_block3d_forward.12} parent=5 // pred_check_branch
      %161 = sbr.rel (%p158) target = $region12
    $region11: #{simple_block3d_forward.12} parent=5 // pred_region
      %s162 = ssub.s32 %s10, 1
      // Predicated region
      $region13: #{simple_block3d_forward.12} parent=11 // pred_check
        %p163 = pneg %p71
      $region14: #{simple_block3d_forward.12} parent=11 // pred_check_branch
        %165 = sbr.rel (%p163) target = $region16
      $region15: #{simple_block3d_forward.12} parent=11 // pred_region
        _
      $region16: #{simple_block3d_forward.12} parent=11 // pred_fallthru
        _
      // Predicated region
      $region17: #{simple_block3d_forward.12} parent=11 // pred_check
        %p166 = pneg %p92
      $region18: #{simple_block3d_forward.12} parent=11 // pred_check_branch
        %168 = sbr.rel (%p166) target = $region20
      $region19: #{simple_block3d_forward.12} parent=11 // pred_region
        _
      $region20: #{simple_block3d_forward.12} parent=11 // pred_fallthru
        _
    $region12: #{simple_block3d_forward.12} parent=5 // pred_fallthru
      _
    %p169 = scmp.lt.s32.totalorder %s10, 2
    // Predicated region
    $region21: #{simple_block3d_forward.12} parent=5 // pred_check
      %p170 = pneg %p169
    $region22: #{simple_block3d_forward.12} parent=5 // pred_check_branch
      %172 = sbr.rel (%p170) target = $region24
    $region23: #{simple_block3d_forward.12} parent=5 // pred_region
      // Predicated region
      $region25: #{simple_block3d_forward.12} parent=23 // pred_check
        %p173 = pneg %p44
      $region26: #{simple_block3d_forward.12} parent=23 // pred_check_branch
        %175 = sbr.rel (%p173) target = $region28
      $region27: #{simple_block3d_forward.12} parent=23 // pred_region
        %s176 = smul.u32 2, %s18
        %p177 = scmp.lt.s32.totalorder %s17, 1
        %s178 = scalar_select %p177, %s17, 1
        %p179 = scmp.lt.s32.totalorder %s176, 1
        %s180 = scalar_select %p179, %s176, 1
        %s181 = smul.addr %s178, 6
        %s182 = sadd.s32 %s180, %s181
        %s183 = smul.addr %s182, 8
        %s184 = scalar_lea.vmem %s0, %s183
        %s185 = smul.u32 2, %s18
      $region28: #{simple_block3d_forward.12} parent=23 // pred_fallthru
        _
      // Predicated region
      $region29: #{simple_block3d_forward.12} parent=23 // pred_check
        %p186 = pneg %p114
      $region30: #{simple_block3d_forward.12} parent=23 // pred_check_branch
        %188 = sbr.rel (%p186) target = $region32
      $region31: #{simple_block3d_forward.12} parent=23 // pred_region
        %s189 = smul.u32 2, %s18
        %p190 = scmp.lt.s32.totalorder %s17, 1
        %s191 = scalar_select %p190, %s17, 1
        %p192 = scmp.lt.s32.totalorder %s189, 1
        %s193 = scalar_select %p192, %s189, 1
        %s194 = smul.addr %s191, 6
        %s195 = sadd.s32 %s193, %s194
        %s196 = smul.addr %s195, 8
        %s197 = scalar_lea.vmem %s3, %s196
        %s198 = smul.u32 2, %s18
      $region32: #{simple_block3d_forward.12} parent=23 // pred_fallthru
        _
    $region24: #{simple_block3d_forward.12} parent=5 // pred_fallthru
      _
    %p199 = scmp.le.s32.totalorder 1, %s10
    %p200 = scmp.lt.s32.totalorder %s10, 3
    %p201 = pnand %p199, %p200
    %p202 = pneg %p201
    // Predicated region
    $region33: #{simple_block3d_forward.12} parent=5 // pred_check
      _
    $region34: #{simple_block3d_forward.12} parent=5 // pred_check_branch
      %204 = sbr.rel (%p201) target = $region36
    $region35: #{simple_block3d_forward.12} parent=5 // pred_region
      %s205 = ssub.s32 %s10, 1
      %s206 = smul.u32 2, %s20
      %p207 = scmp.lt.s32.totalorder %s19, 1
      %s208 = scalar_select %p207, %s19, 1
      %p209 = scmp.lt.s32.totalorder %s206, 1
      %s210 = scalar_select %p209, %s206, 1
      %s211 = smul.addr %s208, 6
      %s212 = sadd.s32 %s210, %s211
      %s213 = smul.addr %s212, 8
      %s214 = scalar_lea.vmem %s0, %s213
      %p215 = pneg %p50
      %p216 = pneg %p47
      %p217 = pneg %p71
      %p218 = pneg %p68
      %p219 = pneg %p92
      %p220 = pneg %p89
      %s221 = smul.u32 2, %s20
      %p222 = scmp.lt.s32.totalorder %s19, 1
      %s223 = scalar_select %p222, %s19, 1
      %p224 = scmp.lt.s32.totalorder %s221, 1
      %s225 = scalar_select %p224, %s221, 1
      %s226 = smul.addr %s223, 6
      %s227 = sadd.s32 %s225, %s226
      %s228 = smul.addr %s227, 8
      %s229 = scalar_lea.vmem %s3, %s228
      %p230 = pneg %p120
      %p231 = pneg %p117
      %p232 = pneg %p148
      %p233 = pneg %p145
      %s234 = smul.u32 2, %s20
      %p235 = scmp.lt.s32.totalorder %s19, 1
      %s236 = scalar_select %p235, %s19, 1
      %p237 = scmp.lt.s32.totalorder %s234, 1
      %s238 = scalar_select %p237, %s234, 1
      %s239 = smul.addr %s236, 6
      %s240 = sadd.s32 %s238, %s239
      %s241 = smul.addr %s240, 8
      %s242 = scalar_lea.vmem %s4, %s241
      %s243 = smul.u32 2, %s20
      %p244 = scmp.lt.s32.totalorder %s19, 1
      %s245 = scalar_select %p244, %s19, 1
      %p246 = scmp.lt.s32.totalorder %s243, 1
      %s247 = scalar_select %p246, %s243, 1
      %s248 = smul.addr %s245, 6
      %s249 = sadd.s32 %s247, %s248
      %s250 = smul.addr %s249, 8
      %s251 = scalar_lea.vmem %s0, %s250
      %s252 = smul.u32 2, %s20
      %s253 = smul.u32 2, %s20
      %p254 = scmp.lt.s32.totalorder %s19, 1
      %s255 = scalar_select %p254, %s19, 1
      %p256 = scmp.lt.s32.totalorder %s253, 1
      %s257 = scalar_select %p256, %s253, 1
      %s258 = smul.addr %s255, 6
      %s259 = sadd.s32 %s257, %s258
      %s260 = smul.addr %s259, 8
      %s261 = scalar_lea.vmem %s3, %s260
      %s262 = smul.u32 2, %s20
      %s263 = smul.u32 2, %s20
      %p264 = scmp.lt.s32.totalorder %s19, 1
      %s265 = scalar_select %p264, %s19, 1
      %p266 = scmp.lt.s32.totalorder %s263, 1
      %s267 = scalar_select %p266, %s263, 1
      %s268 = smul.addr %s265, 6
      %s269 = sadd.s32 %s267, %s268
      %s270 = smul.addr %s269, 8
      %s271 = scalar_lea.vmem %s4, %s270
      %s272 = smul.u32 2, %s20
      %v273 = vld [vmem:[%s1] sm:$0xff]
      %v274 = vld [vmem:[%s1 + $0x8] sm:$0xff]
      %v275 = vld [vmem:[%s1 + $0x10] sm:$0xf]
      %v276 = vld [vmem:[%s251] sm:$0xff]
      %v277 = vld [vmem:[%s251 + $0x8] sm:$0xff]
      %v278 = vld [vmem:[%s251 + $0x10] sm:$0xff]
      %v279 = vld [vmem:[%s251 + $0x18] sm:$0xff]
      %v280 = vld [vmem:[%s251 + $0x20] sm:$0xf]
      %v281 = vld [vmem:[%s251 + $0x28] sm:$0xf]
      %v282 = vld [vmem:[%s2] sm:$0xff]
      %v283 = vld [vmem:[%s2 + $0x8] sm:$0xff]
      %v284 = vld [vmem:[%s2 + $0x10] sm:$0xf]
      %286 = vset.pattern.permute.xlu0 0
      %287 = vperm.xlu0 %286, %v282
      %v288 = vpop.permute.xlu0 %287
      %291 = vset.pattern.permute.xlu0 0
      %292 = vperm.xlu0 %291, %v283
      %v293 = vpop.permute.xlu0 %292
      %296 = vset.pattern.permute.xlu0 0
      %297 = vperm.xlu0 %296, %v284
      %v298 = vpop.permute.xlu0 %297
      %vm300 = vcmask 162816
      %v302 = vsel %vm300, %v273, 0
      %v305 = vsel %vm300, %v274, 0
      %v308 = vsel %vm300, %v275, 0
      %vm310 = vcmask 1043456
      %v312 = vsel %vm310, %v280, 0
      %v315 = vsel %vm310, %v281, 0
      %317 = vmatprep.subr.mxu0 %v277
      %318 = vmatpush1.msra.mxu0 %v276
      %319 = vmatprep.subr.mxu0 %v279
      %320 = vmatpush1.msra.mxu0 %v278
      %321 = vmatprep.subr.mxu0 %v315
      %322 = vmatpush1.msra.mxu0 %v312
      %323 = vmatprep.subr.mxu0 0.0
      %324 = vmatpush1.msra.mxu0 0.0
      %325 = vmatprep.subr.mxu0 0.0
      %326 = vmatpush1.msra.mxu0 0.0
      %327 = vmatprep.subr.mxu0 0.0
      %328 = vmatpush1.msra.mxu0 0.0
      %329 = vmatprep.subr.mxu0 0.0
      %330 = vmatpush1.msra.mxu0 0.0
      %331 = vmatprep.subr.mxu0 0.0
      %332 = vmatpush1.msra.mxu0 0.0
      %333 = vmatprep.subr.mxu0 0.0
      %334 = vmatpush1.msra.mxu0 0.0
      %335 = vmatprep.subr.mxu0 0.0
      %336 = vmatpush1.msra.mxu0 0.0
      %337 = vmatprep.subr.mxu0 0.0
      %338 = vmatpush1.msra.mxu0 0.0
      %339 = vmatprep.subr.mxu0 0.0
      %340 = vmatpush1.msra.mxu0 0.0
      %341 = vmatprep.subr.mxu0 0.0
      %342 = vmatpush1.msra.mxu0 0.0
      %343 = vmatprep.subr.mxu0 0.0
      %344 = vmatpush1.msra.mxu0 0.0
      %345 = vmatprep.subr.mxu0 0.0
      %346 = vmatpush1.msra.mxu0 0.0
      %347 = vmatprep.subr.mxu0 0.0
      %348 = vmatpush1.msra.mxu0 0.0
      %349 = vmatprep.subr.mxu0 0.0
      %350 = vmatpush1.msra.mxu0 0.0
      %351 = vmatprep.subr.mxu0 0.0
      %352 = vmatpush1.msra.mxu0 0.0
      %353 = vmatprep.subr.mxu0 0.0
      %354 = vmatpush1.msra.mxu0 0.0
      %355 = vmatprep.subr.mxu0 0.0
      %356 = vmatpush1.msra.mxu0 0.0
      %357 = vmatprep.subr.mxu0 0.0
      %358 = vmatpush1.msra.mxu0 0.0
      %359 = vmatprep.subr.mxu0 0.0
      %360 = vmatpush1.msra.mxu0 0.0
      %361 = vmatprep.subr.mxu0 0.0
      %362 = vmatpush1.msra.mxu0 0.0
      %363 = vmatprep.subr.mxu0 0.0
      %364 = vmatpush1.msra.mxu0 0.0
      %365 = vmatprep.subr.mxu0 0.0
      %366 = vmatpush1.msra.mxu0 0.0
      %367 = vmatprep.subr.mxu0 0.0
      %368 = vmatpush1.msra.mxu0 0.0
      %369 = vmatprep.subr.mxu0 0.0
      %370 = vmatpush1.msra.mxu0 0.0
      %371 = vmatprep.subr.mxu0 0.0
      %372 = vmatpush1.msra.mxu0 0.0
      %373 = vmatprep.subr.mxu0 0.0
      %374 = vmatpush1.msra.mxu0 0.0
      %375 = vmatprep.subr.mxu0 0.0
      %376 = vmatpush1.msra.mxu0 0.0
      %377 = vmatprep.subr.mxu0 0.0
      %378 = vmatpush1.msra.mxu0 0.0
      %379 = vmatprep.subr.mxu0 0.0
      %380 = vmatpush1.msra.mxu0 0.0
      %381 = vmatprep.mubr.f32.mxu0 0.0
      %382 = vmatmul.mubr.f32.gmra.mrb[0].mxu0 %v302
      %v383 = vpop.f32.mrb[0].mxu0
      %v384 = vadd.f32 %v288, %v383
      %v385 = vpop.f32.mrb[0].mxu0
      %v386 = vadd.f32 %v288, %v385
      %387 = vmatprep.mubr.f32.mxu0 0.0
      %388 = vmatmul.mubr.f32.gmra.mrb[0].mxu0 %v305
      %v389 = vpop.f32.mrb[0].mxu0
      %v390 = vadd.f32 %v293, %v389
      %v391 = vpop.f32.mrb[0].mxu0
      %v392 = vadd.f32 %v293, %v391
      %393 = vmatprep.mubr.f32.mxu0 0.0
      %394 = vmatmul.mubr.f32.gmra.mrb[0].mxu0 %v308
      %v395 = vpop.f32.mrb[0].mxu0
      %v396 = vadd.f32 %v298, %v395
      %v397 = vpop.f32.mrb[0].mxu0
      %v398 = vadd.f32 %v298, %v397
      %399 = vdwg.mxu0
      %v400 = vld [vmem:[%s261] sm:$0xff]
      %v401 = vld [vmem:[%s261 + $0x8] sm:$0xff]
      %v402 = vld [vmem:[%s261 + $0x10] sm:$0xff]
      %v403 = vld [vmem:[%s261 + $0x18] sm:$0xff]
      %v404 = vld [vmem:[%s261 + $0x20] sm:$0xf]
      %v405 = vld [vmem:[%s261 + $0x28] sm:$0xf]
      %v406 = vadd.f32 %v384, %v400
      %v407 = vadd.f32 %v386, %v401
      %v408 = vadd.f32 %v390, %v402
      %v409 = vadd.f32 %v392, %v403
      %v410 = vadd.f32 %v396, %v404
      %v411 = vadd.f32 %v398, %v405
      %v412 = vtanh.pop %v406
      %v413 = vtanh.pop %v407
      %v414 = vtanh.pop %v408
      %v415 = vtanh.pop %v409
      %v416 = vtanh.pop %v410
      %v417 = vtanh.pop %v411
      %418 = vst [vmem:[%s271] sm:$0xff] %v412
      %419 = vst [vmem:[%s271 + $0x8] sm:$0xff] %v413
      %420 = vst [vmem:[%s271 + $0x10] sm:$0xff] %v414
      %421 = vst [vmem:[%s271 + $0x18] sm:$0xff] %v415
      %422 = vst [vmem:[%s271 + $0x20] sm:$0xf] %v416
      %423 = vst [vmem:[%s271 + $0x28] sm:$0xf] %v417
      %s424 = smul.u32 2, %s20
      %p425 = scmp.lt.s32.totalorder %s19, 1
      %s426 = scalar_select %p425, %s19, 1
      %p427 = scmp.lt.s32.totalorder %s424, 1
      %s428 = scalar_select %p427, %s424, 1
      %s429 = smul.addr %s426, 6
      %s430 = sadd.s32 %s428, %s429
      %s431 = smul.addr %s430, 8
      %s432 = scalar_lea.vmem %s4, %s431
      // Predicated region
      $region37: #{simple_block3d_forward.12} parent=35 // pred_check
        %p433 = pneg %p145
      $region38: #{simple_block3d_forward.12} parent=35 // pred_check_branch
        %435 = sbr.rel (%p433) target = $region40
      $region39: #{simple_block3d_forward.12} parent=35 // pred_region
        %s436 = smul.u32 2, %s20
      $region40: #{simple_block3d_forward.12} parent=35 // pred_fallthru
        _
    $region36: #{simple_block3d_forward.12} parent=5 // pred_fallthru
      _
    %p437 = scmp.le.s32.totalorder 2, %s10
    // Predicated region
    $region41: #{simple_block3d_forward.12} parent=5 // pred_check
      %p438 = pneg %p437
    $region42: #{simple_block3d_forward.12} parent=5 // pred_check_branch
      %440 = sbr.rel (%p438) target = $region44
    $region43: #{simple_block3d_forward.12} parent=5 // pred_region
      %s441 = ssub.s32 %s10, 2
      // Predicated region
      $region45: #{simple_block3d_forward.12} parent=43 // pred_check
        %p442 = pneg %p151
      $region46: #{simple_block3d_forward.12} parent=43 // pred_check_branch
        %444 = sbr.rel (%p442) target = $region48
      $region47: #{simple_block3d_forward.12} parent=43 // pred_region
        %s445 = smul.u32 2, %s22
        %p446 = scmp.lt.s32.totalorder %s21, 1
        %s447 = scalar_select %p446, %s21, 1
        %p448 = scmp.lt.s32.totalorder %s445, 1
        %s449 = scalar_select %p448, %s445, 1
        %s450 = smul.addr %s447, 6
        %s451 = sadd.s32 %s449, %s450
        %s452 = smul.addr %s451, 8
        %s453 = scalar_lea.vmem %s4, %s452
      $region48: #{simple_block3d_forward.12} parent=43 // pred_fallthru
        _
    $region44: #{simple_block3d_forward.12} parent=5 // pred_fallthru
      _
  $region6: #{simple_block3d_forward.12} parent=0 // loop_footer
    %s14 = sadd.s32 1, %s10
  $region7: #{simple_block3d_forward.12} parent=0 // loop_footer_branch
    %9 = sbr.rel target = $region3
  $region8: #{simple_block3d_forward.12} parent=0 // loop_exit
    _

// kernel: simple_block3d_forward.16
$region0: #{simple_block3d_forward.16}
  #allocation0 [shape = 'u32[]', space=smem, size = 0x4, offset = 0x4, fixed_abs, tag = 'smem constant byte address 0x4 - core index']
  #allocation1 [shape = 'u32[144,128]{1,0:T(1,128)}', space=vmem, size = 0x12000, scoped, tag = 'internal scratch']
  %s0 = inlined_call_operand.vmem [shape: f32[2,20,256], index: 0, kind: input, shape index: {}]
  %s1 = inlined_call_operand.vmem [shape: f32[20,20], index: 1, kind: input, shape index: {}]
  %s2 = inlined_call_operand.vmem [shape: f32[20,1], index: 2, kind: input, shape index: {}]
  %s3 = inlined_call_operand.vmem [shape: f32[2,20,256], index: 3, kind: input, shape index: {}]
  %s4 = inlined_call_operand.vmem [shape: f32[2,20,256], index: 4, kind: output, shape index: {}]
  %s5 = sld [smem:[#allocation0]]
  $region49: #{simple_block3d_forward.16} parent=0
    _
  %s7 = ssub.s32 1, %s5
  %s8 = scalar_select 0, %s7, %s5
  loop: start=0, step=1, limit=4
  $region2: #{simple_block3d_forward.16} parent=0 // loop_pre_header
    _
  $region3: #{simple_block3d_forward.16} parent=0 // loop_header
    %s10 = sphi 0, %s14
    %p11 = scmp.ge.s32.totalorder %s10, 4
    %s17 = sphi 0, %s29
    %s18 = sphi 0, %s25
    %s19 = sphi 0, %s17
    %s20 = sphi 0, %s18
    %s21 = sphi 0, %s19
    %s22 = sphi 0, %s20
    %s34 = sphi 0, %s36
    %s37 = sphi 0, %s34
    %s38 = sphi 0, %s37
    %s54 = sphi 0, %s38
    %s58 = sphi 0, %s58
    %s60 = sphi 0, %s58
    %s61 = sphi 0, %s60
    %s75 = sphi 0, %s61
    %s79 = sphi 0, %s79
    %s81 = sphi 0, %s79
    %s82 = sphi 0, %s81
    %s96 = sphi 0, %s82
    %s104 = sphi 0, %s106
    %s107 = sphi 0, %s104
    %s108 = sphi 0, %s107
    %s124 = sphi 0, %s108
    %s132 = sphi 0, %s134
    %s135 = sphi 0, %s132
    %s136 = sphi 0, %s135
    %s152 = sphi 0, %s136
  $region4: #{simple_block3d_forward.16} parent=0 // loop_header_branch
    %13 = sbr.rel (%p11) target = $region8
  $region5: #{simple_block3d_forward.16} parent=0 // loop_body
    %s15 = ssub.s32 %s10, 1
    %s16 = ssub.s32 %s10, 2
    %s23 = sadd.s32 1, %s18
    %p24 = scmp.ge.s32.totalorder %s23, 1
    %s25 = scalar_select %p24, 0, %s23
    %s26 = sadd.s32 1, %s17
    %s27 = scalar_select %p24, %s26, %s17
    %p28 = scmp.ge.s32.totalorder %s27, 2
    %s29 = scalar_select %p28, 0, %s27
    %s30 = ssub.s32 %s17, %s29
    %s31 = ssub.s32 %s18, %s25
    %s32 = sor.u32 %s30, %s31
    %p33 = scmp.eq.s32.totalorder %s32, 0
    %s35 = sadd.s32 %s34, 1
    %s36 = scalar_select %p33, %s34, %s35
    %p39 = pneg %p33
    %p40 = scmp.eq.s32.totalorder %s10, 1
    %p41 = por %p39, %p40
    %p42 = scmp.ne.s32.totalorder %s34, %s37
    %p43 = scmp.eq.s32.totalorder %s10, 0
    %p44 = por %p42, %p43
    %p45 = scmp.ne.s32.totalorder %s34, %s37
    %p46 = scmp.eq.s32.totalorder %s15, 1
    %p47 = por %p45, %p46
    %p48 = scmp.ne.s32.totalorder %s37, %s38
    %p49 = scmp.eq.s32.totalorder %s15, 0
    %p50 = por %p48, %p49
    %p51 = scmp.ne.s32.totalorder %s37, %s38
    %p52 = scmp.eq.s32.totalorder %s16, 1
    %p53 = por %p51, %p52
    %p55 = scmp.ne.s32.totalorder %s38, %s54
    %p56 = scmp.eq.s32.totalorder %s16, 0
    %p57 = por %p55, %p56
    %s59 = sadd.s32 %s58, 1
    %p62 = scmp.eq.s32.totalorder %s10, 1
    %p63 = scmp.ne.s32.totalorder %s58, %s60
    %p64 = scmp.eq.s32.totalorder %s10, 0
    %p65 = por %p63, %p64
    %p66 = scmp.ne.s32.totalorder %s58, %s60
    %p67 = scmp.eq.s32.totalorder %s15, 1
    %p68 = por %p66, %p67
    %p69 = scmp.ne.s32.totalorder %s60, %s61
    %p70 = scmp.eq.s32.totalorder %s15, 0
    %p71 = por %p69, %p70
    %p72 = scmp.ne.s32.totalorder %s60, %s61
    %p73 = scmp.eq.s32.totalorder %s16, 1
    %p74 = por %p72, %p73
    %p76 = scmp.ne.s32.totalorder %s61, %s75
    %p77 = scmp.eq.s32.totalorder %s16, 0
    %p78 = por %p76, %p77
    %s80 = sadd.s32 %s79, 1
    %p83 = scmp.eq.s32.totalorder %s10, 1
    %p84 = scmp.ne.s32.totalorder %s79, %s81
    %p85 = scmp.eq.s32.totalorder %s10, 0
    %p86 = por %p84, %p85
    %p87 = scmp.ne.s32.totalorder %s79, %s81
    %p88 = scmp.eq.s32.totalorder %s15, 1
    %p89 = por %p87, %p88
    %p90 = scmp.ne.s32.totalorder %s81, %s82
    %p91 = scmp.eq.s32.totalorder %s15, 0
    %p92 = por %p90, %p91
    %p93 = scmp.ne.s32.totalorder %s81, %s82
    %p94 = scmp.eq.s32.totalorder %s16, 1
    %p95 = por %p93, %p94
    %p97 = scmp.ne.s32.totalorder %s82, %s96
    %p98 = scmp.eq.s32.totalorder %s16, 0
    %p99 = por %p97, %p98
    %s100 = ssub.s32 %s17, %s29
    %s101 = ssub.s32 %s18, %s25
    %s102 = sor.u32 %s100, %s101
    %p103 = scmp.eq.s32.totalorder %s102, 0
    %s105 = sadd.s32 %s104, 1
    %s106 = scalar_select %p103, %s104, %s105
    %p109 = pneg %p103
    %p110 = scmp.eq.s32.totalorder %s10, 1
    %p111 = por %p109, %p110
    %p112 = scmp.ne.s32.totalorder %s104, %s107
    %p113 = scmp.eq.s32.totalorder %s10, 0
    %p114 = por %p112, %p113
    %p115 = scmp.ne.s32.totalorder %s104, %s107
    %p116 = scmp.eq.s32.totalorder %s15, 1
    %p117 = por %p115, %p116
    %p118 = scmp.ne.s32.totalorder %s107, %s108
    %p119 = scmp.eq.s32.totalorder %s15, 0
    %p120 = por %p118, %p119
    %p121 = scmp.ne.s32.totalorder %s107, %s108
    %p122 = scmp.eq.s32.totalorder %s16, 1
    %p123 = por %p121, %p122
    %p125 = scmp.ne.s32.totalorder %s108, %s124
    %p126 = scmp.eq.s32.totalorder %s16, 0
    %p127 = por %p125, %p126
    %s128 = ssub.s32 %s17, %s29
    %s129 = ssub.s32 %s18, %s25
    %s130 = sor.u32 %s128, %s129
    %p131 = scmp.eq.s32.totalorder %s130, 0
    %s133 = sadd.s32 %s132, 1
    %s134 = scalar_select %p131, %s132, %s133
    %p137 = pneg %p131
    %p138 = scmp.eq.s32.totalorder %s10, 1
    %p139 = por %p137, %p138
    %p140 = scmp.ne.s32.totalorder %s132, %s135
    %p141 = scmp.eq.s32.totalorder %s10, 0
    %p142 = por %p140, %p141
    %p143 = scmp.ne.s32.totalorder %s132, %s135
    %p144 = scmp.eq.s32.totalorder %s15, 1
    %p145 = por %p143, %p144
    %p146 = scmp.ne.s32.totalorder %s135, %s136
    %p147 = scmp.eq.s32.totalorder %s15, 0
    %p148 = por %p146, %p147
    %p149 = scmp.ne.s32.totalorder %s135, %s136
    %p150 = scmp.eq.s32.totalorder %s16, 1
    %p151 = por %p149, %p150
    %p153 = scmp.ne.s32.totalorder %s136, %s152
    %p154 = scmp.eq.s32.totalorder %s16, 0
    %p155 = por %p153, %p154
    %p156 = scmp.le.s32.totalorder 1, %s10
    %p157 = scmp.lt.s32.totalorder %s10, 3
    %p158 = pnand %p156, %p157
    %p159 = pneg %p158
    // Predicated region
    $region9: #{simple_block3d_forward.16} parent=5 // pred_check
      _
    $region10: #{simple_block3d_forward.16} parent=5 // pred_check_branch
      %161 = sbr.rel (%p158) target = $region12
    $region11: #{simple_block3d_forward.16} parent=5 // pred_region
      %s162 = ssub.s32 %s10, 1
      // Predicated region
      $region13: #{simple_block3d_forward.16} parent=11 // pred_check
        %p163 = pneg %p71
      $region14: #{simple_block3d_forward.16} parent=11 // pred_check_branch
        %165 = sbr.rel (%p163) target = $region16
      $region15: #{simple_block3d_forward.16} parent=11 // pred_region
        _
      $region16: #{simple_block3d_forward.16} parent=11 // pred_fallthru
        _
      // Predicated region
      $region17: #{simple_block3d_forward.16} parent=11 // pred_check
        %p166 = pneg %p92
      $region18: #{simple_block3d_forward.16} parent=11 // pred_check_branch
        %168 = sbr.rel (%p166) target = $region20
      $region19: #{simple_block3d_forward.16} parent=11 // pred_region
        _
      $region20: #{simple_block3d_forward.16} parent=11 // pred_fallthru
        _
    $region12: #{simple_block3d_forward.16} parent=5 // pred_fallthru
      _
    %p169 = scmp.lt.s32.totalorder %s10, 2
    // Predicated region
    $region21: #{simple_block3d_forward.16} parent=5 // pred_check
      %p170 = pneg %p169
    $region22: #{simple_block3d_forward.16} parent=5 // pred_check_branch
      %172 = sbr.rel (%p170) target = $region24
    $region23: #{simple_block3d_forward.16} parent=5 // pred_region
      // Predicated region
      $region25: #{simple_block3d_forward.16} parent=23 // pred_check
        %p173 = pneg %p44
      $region26: #{simple_block3d_forward.16} parent=23 // pred_check_branch
        %175 = sbr.rel (%p173) target = $region28
      $region27: #{simple_block3d_forward.16} parent=23 // pred_region
        %s176 = smul.u32 2, %s18
        %p177 = scmp.lt.s32.totalorder %s17, 1
        %s178 = scalar_select %p177, %s17, 1
        %p179 = scmp.lt.s32.totalorder %s176, 1
        %s180 = scalar_select %p179, %s176, 1
        %s181 = smul.addr %s178, 6
        %s182 = sadd.s32 %s180, %s181
        %s183 = smul.addr %s182, 8
        %s184 = scalar_lea.vmem %s0, %s183
        %s185 = smul.u32 2, %s18
      $region28: #{simple_block3d_forward.16} parent=23 // pred_fallthru
        _
      // Predicated region
      $region29: #{simple_block3d_forward.16} parent=23 // pred_check
        %p186 = pneg %p114
      $region30: #{simple_block3d_forward.16} parent=23 // pred_check_branch
        %188 = sbr.rel (%p186) target = $region32
      $region31: #{simple_block3d_forward.16} parent=23 // pred_region
        %s189 = smul.u32 2, %s18
        %p190 = scmp.lt.s32.totalorder %s17, 1
        %s191 = scalar_select %p190, %s17, 1
        %p192 = scmp.lt.s32.totalorder %s189, 1
        %s193 = scalar_select %p192, %s189, 1
        %s194 = smul.addr %s191, 6
        %s195 = sadd.s32 %s193, %s194
        %s196 = smul.addr %s195, 8
        %s197 = scalar_lea.vmem %s3, %s196
        %s198 = smul.u32 2, %s18
      $region32: #{simple_block3d_forward.16} parent=23 // pred_fallthru
        _
    $region24: #{simple_block3d_forward.16} parent=5 // pred_fallthru
      _
    %p199 = scmp.le.s32.totalorder 1, %s10
    %p200 = scmp.lt.s32.totalorder %s10, 3
    %p201 = pnand %p199, %p200
    %p202 = pneg %p201
    // Predicated region
    $region33: #{simple_block3d_forward.16} parent=5 // pred_check
      _
    $region34: #{simple_block3d_forward.16} parent=5 // pred_check_branch
      %204 = sbr.rel (%p201) target = $region36
    $region35: #{simple_block3d_forward.16} parent=5 // pred_region
      %s205 = ssub.s32 %s10, 1
      %s206 = smul.u32 2, %s20
      %p207 = scmp.lt.s32.totalorder %s19, 1
      %s208 = scalar_select %p207, %s19, 1
      %p209 = scmp.lt.s32.totalorder %s206, 1
      %s210 = scalar_select %p209, %s206, 1
      %s211 = smul.addr %s208, 6
      %s212 = sadd.s32 %s210, %s211
      %s213 = smul.addr %s212, 8
      %s214 = scalar_lea.vmem %s0, %s213
      %p215 = pneg %p50
      %p216 = pneg %p47
      %p217 = pneg %p71
      %p218 = pneg %p68
      %p219 = pneg %p92
      %p220 = pneg %p89
      %s221 = smul.u32 2, %s20
      %p222 = scmp.lt.s32.totalorder %s19, 1
      %s223 = scalar_select %p222, %s19, 1
      %p224 = scmp.lt.s32.totalorder %s221, 1
      %s225 = scalar_select %p224, %s221, 1
      %s226 = smul.addr %s223, 6
      %s227 = sadd.s32 %s225, %s226
      %s228 = smul.addr %s227, 8
      %s229 = scalar_lea.vmem %s3, %s228
      %p230 = pneg %p120
      %p231 = pneg %p117
      %p232 = pneg %p148
      %p233 = pneg %p145
      %s234 = smul.u32 2, %s20
      %p235 = scmp.lt.s32.totalorder %s19, 1
      %s236 = scalar_select %p235, %s19, 1
      %p237 = scmp.lt.s32.totalorder %s234, 1
      %s238 = scalar_select %p237, %s234, 1
      %s239 = smul.addr %s236, 6
      %s240 = sadd.s32 %s238, %s239
      %s241 = smul.addr %s240, 8
      %s242 = scalar_lea.vmem %s4, %s241
      %s243 = smul.u32 2, %s20
      %p244 = scmp.lt.s32.totalorder %s19, 1
      %s245 = scalar_select %p244, %s19, 1
      %p246 = scmp.lt.s32.totalorder %s243, 1
      %s247 = scalar_select %p246, %s243, 1
      %s248 = smul.addr %s245, 6
      %s249 = sadd.s32 %s247, %s248
      %s250 = smul.addr %s249, 8
      %s251 = scalar_lea.vmem %s0, %s250
      %s252 = smul.u32 2, %s20
      %s253 = smul.u32 2, %s20
      %p254 = scmp.lt.s32.totalorder %s19, 1
      %s255 = scalar_select %p254, %s19, 1
      %p256 = scmp.lt.s32.totalorder %s253, 1
      %s257 = scalar_select %p256, %s253, 1
      %s258 = smul.addr %s255, 6
      %s259 = sadd.s32 %s257, %s258
      %s260 = smul.addr %s259, 8
      %s261 = scalar_lea.vmem %s3, %s260
      %s262 = smul.u32 2, %s20
      %s263 = smul.u32 2, %s20
      %p264 = scmp.lt.s32.totalorder %s19, 1
      %s265 = scalar_select %p264, %s19, 1
      %p266 = scmp.lt.s32.totalorder %s263, 1
      %s267 = scalar_select %p266, %s263, 1
      %s268 = smul.addr %s265, 6
      %s269 = sadd.s32 %s267, %s268
      %s270 = smul.addr %s269, 8
      %s271 = scalar_lea.vmem %s4, %s270
      %s272 = smul.u32 2, %s20
      %v273 = vld [vmem:[%s1] sm:$0xff]
      %v274 = vld [vmem:[%s1 + $0x8] sm:$0xff]
      %v275 = vld [vmem:[%s1 + $0x10] sm:$0xf]
      %v276 = vld [vmem:[%s251] sm:$0xff]
      %v277 = vld [vmem:[%s251 + $0x8] sm:$0xff]
      %v278 = vld [vmem:[%s251 + $0x10] sm:$0xff]
      %v279 = vld [vmem:[%s251 + $0x18] sm:$0xff]
      %v280 = vld [vmem:[%s251 + $0x20] sm:$0xf]
      %v281 = vld [vmem:[%s251 + $0x28] sm:$0xf]
      %v282 = vld [vmem:[%s2] sm:$0xff]
      %v283 = vld [vmem:[%s2 + $0x8] sm:$0xff]
      %v284 = vld [vmem:[%s2 + $0x10] sm:$0xf]
      %286 = vset.pattern.permute.xlu0 0
      %287 = vperm.xlu0 %286, %v282
      %v288 = vpop.permute.xlu0 %287
      %291 = vset.pattern.permute.xlu0 0
      %292 = vperm.xlu0 %291, %v283
      %v293 = vpop.permute.xlu0 %292
      %296 = vset.pattern.permute.xlu0 0
      %297 = vperm.xlu0 %296, %v284
      %v298 = vpop.permute.xlu0 %297
      %vm300 = vcmask 162816
      %v302 = vsel %vm300, %v273, 0
      %v305 = vsel %vm300, %v274, 0
      %v308 = vsel %vm300, %v275, 0
      %vm310 = vcmask 1043456
      %v312 = vsel %vm310, %v280, 0
      %v315 = vsel %vm310, %v281, 0
      %317 = vmatprep.subr.mxu0 %v277
      %318 = vmatpush1.msra.mxu0 %v276
      %319 = vmatprep.subr.mxu0 %v279
      %320 = vmatpush1.msra.mxu0 %v278
      %321 = vmatprep.subr.mxu0 %v315
      %322 = vmatpush1.msra.mxu0 %v312
      %323 = vmatprep.subr.mxu0 0.0
      %324 = vmatpush1.msra.mxu0 0.0
      %325 = vmatprep.subr.mxu0 0.0
      %326 = vmatpush1.msra.mxu0 0.0
      %327 = vmatprep.subr.mxu0 0.0
      %328 = vmatpush1.msra.mxu0 0.0
      %329 = vmatprep.subr.mxu0 0.0
      %330 = vmatpush1.msra.mxu0 0.0
      %331 = vmatprep.subr.mxu0 0.0
      %332 = vmatpush1.msra.mxu0 0.0
      %333 = vmatprep.subr.mxu0 0.0
      %334 = vmatpush1.msra.mxu0 0.0
      %335 = vmatprep.subr.mxu0 0.0
      %336 = vmatpush1.msra.mxu0 0.0
      %337 = vmatprep.subr.mxu0 0.0
      %338 = vmatpush1.msra.mxu0 0.0
      %339 = vmatprep.subr.mxu0 0.0
      %340 = vmatpush1.msra.mxu0 0.0
      %341 = vmatprep.subr.mxu0 0.0
      %342 = vmatpush1.msra.mxu0 0.0
      %343 = vmatprep.subr.mxu0 0.0
      %344 = vmatpush1.msra.mxu0 0.0
      %345 = vmatprep.subr.mxu0 0.0
      %346 = vmatpush1.msra.mxu0 0.0
      %347 = vmatprep.subr.mxu0 0.0
      %348 = vmatpush1.msra.mxu0 0.0
      %349 = vmatprep.subr.mxu0 0.0
      %350 = vmatpush1.msra.mxu0 0.0
      %351 = vmatprep.subr.mxu0 0.0
      %352 = vmatpush1.msra.mxu0 0.0
      %353 = vmatprep.subr.mxu0 0.0
      %354 = vmatpush1.msra.mxu0 0.0
      %355 = vmatprep.subr.mxu0 0.0
      %356 = vmatpush1.msra.mxu0 0.0
      %357 = vmatprep.subr.mxu0 0.0
      %358 = vmatpush1.msra.mxu0 0.0
      %359 = vmatprep.subr.mxu0 0.0
      %360 = vmatpush1.msra.mxu0 0.0
      %361 = vmatprep.subr.mxu0 0.0
      %362 = vmatpush1.msra.mxu0 0.0
      %363 = vmatprep.subr.mxu0 0.0
      %364 = vmatpush1.msra.mxu0 0.0
      %365 = vmatprep.subr.mxu0 0.0
      %366 = vmatpush1.msra.mxu0 0.0
      %367 = vmatprep.subr.mxu0 0.0
      %368 = vmatpush1.msra.mxu0 0.0
      %369 = vmatprep.subr.mxu0 0.0
      %370 = vmatpush1.msra.mxu0 0.0
      %371 = vmatprep.subr.mxu0 0.0
      %372 = vmatpush1.msra.mxu0 0.0
      %373 = vmatprep.subr.mxu0 0.0
      %374 = vmatpush1.msra.mxu0 0.0
      %375 = vmatprep.subr.mxu0 0.0
      %376 = vmatpush1.msra.mxu0 0.0
      %377 = vmatprep.subr.mxu0 0.0
      %378 = vmatpush1.msra.mxu0 0.0
      %379 = vmatprep.subr.mxu0 0.0
      %380 = vmatpush1.msra.mxu0 0.0
      %381 = vmatprep.mubr.f32.mxu0 0.0
      %382 = vmatmul.mubr.f32.gmra.mrb[0].mxu0 %v302
      %v383 = vpop.f32.mrb[0].mxu0
      %v384 = vadd.f32 %v288, %v383
      %v385 = vpop.f32.mrb[0].mxu0
      %v386 = vadd.f32 %v288, %v385
      %387 = vmatprep.mubr.f32.mxu0 0.0
      %388 = vmatmul.mubr.f32.gmra.mrb[0].mxu0 %v305
      %v389 = vpop.f32.mrb[0].mxu0
      %v390 = vadd.f32 %v293, %v389
      %v391 = vpop.f32.mrb[0].mxu0
      %v392 = vadd.f32 %v293, %v391
      %393 = vmatprep.mubr.f32.mxu0 0.0
      %394 = vmatmul.mubr.f32.gmra.mrb[0].mxu0 %v308
      %v395 = vpop.f32.mrb[0].mxu0
      %v396 = vadd.f32 %v298, %v395
      %v397 = vpop.f32.mrb[0].mxu0
      %v398 = vadd.f32 %v298, %v397
      %399 = vdwg.mxu0
      %v400 = vld [vmem:[%s261] sm:$0xff]
      %v401 = vld [vmem:[%s261 + $0x8] sm:$0xff]
      %v402 = vld [vmem:[%s261 + $0x10] sm:$0xff]
      %v403 = vld [vmem:[%s261 + $0x18] sm:$0xff]
      %v404 = vld [vmem:[%s261 + $0x20] sm:$0xf]
      %v405 = vld [vmem:[%s261 + $0x28] sm:$0xf]
      %v406 = vadd.f32 %v384, %v400
      %v407 = vadd.f32 %v386, %v401
      %v408 = vadd.f32 %v390, %v402
      %v409 = vadd.f32 %v392, %v403
      %v410 = vadd.f32 %v396, %v404
      %v411 = vadd.f32 %v398, %v405
      %412 = vst [vmem:[%s271] sm:$0xff] %v406
      %413 = vst [vmem:[%s271 + $0x8] sm:$0xff] %v407
      %414 = vst [vmem:[%s271 + $0x10] sm:$0xff] %v408
      %415 = vst [vmem:[%s271 + $0x18] sm:$0xff] %v409
      %416 = vst [vmem:[%s271 + $0x20] sm:$0xf] %v410
      %417 = vst [vmem:[%s271 + $0x28] sm:$0xf] %v411
      %s418 = smul.u32 2, %s20
      %p419 = scmp.lt.s32.totalorder %s19, 1
      %s420 = scalar_select %p419, %s19, 1
      %p421 = scmp.lt.s32.totalorder %s418, 1
      %s422 = scalar_select %p421, %s418, 1
      %s423 = smul.addr %s420, 6
      %s424 = sadd.s32 %s422, %s423
      %s425 = smul.addr %s424, 8
      %s426 = scalar_lea.vmem %s4, %s425
      // Predicated region
      $region37: #{simple_block3d_forward.16} parent=35 // pred_check
        %p427 = pneg %p145
      $region38: #{simple_block3d_forward.16} parent=35 // pred_check_branch
        %429 = sbr.rel (%p427) target = $region40
      $region39: #{simple_block3d_forward.16} parent=35 // pred_region
        %s430 = smul.u32 2, %s20
      $region40: #{simple_block3d_forward.16} parent=35 // pred_fallthru
        _
    $region36: #{simple_block3d_forward.16} parent=5 // pred_fallthru
      _
    %p431 = scmp.le.s32.totalorder 2, %s10
    // Predicated region
    $region41: #{simple_block3d_forward.16} parent=5 // pred_check
      %p432 = pneg %p431
    $region42: #{simple_block3d_forward.16} parent=5 // pred_check_branch
      %434 = sbr.rel (%p432) target = $region44
    $region43: #{simple_block3d_forward.16} parent=5 // pred_region
      %s435 = ssub.s32 %s10, 2
      // Predicated region
      $region45: #{simple_block3d_forward.16} parent=43 // pred_check
        %p436 = pneg %p151
      $region46: #{simple_block3d_forward.16} parent=43 // pred_check_branch
        %438 = sbr.rel (%p436) target = $region48
      $region47: #{simple_block3d_forward.16} parent=43 // pred_region
        %s439 = smul.u32 2, %s22
        %p440 = scmp.lt.s32.totalorder %s21, 1
        %s441 = scalar_select %p440, %s21, 1
        %p442 = scmp.lt.s32.totalorder %s439, 1
        %s443 = scalar_select %p442, %s439, 1
        %s444 = smul.addr %s441, 6
        %s445 = sadd.s32 %s443, %s444
        %s446 = smul.addr %s445, 8
        %s447 = scalar_lea.vmem %s4, %s446
      $region48: #{simple_block3d_forward.16} parent=43 // pred_fallthru
        _
    $region44: #{simple_block3d_forward.16} parent=5 // pred_fallthru
      _
  $region6: #{simple_block3d_forward.16} parent=0 // loop_footer
    %s14 = sadd.s32 1, %s10
  $region7: #{simple_block3d_forward.16} parent=0 // loop_footer_branch
    %9 = sbr.rel target = $region3
  $region8: #{simple_block3d_forward.16} parent=0 // loop_exit
    _

// kernel: simple_block3d_forward.17
$region0: #{simple_block3d_forward.17}
  #allocation0 [shape = 'u32[]', space=smem, size = 0x4, offset = 0x4, fixed_abs, tag = 'smem constant byte address 0x4 - core index']
  #allocation1 [shape = 'u32[144,128]{1,0:T(1,128)}', space=vmem, size = 0x12000, scoped, tag = 'internal scratch']
  #allocation2 [shape = 'f32[128,256]{1,0:T(8,128)}', space=vmem, size = 0x20000, scoped, tag = 'scratch operand']
  %s0 = inlined_call_operand.vmem [shape: f32[2,20,256], index: 0, kind: input, shape index: {}]
  %s1 = inlined_call_operand.vmem [shape: f32[128,20], index: 1, kind: input, shape index: {}]
  %s2 = inlined_call_operand.vmem [shape: f32[128,1], index: 2, kind: input, shape index: {}]
  %s3 = inlined_call_operand.vmem [shape: f32[4,128], index: 3, kind: input, shape index: {}]
  %s4 = inlined_call_operand.vmem [shape: f32[4,1], index: 4, kind: input, shape index: {}]
  %s5 = inlined_call_operand.vmem [shape: f32[2,4,256], index: 5, kind: output, shape index: {}]
  %s6 = sld [smem:[#allocation0]]
  $region53: #{simple_block3d_forward.17} parent=0
    _
  %s8 = ssub.s32 1, %s6
  %s9 = scalar_select 0, %s8, %s6
  loop: start=0, step=1, limit=4
  $region2: #{simple_block3d_forward.17} parent=0 // loop_pre_header
    _
  $region3: #{simple_block3d_forward.17} parent=0 // loop_header
    %s11 = sphi 0, %s15
    %p12 = scmp.ge.s32.totalorder %s11, 4
    %s18 = sphi 0, %s30
    %s19 = sphi 0, %s26
    %s20 = sphi 0, %s18
    %s21 = sphi 0, %s19
    %s22 = sphi 0, %s20
    %s23 = sphi 0, %s21
    %s35 = sphi 0, %s37
    %s38 = sphi 0, %s35
    %s39 = sphi 0, %s38
    %s55 = sphi 0, %s39
    %s59 = sphi 0, %s59
    %s61 = sphi 0, %s59
    %s62 = sphi 0, %s61
    %s76 = sphi 0, %s62
    %s80 = sphi 0, %s80
    %s82 = sphi 0, %s80
    %s83 = sphi 0, %s82
    %s97 = sphi 0, %s83
    %s101 = sphi 0, %s101
    %s103 = sphi 0, %s101
    %s104 = sphi 0, %s103
    %s118 = sphi 0, %s104
    %s122 = sphi 0, %s122
    %s124 = sphi 0, %s122
    %s125 = sphi 0, %s124
    %s139 = sphi 0, %s125
    %s147 = sphi 0, %s149
    %s150 = sphi 0, %s147
    %s151 = sphi 0, %s150
    %s167 = sphi 0, %s151
  $region4: #{simple_block3d_forward.17} parent=0 // loop_header_branch
    %14 = sbr.rel (%p12) target = $region8
  $region5: #{simple_block3d_forward.17} parent=0 // loop_body
    %s16 = ssub.s32 %s11, 1
    %s17 = ssub.s32 %s11, 2
    %s24 = sadd.s32 1, %s19
    %p25 = scmp.ge.s32.totalorder %s24, 1
    %s26 = scalar_select %p25, 0, %s24
    %s27 = sadd.s32 1, %s18
    %s28 = scalar_select %p25, %s27, %s18
    %p29 = scmp.ge.s32.totalorder %s28, 2
    %s30 = scalar_select %p29, 0, %s28
    %s31 = ssub.s32 %s18, %s30
    %s32 = ssub.s32 %s19, %s26
    %s33 = sor.u32 %s31, %s32
    %p34 = scmp.eq.s32.totalorder %s33, 0
    %s36 = sadd.s32 %s35, 1
    %s37 = scalar_select %p34, %s35, %s36
    %p40 = pneg %p34
    %p41 = scmp.eq.s32.totalorder %s11, 1
    %p42 = por %p40, %p41
    %p43 = scmp.ne.s32.totalorder %s35, %s38
    %p44 = scmp.eq.s32.totalorder %s11, 0
    %p45 = por %p43, %p44
    %p46 = scmp.ne.s32.totalorder %s35, %s38
    %p47 = scmp.eq.s32.totalorder %s16, 1
    %p48 = por %p46, %p47
    %p49 = scmp.ne.s32.totalorder %s38, %s39
    %p50 = scmp.eq.s32.totalorder %s16, 0
    %p51 = por %p49, %p50
    %p52 = scmp.ne.s32.totalorder %s38, %s39
    %p53 = scmp.eq.s32.totalorder %s17, 1
    %p54 = por %p52, %p53
    %p56 = scmp.ne.s32.totalorder %s39, %s55
    %p57 = scmp.eq.s32.totalorder %s17, 0
    %p58 = por %p56, %p57
    %s60 = sadd.s32 %s59, 1
    %p63 = scmp.eq.s32.totalorder %s11, 1
    %p64 = scmp.ne.s32.totalorder %s59, %s61
    %p65 = scmp.eq.s32.totalorder %s11, 0
    %p66 = por %p64, %p65
    %p67 = scmp.ne.s32.totalorder %s59, %s61
    %p68 = scmp.eq.s32.totalorder %s16, 1
    %p69 = por %p67, %p68
    %p70 = scmp.ne.s32.totalorder %s61, %s62
    %p71 = scmp.eq.s32.totalorder %s16, 0
    %p72 = por %p70, %p71
    %p73 = scmp.ne.s32.totalorder %s61, %s62
    %p74 = scmp.eq.s32.totalorder %s17, 1
    %p75 = por %p73, %p74
    %p77 = scmp.ne.s32.totalorder %s62, %s76
    %p78 = scmp.eq.s32.totalorder %s17, 0
    %p79 = por %p77, %p78
    %s81 = sadd.s32 %s80, 1
    %p84 = scmp.eq.s32.totalorder %s11, 1
    %p85 = scmp.ne.s32.totalorder %s80, %s82
    %p86 = scmp.eq.s32.totalorder %s11, 0
    %p87 = por %p85, %p86
    %p88 = scmp.ne.s32.totalorder %s80, %s82
    %p89 = scmp.eq.s32.totalorder %s16, 1
    %p90 = por %p88, %p89
    %p91 = scmp.ne.s32.totalorder %s82, %s83
    %p92 = scmp.eq.s32.totalorder %s16, 0
    %p93 = por %p91, %p92
    %p94 = scmp.ne.s32.totalorder %s82, %s83
    %p95 = scmp.eq.s32.totalorder %s17, 1
    %p96 = por %p94, %p95
    %p98 = scmp.ne.s32.totalorder %s83, %s97
    %p99 = scmp.eq.s32.totalorder %s17, 0
    %p100 = por %p98, %p99
    %s102 = sadd.s32 %s101, 1
    %p105 = scmp.eq.s32.totalorder %s11, 1
    %p106 = scmp.ne.s32.totalorder %s101, %s103
    %p107 = scmp.eq.s32.totalorder %s11, 0
    %p108 = por %p106, %p107
    %p109 = scmp.ne.s32.totalorder %s101, %s103
    %p110 = scmp.eq.s32.totalorder %s16, 1
    %p111 = por %p109, %p110
    %p112 = scmp.ne.s32.totalorder %s103, %s104
    %p113 = scmp.eq.s32.totalorder %s16, 0
    %p114 = por %p112, %p113
    %p115 = scmp.ne.s32.totalorder %s103, %s104
    %p116 = scmp.eq.s32.totalorder %s17, 1
    %p117 = por %p115, %p116
    %p119 = scmp.ne.s32.totalorder %s104, %s118
    %p120 = scmp.eq.s32.totalorder %s17, 0
    %p121 = por %p119, %p120
    %s123 = sadd.s32 %s122, 1
    %p126 = scmp.eq.s32.totalorder %s11, 1
    %p127 = scmp.ne.s32.totalorder %s122, %s124
    %p128 = scmp.eq.s32.totalorder %s11, 0
    %p129 = por %p127, %p128
    %p130 = scmp.ne.s32.totalorder %s122, %s124
    %p131 = scmp.eq.s32.totalorder %s16, 1
    %p132 = por %p130, %p131
    %p133 = scmp.ne.s32.totalorder %s124, %s125
    %p134 = scmp.eq.s32.totalorder %s16, 0
    %p135 = por %p133, %p134
    %p136 = scmp.ne.s32.totalorder %s124, %s125
    %p137 = scmp.eq.s32.totalorder %s17, 1
    %p138 = por %p136, %p137
    %p140 = scmp.ne.s32.totalorder %s125, %s139
    %p141 = scmp.eq.s32.totalorder %s17, 0
    %p142 = por %p140, %p141
    %s143 = ssub.s32 %s18, %s30
    %s144 = ssub.s32 %s19, %s26
    %s145 = sor.u32 %s143, %s144
    %p146 = scmp.eq.s32.totalorder %s145, 0
    %s148 = sadd.s32 %s147, 1
    %s149 = scalar_select %p146, %s147, %s148
    %p152 = pneg %p146
    %p153 = scmp.eq.s32.totalorder %s11, 1
    %p154 = por %p152, %p153
    %p155 = scmp.ne.s32.totalorder %s147, %s150
    %p156 = scmp.eq.s32.totalorder %s11, 0
    %p157 = por %p155, %p156
    %p158 = scmp.ne.s32.totalorder %s147, %s150
    %p159 = scmp.eq.s32.totalorder %s16, 1
    %p160 = por %p158, %p159
    %p161 = scmp.ne.s32.totalorder %s150, %s151
    %p162 = scmp.eq.s32.totalorder %s16, 0
    %p163 = por %p161, %p162
    %p164 = scmp.ne.s32.totalorder %s150, %s151
    %p165 = scmp.eq.s32.totalorder %s17, 1
    %p166 = por %p164, %p165
    %p168 = scmp.ne.s32.totalorder %s151, %s167
    %p169 = scmp.eq.s32.totalorder %s17, 0
    %p170 = por %p168, %p169
    %p171 = scmp.le.s32.totalorder 1, %s11
    %p172 = scmp.lt.s32.totalorder %s11, 3
    %p173 = pnand %p171, %p172
    %p174 = pneg %p173
    // Predicated region
    $region9: #{simple_block3d_forward.17} parent=5 // pred_check
      _
    $region10: #{simple_block3d_forward.17} parent=5 // pred_check_branch
      %176 = sbr.rel (%p173) target = $region12
    $region11: #{simple_block3d_forward.17} parent=5 // pred_region
      %s177 = ssub.s32 %s11, 1
      // Predicated region
      $region13: #{simple_block3d_forward.17} parent=11 // pred_check
        %p178 = pneg %p72
      $region14: #{simple_block3d_forward.17} parent=11 // pred_check_branch
        %180 = sbr.rel (%p178) target = $region16
      $region15: #{simple_block3d_forward.17} parent=11 // pred_region
        _
      $region16: #{simple_block3d_forward.17} parent=11 // pred_fallthru
        _
      // Predicated region
      $region17: #{simple_block3d_forward.17} parent=11 // pred_check
        %p181 = pneg %p93
      $region18: #{simple_block3d_forward.17} parent=11 // pred_check_branch
        %183 = sbr.rel (%p181) target = $region20
      $region19: #{simple_block3d_forward.17} parent=11 // pred_region
        _
      $region20: #{simple_block3d_forward.17} parent=11 // pred_fallthru
        _
      // Predicated region
      $region21: #{simple_block3d_forward.17} parent=11 // pred_check
        %p184 = pneg %p114
      $region22: #{simple_block3d_forward.17} parent=11 // pred_check_branch
        %186 = sbr.rel (%p184) target = $region24
      $region23: #{simple_block3d_forward.17} parent=11 // pred_region
        _
      $region24: #{simple_block3d_forward.17} parent=11 // pred_fallthru
        _
      // Predicated region
      $region25: #{simple_block3d_forward.17} parent=11 // pred_check
        %p187 = pneg %p135
      $region26: #{simple_block3d_forward.17} parent=11 // pred_check_branch
        %189 = sbr.rel (%p187) target = $region28
      $region27: #{simple_block3d_forward.17} parent=11 // pred_region
        _
      $region28: #{simple_block3d_forward.17} parent=11 // pred_fallthru
        _
    $region12: #{simple_block3d_forward.17} parent=5 // pred_fallthru
      _
    %p190 = scmp.lt.s32.totalorder %s11, 2
    // Predicated region
    $region29: #{simple_block3d_forward.17} parent=5 // pred_check
      %p191 = pneg %p190
    $region30: #{simple_block3d_forward.17} parent=5 // pred_check_branch
      %193 = sbr.rel (%p191) target = $region32
    $region31: #{simple_block3d_forward.17} parent=5 // pred_region
      // Predicated region
      $region33: #{simple_block3d_forward.17} parent=31 // pred_check
        %p194 = pneg %p45
      $region34: #{simple_block3d_forward.17} parent=31 // pred_check_branch
        %196 = sbr.rel (%p194) target = $region36
      $region35: #{simple_block3d_forward.17} parent=31 // pred_region
        %s197 = smul.u32 2, %s19
        %p198 = scmp.lt.s32.totalorder %s18, 1
        %s199 = scalar_select %p198, %s18, 1
        %p200 = scmp.lt.s32.totalorder %s197, 1
        %s201 = scalar_select %p200, %s197, 1
        %s202 = smul.addr %s199, 6
        %s203 = sadd.s32 %s201, %s202
        %s204 = smul.addr %s203, 8
        %s205 = scalar_lea.vmem %s0, %s204
        %s206 = smul.u32 2, %s19
      $region36: #{simple_block3d_forward.17} parent=31 // pred_fallthru
        _
    $region32: #{simple_block3d_forward.17} parent=5 // pred_fallthru
      _
    %p207 = scmp.le.s32.totalorder 1, %s11
    %p208 = scmp.lt.s32.totalorder %s11, 3
    %p209 = pnand %p207, %p208
    %p210 = pneg %p209
    // Predicated region
    $region37: #{simple_block3d_forward.17} parent=5 // pred_check
      _
    $region38: #{simple_block3d_forward.17} parent=5 // pred_check_branch
      %212 = sbr.rel (%p209) target = $region40
    $region39: #{simple_block3d_forward.17} parent=5 // pred_region
      %s213 = ssub.s32 %s11, 1
      %s214 = smul.u32 2, %s21
      %p215 = scmp.lt.s32.totalorder %s20, 1
      %s216 = scalar_select %p215, %s20, 1
      %p217 = scmp.lt.s32.totalorder %s214, 1
      %s218 = scalar_select %p217, %s214, 1
      %s219 = smul.addr %s216, 6
      %s220 = sadd.s32 %s218, %s219
      %s221 = smul.addr %s220, 8
      %s222 = scalar_lea.vmem %s0, %s221
      %p223 = pneg %p51
      %p224 = pneg %p48
      %p225 = pneg %p72
      %p226 = pneg %p69
      %p227 = pneg %p93
      %p228 = pneg %p90
      %p229 = pneg %p114
      %p230 = pneg %p111
      %p231 = pneg %p135
      %p232 = pneg %p132
      %p233 = pneg %p163
      %p234 = pneg %p160
      %s235 = smul.u32 2, %s21
      %p236 = scmp.lt.s32.totalorder %s20, 1
      %s237 = scalar_select %p236, %s20, 1
      %p238 = scmp.lt.s32.totalorder %s235, 1
      %s239 = scalar_select %p238, %s235, 1
      %s240 = smul.addr %s237, 2
      %s241 = sadd.s32 %s239, %s240
      %s242 = smul.addr %s241, 4
      %s243 = scalar_lea.vmem %s5, %s242
      %s244 = smul.u32 2, %s21
      %p245 = scmp.lt.s32.totalorder %s20, 1
      %s246 = scalar_select %p245, %s20, 1
      %p247 = scmp.lt.s32.totalorder %s244, 1
      %s248 = scalar_select %p247, %s244, 1
      %s249 = smul.addr %s246, 6
      %s250 = sadd.s32 %s248, %s249
      %s251 = smul.addr %s250, 8
      %s252 = scalar_lea.vmem %s0, %s251
      %s253 = smul.u32 2, %s21
      %s254 = smul.u32 2, %s21
      %p255 = scmp.lt.s32.totalorder %s20, 1
      %s256 = scalar_select %p255, %s20, 1
      %p257 = scmp.lt.s32.totalorder %s254, 1
      %s258 = scalar_select %p257, %s254, 1
      %s259 = smul.addr %s256, 2
      %s260 = sadd.s32 %s258, %s259
      %s261 = smul.addr %s260, 4
      %s262 = scalar_lea.vmem %s5, %s261
      %s263 = smul.u32 2, %s21
      %v264 = vld [vmem:[%s1] sm:$0xff]
      %v265 = vld [vmem:[%s1 + $0x8] sm:$0xff]
      %v266 = vld [vmem:[%s1 + $0x10] sm:$0xff]
      %v267 = vld [vmem:[%s1 + $0x18] sm:$0xff]
      %v268 = vld [vmem:[%s1 + $0x20] sm:$0xff]
      %v269 = vld [vmem:[%s1 + $0x28] sm:$0xff]
      %v270 = vld [vmem:[%s1 + $0x30] sm:$0xff]
      %v271 = vld [vmem:[%s1 + $0x38] sm:$0xff]
      %v272 = vld [vmem:[%s1 + $0x40] sm:$0xff]
      %v273 = vld [vmem:[%s1 + $0x48] sm:$0xff]
      %v274 = vld [vmem:[%s1 + $0x50] sm:$0xff]
      %v275 = vld [vmem:[%s1 + $0x58] sm:$0xff]
      %v276 = vld [vmem:[%s1 + $0x60] sm:$0xff]
      %v277 = vld [vmem:[%s1 + $0x68] sm:$0xff]
      %v278 = vld [vmem:[%s1 + $0x70] sm:$0xff]
      %v279 = vld [vmem:[%s1 + $0x78] sm:$0xff]
      %v280 = vld [vmem:[%s252] sm:$0xff]
      %v281 = vld [vmem:[%s252 + $0x8] sm:$0xff]
      %v282 = vld [vmem:[%s252 + $0x10] sm:$0xff]
      %v283 = vld [vmem:[%s252 + $0x18] sm:$0xff]
      %v284 = vld [vmem:[%s252 + $0x20] sm:$0xf]
      %v285 = vld [vmem:[%s252 + $0x28] sm:$0xf]
      %v286 = vld [vmem:[%s2] sm:$0xff]
      %v287 = vld [vmem:[%s2 + $0x8] sm:$0xff]
      %v288 = vld [vmem:[%s2 + $0x10] sm:$0xff]
      %v289 = vld [vmem:[%s2 + $0x18] sm:$0xff]
      %v290 = vld [vmem:[%s2 + $0x20] sm:$0xff]
      %v291 = vld [vmem:[%s2 + $0x28] sm:$0xff]
      %v292 = vld [vmem:[%s2 + $0x30] sm:$0xff]
      %v293 = vld [vmem:[%s2 + $0x38] sm:$0xff]
      %v294 = vld [vmem:[%s2 + $0x40] sm:$0xff]
      %v295 = vld [vmem:[%s2 + $0x48] sm:$0xff]
      %v296 = vld [vmem:[%s2 + $0x50] sm:$0xff]
      %v297 = vld [vmem:[%s2 + $0x58] sm:$0xff]
      %v298 = vld [vmem:[%s2 + $0x60] sm:$0xff]
      %v299 = vld [vmem:[%s2 + $0x68] sm:$0xff]
      %v300 = vld [vmem:[%s2 + $0x70] sm:$0xff]
      %v301 = vld [vmem:[%s2 + $0x78] sm:$0xff]
      %303 = vset.pattern.permute.xlu0 0
      %304 = vperm.xlu0 %303, %v286
      %v305 = vpop.permute.xlu0 %304
      %308 = vset.pattern.permute.xlu0 0
      %309 = vperm.xlu0 %308, %v287
      %v310 = vpop.permute.xlu0 %309
      %313 = vset.pattern.permute.xlu0 0
      %314 = vperm.xlu0 %313, %v288
      %v315 = vpop.permute.xlu0 %314
      %318 = vset.pattern.permute.xlu0 0
      %319 = vperm.xlu0 %318, %v289
      %v320 = vpop.permute.xlu0 %319
      %323 = vset.pattern.permute.xlu0 0
      %324 = vperm.xlu0 %323, %v290
      %v325 = vpop.permute.xlu0 %324
      %328 = vset.pattern.permute.xlu0 0
      %329 = vperm.xlu0 %328, %v291
      %v330 = vpop.permute.xlu0 %329
      %333 = vset.pattern.permute.xlu0 0
      %334 = vperm.xlu0 %333, %v292
      %v335 = vpop.permute.xlu0 %334
      %338 = vset.pattern.permute.xlu0 0
      %339 = vperm.xlu0 %338, %v293
      %v340 = vpop.permute.xlu0 %339
      %343 = vset.pattern.permute.xlu0 0
      %344 = vperm.xlu0 %343, %v294
      %v345 = vpop.permute.xlu0 %344
      %348 = vset.pattern.permute.xlu0 0
      %349 = vperm.xlu0 %348, %v295
      %v350 = vpop.permute.xlu0 %349
      %353 = vset.pattern.permute.xlu0 0
      %354 = vperm.xlu0 %353, %v296
      %v355 = vpop.permute.xlu0 %354
      %358 = vset.pattern.permute.xlu0 0
      %359 = vperm.xlu0 %358, %v297
      %v360 = vpop.permute.xlu0 %359
      %363 = vset.pattern.permute.xlu0 0
      %364 = vperm.xlu0 %363, %v298
      %v365 = vpop.permute.xlu0 %364
      %368 = vset.pattern.permute.xlu0 0
      %369 = vperm.xlu0 %368, %v299
      %v370 = vpop.permute.xlu0 %369
      %373 = vset.pattern.permute.xlu0 0
      %374 = vperm.xlu0 %373, %v300
      %v375 = vpop.permute.xlu0 %374
      %378 = vset.pattern.permute.xlu0 0
      %379 = vperm.xlu0 %378, %v301
      %v380 = vpop.permute.xlu0 %379
      %vm382 = vcmask 162816
      %v384 = vsel %vm382, %v264, 0
      %v387 = vsel %vm382, %v265, 0
      %v390 = vsel %vm382, %v266, 0
      %v393 = vsel %vm382, %v267, 0
      %v396 = vsel %vm382, %v268, 0
      %v399 = vsel %vm382, %v269, 0
      %v402 = vsel %vm382, %v270, 0
      %v405 = vsel %vm382, %v271, 0
      %v408 = vsel %vm382, %v272, 0
      %v411 = vsel %vm382, %v273, 0
      %v414 = vsel %vm382, %v274, 0
      %v417 = vsel %vm382, %v275, 0
      %v420 = vsel %vm382, %v276, 0
      %v423 = vsel %vm382, %v277, 0
      %v426 = vsel %vm382, %v278, 0
      %v429 = vsel %vm382, %v279, 0
      %vm431 = vcmask 1043456
      %v433 = vsel %vm431, %v284, 0
      %v436 = vsel %vm431, %v285, 0
      %438 = vmatprep.subr.mxu0 %v281
      %439 = vmatpush1.msra.mxu0 %v280
      %440 = vmatprep.subr.mxu0 %v283
      %441 = vmatpush1.msra.mxu0 %v282
      %442 = vmatprep.subr.mxu0 %v436
      %443 = vmatpush1.msra.mxu0 %v433
      %444 = vmatprep.subr.mxu0 0.0
      %445 = vmatpush1.msra.mxu0 0.0
      %446 = vmatprep.subr.mxu0 0.0
      %447 = vmatpush1.msra.mxu0 0.0
      %448 = vmatprep.subr.mxu0 0.0
      %449 = vmatpush1.msra.mxu0 0.0
      %450 = vmatprep.subr.mxu0 0.0
      %451 = vmatpush1.msra.mxu0 0.0
      %452 = vmatprep.subr.mxu0 0.0
      %453 = vmatpush1.msra.mxu0 0.0
      %454 = vmatprep.subr.mxu0 0.0
      %455 = vmatpush1.msra.mxu0 0.0
      %456 = vmatprep.subr.mxu0 0.0
      %457 = vmatpush1.msra.mxu0 0.0
      %458 = vmatprep.subr.mxu0 0.0
      %459 = vmatpush1.msra.mxu0 0.0
      %460 = vmatprep.subr.mxu0 0.0
      %461 = vmatpush1.msra.mxu0 0.0
      %462 = vmatprep.subr.mxu0 0.0
      %463 = vmatpush1.msra.mxu0 0.0
      %464 = vmatprep.subr.mxu0 0.0
      %465 = vmatpush1.msra.mxu0 0.0
      %466 = vmatprep.subr.mxu0 0.0
      %467 = vmatpush1.msra.mxu0 0.0
      %468 = vmatprep.subr.mxu0 0.0
      %469 = vmatpush1.msra.mxu0 0.0
      %470 = vmatprep.subr.mxu0 0.0
      %471 = vmatpush1.msra.mxu0 0.0
      %472 = vmatprep.subr.mxu0 0.0
      %473 = vmatpush1.msra.mxu0 0.0
      %474 = vmatprep.subr.mxu0 0.0
      %475 = vmatpush1.msra.mxu0 0.0
      %476 = vmatprep.subr.mxu0 0.0
      %477 = vmatpush1.msra.mxu0 0.0
      %478 = vmatprep.subr.mxu0 0.0
      %479 = vmatpush1.msra.mxu0 0.0
      %480 = vmatprep.subr.mxu0 0.0
      %481 = vmatpush1.msra.mxu0 0.0
      %482 = vmatprep.subr.mxu0 0.0
      %483 = vmatpush1.msra.mxu0 0.0
      %484 = vmatprep.subr.mxu0 0.0
      %485 = vmatpush1.msra.mxu0 0.0
      %486 = vmatprep.subr.mxu0 0.0
      %487 = vmatpush1.msra.mxu0 0.0
      %488 = vmatprep.subr.mxu0 0.0
      %489 = vmatpush1.msra.mxu0 0.0
      %490 = vmatprep.subr.mxu0 0.0
      %491 = vmatpush1.msra.mxu0 0.0
      %492 = vmatprep.subr.mxu0 0.0
      %493 = vmatpush1.msra.mxu0 0.0
      %494 = vmatprep.subr.mxu0 0.0
      %495 = vmatpush1.msra.mxu0 0.0
      %496 = vmatprep.subr.mxu0 0.0
      %497 = vmatpush1.msra.mxu0 0.0
      %498 = vmatprep.subr.mxu0 0.0
      %499 = vmatpush1.msra.mxu0 0.0
      %500 = vmatprep.subr.mxu0 0.0
      %501 = vmatpush1.msra.mxu0 0.0
      %502 = vmatprep.mubr.f32.mxu0 0.0
      %503 = vmatmul.mubr.f32.gmra.mrb[0].mxu0 %v384
      %v504 = vpop.f32.mrb[0].mxu0
      %v505 = vadd.f32 %v305, %v504
      %v506 = vpop.f32.mrb[0].mxu0
      %v507 = vadd.f32 %v305, %v506
      %508 = vmatprep.mubr.f32.mxu0 0.0
      %509 = vmatmul.mubr.f32.gmra.mrb[0].mxu0 %v387
      %v510 = vpop.f32.mrb[0].mxu0
      %v511 = vadd.f32 %v310, %v510
      %v512 = vpop.f32.mrb[0].mxu0
      %v513 = vadd.f32 %v310, %v512
      %514 = vmatprep.mubr.f32.mxu0 0.0
      %515 = vmatmul.mubr.f32.gmra.mrb[0].mxu0 %v390
      %v516 = vpop.f32.mrb[0].mxu0
      %v517 = vadd.f32 %v315, %v516
      %v518 = vpop.f32.mrb[0].mxu0
      %v519 = vadd.f32 %v315, %v518
      %520 = vmatprep.mubr.f32.mxu0 0.0
      %521 = vmatmul.mubr.f32.gmra.mrb[0].mxu0 %v393
      %v522 = vpop.f32.mrb[0].mxu0
      %v523 = vadd.f32 %v320, %v522
      %v524 = vpop.f32.mrb[0].mxu0
      %v525 = vadd.f32 %v320, %v524
      %526 = vmatprep.mubr.f32.mxu0 0.0
      %527 = vmatmul.mubr.f32.gmra.mrb[0].mxu0 %v396
      %v528 = vpop.f32.mrb[0].mxu0
      %v529 = vadd.f32 %v325, %v528
      %v530 = vpop.f32.mrb[0].mxu0
      %v531 = vadd.f32 %v325, %v530
      %532 = vmatprep.mubr.f32.mxu0 0.0
      %533 = vmatmul.mubr.f32.gmra.mrb[0].mxu0 %v399
      %v534 = vpop.f32.mrb[0].mxu0
      %v535 = vadd.f32 %v330, %v534
      %v536 = vpop.f32.mrb[0].mxu0
      %v537 = vadd.f32 %v330, %v536
      %538 = vmatprep.mubr.f32.mxu0 0.0
      %539 = vmatmul.mubr.f32.gmra.mrb[0].mxu0 %v402
      %v540 = vpop.f32.mrb[0].mxu0
      %v541 = vadd.f32 %v335, %v540
      %v542 = vpop.f32.mrb[0].mxu0
      %v543 = vadd.f32 %v335, %v542
      %544 = vmatprep.mubr.f32.mxu0 0.0
      %545 = vmatmul.mubr.f32.gmra.mrb[0].mxu0 %v405
      %v546 = vpop.f32.mrb[0].mxu0
      %v547 = vadd.f32 %v340, %v546
      %v548 = vpop.f32.mrb[0].mxu0
      %v549 = vadd.f32 %v340, %v548
      %550 = vmatprep.mubr.f32.mxu0 0.0
      %551 = vmatmul.mubr.f32.gmra.mrb[0].mxu0 %v408
      %v552 = vpop.f32.mrb[0].mxu0
      %v553 = vadd.f32 %v345, %v552
      %v554 = vpop.f32.mrb[0].mxu0
      %v555 = vadd.f32 %v345, %v554
      %556 = vmatprep.mubr.f32.mxu0 0.0
      %557 = vmatmul.mubr.f32.gmra.mrb[0].mxu0 %v411
      %v558 = vpop.f32.mrb[0].mxu0
      %v559 = vadd.f32 %v350, %v558
      %v560 = vpop.f32.mrb[0].mxu0
      %v561 = vadd.f32 %v350, %v560
      %562 = vmatprep.mubr.f32.mxu0 0.0
      %563 = vmatmul.mubr.f32.gmra.mrb[0].mxu0 %v414
      %v564 = vpop.f32.mrb[0].mxu0
      %v565 = vadd.f32 %v355, %v564
      %v566 = vpop.f32.mrb[0].mxu0
      %v567 = vadd.f32 %v355, %v566
      %568 = vmatprep.mubr.f32.mxu0 0.0
      %569 = vmatmul.mubr.f32.gmra.mrb[0].mxu0 %v417
      %v570 = vpop.f32.mrb[0].mxu0
      %v571 = vadd.f32 %v360, %v570
      %v572 = vpop.f32.mrb[0].mxu0
      %v573 = vadd.f32 %v360, %v572
      %574 = vmatprep.mubr.f32.mxu0 0.0
      %575 = vmatmul.mubr.f32.gmra.mrb[0].mxu0 %v420
      %v576 = vpop.f32.mrb[0].mxu0
      %v577 = vadd.f32 %v365, %v576
      %v578 = vpop.f32.mrb[0].mxu0
      %v579 = vadd.f32 %v365, %v578
      %580 = vmatprep.mubr.f32.mxu0 0.0
      %581 = vmatmul.mubr.f32.gmra.mrb[0].mxu0 %v423
      %v582 = vpop.f32.mrb[0].mxu0
      %v583 = vadd.f32 %v370, %v582
      %v584 = vpop.f32.mrb[0].mxu0
      %v585 = vadd.f32 %v370, %v584
      %586 = vmatprep.mubr.f32.mxu0 0.0
      %587 = vmatmul.mubr.f32.gmra.mrb[0].mxu0 %v426
      %v588 = vpop.f32.mrb[0].mxu0
      %v589 = vadd.f32 %v375, %v588
      %v590 = vpop.f32.mrb[0].mxu0
      %v591 = vadd.f32 %v375, %v590
      %592 = vmatprep.mubr.f32.mxu0 0.0
      %593 = vmatmul.mubr.f32.gmra.mrb[0].mxu0 %v429
      %v594 = vpop.f32.mrb[0].mxu0
      %v595 = vadd.f32 %v380, %v594
      %v596 = vpop.f32.mrb[0].mxu0
      %v597 = vadd.f32 %v380, %v596
      %598 = vdwg.mxu0
      %v599 = vmax.f32 %v505, 0.0
      %v600 = vmax.f32 %v507, 0.0
      %v601 = vmax.f32 %v511, 0.0
      %v602 = vmax.f32 %v513, 0.0
      %v603 = vmax.f32 %v517, 0.0
      %v604 = vmax.f32 %v519, 0.0
      %v605 = vmax.f32 %v523, 0.0
      %v606 = vmax.f32 %v525, 0.0
      %v607 = vmax.f32 %v529, 0.0
      %v608 = vmax.f32 %v531, 0.0
      %v609 = vmax.f32 %v535, 0.0
      %v610 = vmax.f32 %v537, 0.0
      %v611 = vmax.f32 %v541, 0.0
      %v612 = vmax.f32 %v543, 0.0
      %v613 = vmax.f32 %v547, 0.0
      %v614 = vmax.f32 %v549, 0.0
      %v615 = vmax.f32 %v553, 0.0
      %v616 = vmax.f32 %v555, 0.0
      %v617 = vmax.f32 %v559, 0.0
      %v618 = vmax.f32 %v561, 0.0
      %v619 = vmax.f32 %v565, 0.0
      %v620 = vmax.f32 %v567, 0.0
      %v621 = vmax.f32 %v571, 0.0
      %v622 = vmax.f32 %v573, 0.0
      %v623 = vmax.f32 %v577, 0.0
      %v624 = vmax.f32 %v579, 0.0
      %v625 = vmax.f32 %v583, 0.0
      %v626 = vmax.f32 %v585, 0.0
      %v627 = vmax.f32 %v589, 0.0
      %v628 = vmax.f32 %v591, 0.0
      %v629 = vmax.f32 %v595, 0.0
      %v630 = vmax.f32 %v597, 0.0
      %631 = vst [vmem:[#allocation2] sm:$0xff] %v599
      %632 = vst [vmem:[#allocation2 + $0x8] sm:$0xff] %v600
      %633 = vst [vmem:[#allocation2 + $0x10] sm:$0xff] %v601
      %634 = vst [vmem:[#allocation2 + $0x18] sm:$0xff] %v602
      %635 = vst [vmem:[#allocation2 + $0x20] sm:$0xff] %v603
      %636 = vst [vmem:[#allocation2 + $0x28] sm:$0xff] %v604
      %637 = vst [vmem:[#allocation2 + $0x30] sm:$0xff] %v605
      %638 = vst [vmem:[#allocation2 + $0x38] sm:$0xff] %v606
      %639 = vst [vmem:[#allocation2 + $0x40] sm:$0xff] %v607
      %640 = vst [vmem:[#allocation2 + $0x48] sm:$0xff] %v608
      %641 = vst [vmem:[#allocation2 + $0x50] sm:$0xff] %v609
      %642 = vst [vmem:[#allocation2 + $0x58] sm:$0xff] %v610
      %643 = vst [vmem:[#allocation2 + $0x60] sm:$0xff] %v611
      %644 = vst [vmem:[#allocation2 + $0x68] sm:$0xff] %v612
      %645 = vst [vmem:[#allocation2 + $0x70] sm:$0xff] %v613
      %646 = vst [vmem:[#allocation2 + $0x78] sm:$0xff] %v614
      %647 = vst [vmem:[#allocation2 + $0x80] sm:$0xff] %v615
      %648 = vst [vmem:[#allocation2 + $0x88] sm:$0xff] %v616
      %649 = vst [vmem:[#allocation2 + $0x90] sm:$0xff] %v617
      %650 = vst [vmem:[#allocation2 + $0x98] sm:$0xff] %v618
      %651 = vst [vmem:[#allocation2 + $0xa0] sm:$0xff] %v619
      %652 = vst [vmem:[#allocation2 + $0xa8] sm:$0xff] %v620
      %653 = vst [vmem:[#allocation2 + $0xb0] sm:$0xff] %v621
      %654 = vst [vmem:[#allocation2 + $0xb8] sm:$0xff] %v622
      %655 = vst [vmem:[#allocation2 + $0xc0] sm:$0xff] %v623
      %656 = vst [vmem:[#allocation2 + $0xc8] sm:$0xff] %v624
      %657 = vst [vmem:[#allocation2 + $0xd0] sm:$0xff] %v625
      %658 = vst [vmem:[#allocation2 + $0xd8] sm:$0xff] %v626
      %659 = vst [vmem:[#allocation2 + $0xe0] sm:$0xff] %v627
      %660 = vst [vmem:[#allocation2 + $0xe8] sm:$0xff] %v628
      %661 = vst [vmem:[#allocation2 + $0xf0] sm:$0xff] %v629
      %662 = vst [vmem:[#allocation2 + $0xf8] sm:$0xff] %v630
      %v663 = vld [vmem:[%s3] sm:$0xf]
      %v664 = vld [vmem:[#allocation2] sm:$0xff]
      %v665 = vld [vmem:[#allocation2 + $0x8] sm:$0xff]
      %v666 = vld [vmem:[#allocation2 + $0x10] sm:$0xff]
      %v667 = vld [vmem:[#allocation2 + $0x18] sm:$0xff]
      %v668 = vld [vmem:[#allocation2 + $0x20] sm:$0xff]
      %v669 = vld [vmem:[#allocation2 + $0x28] sm:$0xff]
      %v670 = vld [vmem:[#allocation2 + $0x30] sm:$0xff]
      %v671 = vld [vmem:[#allocation2 + $0x38] sm:$0xff]
      %v672 = vld [vmem:[#allocation2 + $0x40] sm:$0xff]
      %v673 = vld [vmem:[#allocation2 + $0x48] sm:$0xff]
      %v674 = vld [vmem:[#allocation2 + $0x50] sm:$0xff]
      %v675 = vld [vmem:[#allocation2 + $0x58] sm:$0xff]
      %v676 = vld [vmem:[#allocation2 + $0x60] sm:$0xff]
      %v677 = vld [vmem:[#allocation2 + $0x68] sm:$0xff]
      %v678 = vld [vmem:[#allocation2 + $0x70] sm:$0xff]
      %v679 = vld [vmem:[#allocation2 + $0x78] sm:$0xff]
      %v680 = vld [vmem:[#allocation2 + $0x80] sm:$0xff]
      %v681 = vld [vmem:[#allocation2 + $0x88] sm:$0xff]
      %v682 = vld [vmem:[#allocation2 + $0x90] sm:$0xff]
      %v683 = vld [vmem:[#allocation2 + $0x98] sm:$0xff]
      %v684 = vld [vmem:[#allocation2 + $0xa0] sm:$0xff]
      %v685 = vld [vmem:[#allocation2 + $0xa8] sm:$0xff]
      %v686 = vld [vmem:[#allocation2 + $0xb0] sm:$0xff]
      %v687 = vld [vmem:[#allocation2 + $0xb8] sm:$0xff]
      %v688 = vld [vmem:[#allocation2 + $0xc0] sm:$0xff]
      %v689 = vld [vmem:[#allocation2 + $0xc8] sm:$0xff]
      %v690 = vld [vmem:[#allocation2 + $0xd0] sm:$0xff]
      %v691 = vld [vmem:[#allocation2 + $0xd8] sm:$0xff]
      %v692 = vld [vmem:[#allocation2 + $0xe0] sm:$0xff]
      %v693 = vld [vmem:[#allocation2 + $0xe8] sm:$0xff]
      %v694 = vld [vmem:[#allocation2 + $0xf0] sm:$0xff]
      %v695 = vld [vmem:[#allocation2 + $0xf8] sm:$0xff]
      %v696 = vld [vmem:[%s4] sm:$0xf]
      %698 = vset.pattern.permute.xlu0 0
      %699 = vperm.xlu0 %698, %v696
      %v700 = vpop.permute.xlu0 %699
      %702 = vmatprep.subr.mxu0 %v665
      %703 = vmatpush1.msra.mxu0 %v664
      %704 = vmatprep.subr.mxu0 %v667
      %705 = vmatpush1.msra.mxu0 %v666
      %706 = vmatprep.subr.mxu0 %v669
      %707 = vmatpush1.msra.mxu0 %v668
      %708 = vmatprep.subr.mxu0 %v671
      %709 = vmatpush1.msra.mxu0 %v670
      %710 = vmatprep.subr.mxu0 %v673
      %711 = vmatpush1.msra.mxu0 %v672
      %712 = vmatprep.subr.mxu0 %v675
      %713 = vmatpush1.msra.mxu0 %v674
      %714 = vmatprep.subr.mxu0 %v677
      %715 = vmatpush1.msra.mxu0 %v676
      %716 = vmatprep.subr.mxu0 %v679
      %717 = vmatpush1.msra.mxu0 %v678
      %718 = vmatprep.subr.mxu0 %v681
      %719 = vmatpush1.msra.mxu0 %v680
      %720 = vmatprep.subr.mxu0 %v683
      %721 = vmatpush1.msra.mxu0 %v682
      %722 = vmatprep.subr.mxu0 %v685
      %723 = vmatpush1.msra.mxu0 %v684
      %724 = vmatprep.subr.mxu0 %v687
      %725 = vmatpush1.msra.mxu0 %v686
      %726 = vmatprep.subr.mxu0 %v689
      %727 = vmatpush1.msra.mxu0 %v688
      %728 = vmatprep.subr.mxu0 %v691
      %729 = vmatpush1.msra.mxu0 %v690
      %730 = vmatprep.subr.mxu0 %v693
      %731 = vmatpush1.msra.mxu0 %v692
      %732 = vmatprep.subr.mxu0 %v695
      %733 = vmatpush1.msra.mxu0 %v694
      %734 = vmatprep.subr.mxu0 0.0
      %735 = vmatpush1.msra.mxu0 0.0
      %736 = vmatprep.subr.mxu0 0.0
      %737 = vmatpush1.msra.mxu0 0.0
      %738 = vmatprep.subr.mxu0 0.0
      %739 = vmatpush1.msra.mxu0 0.0
      %740 = vmatprep.subr.mxu0 0.0
      %741 = vmatpush1.msra.mxu0 0.0
      %742 = vmatprep.subr.mxu0 0.0
      %743 = vmatpush1.msra.mxu0 0.0
      %744 = vmatprep.subr.mxu0 0.0
      %745 = vmatpush1.msra.mxu0 0.0
      %746 = vmatprep.subr.mxu0 0.0
      %747 = vmatpush1.msra.mxu0 0.0
      %748 = vmatprep.subr.mxu0 0.0
      %749 = vmatpush1.msra.mxu0 0.0
      %750 = vmatprep.subr.mxu0 0.0
      %751 = vmatpush1.msra.mxu0 0.0
      %752 = vmatprep.subr.mxu0 0.0
      %753 = vmatpush1.msra.mxu0 0.0
      %754 = vmatprep.subr.mxu0 0.0
      %755 = vmatpush1.msra.mxu0 0.0
      %756 = vmatprep.subr.mxu0 0.0
      %757 = vmatpush1.msra.mxu0 0.0
      %758 = vmatprep.subr.mxu0 0.0
      %759 = vmatpush1.msra.mxu0 0.0
      %760 = vmatprep.subr.mxu0 0.0
      %761 = vmatpush1.msra.mxu0 0.0
      %762 = vmatprep.subr.mxu0 0.0
      %763 = vmatpush1.msra.mxu0 0.0
      %764 = vmatprep.subr.mxu0 0.0
      %765 = vmatpush1.msra.mxu0 0.0
      %766 = vmatprep.mubr.f32.mxu0 0.0
      %767 = vmatmul.mubr.f32.gmra.mrb[0].mxu0 %v663
      %v768 = vpop.f32.mrb[0].mxu0
      %v769 = vadd.f32 %v700, %v768
      %v770 = vpop.f32.mrb[0].mxu0
      %v771 = vadd.f32 %v700, %v770
      %772 = vdwg.mxu0
      %v773 = vmax.f32 %v769, 0.0
      %v774 = vmax.f32 %v771, 0.0
      %v777 = vcombine.low %v773, %v774
      %779 = vst [vmem:[%s262] sm:$0xff] %v777
      %s780 = smul.u32 2, %s21
      %p781 = scmp.lt.s32.totalorder %s20, 1
      %s782 = scalar_select %p781, %s20, 1
      %p783 = scmp.lt.s32.totalorder %s780, 1
      %s784 = scalar_select %p783, %s780, 1
      %s785 = smul.addr %s782, 2
      %s786 = sadd.s32 %s784, %s785
      %s787 = smul.addr %s786, 4
      %s788 = scalar_lea.vmem %s5, %s787
      // Predicated region
      $region41: #{simple_block3d_forward.17} parent=39 // pred_check
        %p789 = pneg %p160
      $region42: #{simple_block3d_forward.17} parent=39 // pred_check_branch
        %791 = sbr.rel (%p789) target = $region44
      $region43: #{simple_block3d_forward.17} parent=39 // pred_region
        %s792 = smul.u32 2, %s21
      $region44: #{simple_block3d_forward.17} parent=39 // pred_fallthru
        _
    $region40: #{simple_block3d_forward.17} parent=5 // pred_fallthru
      _
    %p793 = scmp.le.s32.totalorder 2, %s11
    // Predicated region
    $region45: #{simple_block3d_forward.17} parent=5 // pred_check
      %p794 = pneg %p793
    $region46: #{simple_block3d_forward.17} parent=5 // pred_check_branch
      %796 = sbr.rel (%p794) target = $region48
    $region47: #{simple_block3d_forward.17} parent=5 // pred_region
      %s797 = ssub.s32 %s11, 2
      // Predicated region
      $region49: #{simple_block3d_forward.17} parent=47 // pred_check
        %p798 = pneg %p166
      $region50: #{simple_block3d_forward.17} parent=47 // pred_check_branch
        %800 = sbr.rel (%p798) target = $region52
      $region51: #{simple_block3d_forward.17} parent=47 // pred_region
        %s801 = smul.u32 2, %s23
        %p802 = scmp.lt.s32.totalorder %s22, 1
        %s803 = scalar_select %p802, %s22, 1
        %p804 = scmp.lt.s32.totalorder %s801, 1
        %s805 = scalar_select %p804, %s801, 1
        %s806 = smul.addr %s803, 2
        %s807 = sadd.s32 %s805, %s806
        %s808 = smul.addr %s807, 4
        %s809 = scalar_lea.vmem %s5, %s808
      $region52: #{simple_block3d_forward.17} parent=47 // pred_fallthru
        _
    $region48: #{simple_block3d_forward.17} parent=5 // pred_fallthru
      _
  $region6: #{simple_block3d_forward.17} parent=0 // loop_footer
    %s15 = sadd.s32 1, %s11
  $region7: #{simple_block3d_forward.17} parent=0 // loop_footer_branch
    %10 = sbr.rel target = $region3
  $region8: #{simple_block3d_forward.17} parent=0 // loop_exit
    _

</llo_original>
